<compile_context>
chip_gen: v5e
topology: v5e:2x2
jax: 0.10.0
libtpu: 0.0.40
codegen_flags: <defaults>
</compile_context>

<pallas_src>
import numpy as np

import jax
import jax.numpy as jnp
from jax.experimental import pallas as pl
from jax.experimental.pallas import tpu as pltpu

CPAD = 128  # lane-dense padding for the final Q-value output only


# ----------------------------- Pallas kernel --------------------------------

def _fused_dqn_kernel(p1_ref, w1_ref, b1_ref,
                      sel2_ref, w2_ref, b2_ref,
                      sel3_ref, w3_ref, b3_ref,
                      selfc_ref, wfc1_ref, bfc1_ref,
                      wfc2_ref, bfc2_ref,
                      out_ref):
    f32 = jnp.float32
    bf16 = jnp.bfloat16

    # ---- conv1 + ReLU (im2col of the raw input done host-side) ----
    a1 = jnp.dot(p1_ref[...], w1_ref[...], preferred_element_type=f32)
    a1 = jnp.maximum(a1 + b1_ref[...], 0.0).astype(bf16)            # (M1, 32)

    def conv_accum(act, sel_ref, w_ref, b_ref):
        # out = relu( sum_t (S_t @ act) @ W_t + b ), t over kernel positions.
        kk = sel_ref.shape[0]
        m_out = sel_ref.shape[1]
        n_out = w_ref.shape[2]
        acc = jnp.zeros((m_out, n_out), f32)
        for t in range(kk):                      # static unroll (<= 16 iterations)
            g = jnp.dot(sel_ref[t], act, preferred_element_type=f32).astype(bf16)
            acc = acc + jnp.dot(g, w_ref[t], preferred_element_type=f32)
        return jnp.maximum(acc + b_ref[...], 0.0).astype(bf16)

    # ---- conv2 + ReLU, conv3 + ReLU ----
    a2 = conv_accum(a1, sel2_ref, w2_ref, b2_ref)                    # (M2, 64)
    a3 = conv_accum(a2, sel3_ref, w3_ref, b3_ref)                    # (M3, 64)

    # ---- fc1 + ReLU (NCHW flatten folded into per-spatial-position weight slices) ----
    p3 = selfc_ref.shape[0]
    bsz = selfc_ref.shape[1]
    hid = wfc1_ref.shape[2]
    accf = jnp.zeros((bsz, hid), f32)
    for p in range(p3):                          # static unroll over spatial positions
        g = jnp.dot(selfc_ref[p], a3, preferred_element_type=f32).astype(bf16)
        accf = accf + jnp.dot(g, wfc1_ref[p], preferred_element_type=f32)
    h1 = jnp.maximum(accf + bfc1_ref[...], 0.0).astype(bf16)         # (B, 512)

    # ---- fc2 (no activation), output padded to 128 lanes for an unmasked HBM store ----
    q = jnp.dot(h1, wfc2_ref[...], preferred_element_type=f32) + bfc2_ref[...]
    out_ref[...] = q.astype(out_ref.dtype)                           # (B, 128)


def fused_dqn_pallas(patches1, pk):
    bsz = pk["sel_fc"].shape[1]
    n_pad = pk["wfc2"].shape[1]
    args = (patches1, pk["w1"], pk["b1"],
            pk["sel2"], pk["w2"], pk["b2"],
            pk["sel3"], pk["w3"], pk["b3"],
            pk["sel_fc"], pk["wfc1"], pk["bfc1"],
            pk["wfc2"], pk["bfc2"])
    vmem = pl.BlockSpec(memory_space=pltpu.MemorySpace.VMEM)
    return pl.pallas_call(
        _fused_dqn_kernel,
        out_shape=jax.ShapeDtypeStruct((bsz, n_pad), jnp.float32),
        in_specs=[vmem] * len(args),
        out_specs=vmem,
        compiler_params=pltpu.CompilerParams(vmem_limit_bytes=32 * 1024 * 1024),
    )(*args)


# ------------------------------ host-side packing -----------------------------

def conv_out(n, k, s):
    return (n - k) // s + 1


def feature_size(input_shape):
    _, h, w = input_shape
    h1, w1 = conv_out(h, 8, 4), conv_out(w, 8, 4)
    h2, w2 = conv_out(h1, 4, 2), conv_out(w1, 4, 2)
    h3, w3 = conv_out(h2, 3, 1), conv_out(w2, 3, 1)
    return 64 * h3 * w3


def _pad_axis(a, axis, target):
    if a.shape[axis] == target:
        return a
    pads = [(0, 0)] * a.ndim
    pads[axis] = (0, target - a.shape[axis])
    return jnp.pad(a, pads)


def _conv_selection(batch, ih, iw, kh, kw, stride):
    """0/1 matrices S[t, m_out, m_in] gathering input row (b, oy*s+ki, ox*s+kj)."""
    oh, ow = conv_out(ih, kh, stride), conv_out(iw, kw, stride)
    sel = np.zeros((kh * kw, batch * oh * ow, batch * ih * iw), np.float32)
    for b in range(batch):
        for oy in range(oh):
            for ox in range(ow):
                mo = (b * oh + oy) * ow + ox
                for ki in range(kh):
                    for kj in range(kw):
                        mi = (b * ih + oy * stride + ki) * iw + (ox * stride + kj)
                        sel[ki * kw + kj, mo, mi] = 1.0
    return jnp.asarray(sel, jnp.bfloat16)


def pack_params(params, input_shape, batch):
    """One-time conversion of torch-layout params into kernel-ready bf16 tensors."""
    ch, ih, iw = input_shape
    oh1, ow1 = conv_out(ih, 8, 4), conv_out(iw, 8, 4)
    oh2, ow2 = conv_out(oh1, 4, 2), conv_out(ow1, 4, 2)
    oh3, ow3 = conv_out(oh2, 3, 1), conv_out(ow2, 3, 1)
    bf16, f32 = jnp.bfloat16, jnp.float32

    def conv_w_cols(wt):  # (OC, IC, KH, KW) -> (KH*KW, IC, OC) bf16, natural widths
        oc, ic, kh, kw = wt.shape
        return wt.transpose(2, 3, 1, 0).reshape(kh * kw, ic, oc).astype(bf16)

    def bias_row(b):
        return b.reshape(1, -1).astype(f32)

    # conv1 column weight: (IC*KH*KW, 32)
    w1_col = params["conv1_w"].reshape(32, ch * 8 * 8).T.astype(bf16)

    # fc1: torch flatten index = c*(oh3*ow3) + p  ->  per-p slices (P3, 64, 512)
    fw = params["fc1_w"]                                    # (512, 64*oh3*ow3)
    hid = fw.shape[0]
    wfc1 = fw.reshape(hid, 64, oh3 * ow3).transpose(2, 1, 0).astype(bf16)

    # fc2 pre-transposed; only this output is padded to a lane-dense width
    wfc2 = _pad_axis(params["fc2_w"].T, 1, CPAD).astype(bf16)
    bfc2 = _pad_axis(params["fc2_b"].reshape(1, -1), 1, CPAD).astype(f32)

    # selection that picks conv3 row (b*P3 + p) for batch b
    p3 = oh3 * ow3
    selfc = np.zeros((p3, batch, batch * p3), np.float32)
    for p in range(p3):
        for b in range(batch):
            selfc[p, b, b * p3 + p] = 1.0

    return {
        "w1": w1_col, "b1": bias_row(params["conv1_b"]),
        "sel2": _conv_selection(batch, oh1, ow1, 4, 4, 2),
        "w2": conv_w_cols(params["conv2_w"]), "b2": bias_row(params["conv2_b"]),
        "sel3": _conv_selection(batch, oh2, ow2, 3, 3, 1),
        "w3": conv_w_cols(params["conv3_w"]), "b3": bias_row(params["conv3_b"]),
        "sel_fc": jnp.asarray(selfc, jnp.bfloat16),
        "wfc1": wfc1, "bfc1": bias_row(params["fc1_b"]),
        "wfc2": wfc2, "bfc2": bfc2,
    }


# ------------------------------ forward pass ----------------------------------

def im2col(x, kh, kw, stride):
    """(B, C, H, W) -> (B*OH*OW, C*KH*KW), feature order (C, KH, KW) = torch weight order."""
    bsz, ch, ih, iw = x.shape
    oh, ow = conv_out(ih, kh, stride), conv_out(iw, kw, stride)
    cols = []
    for i in range(kh):
        for j in range(kw):
            cols.append(x[:, :, i:i + stride * oh:stride, j:j + stride * ow:stride])
    cols = jnp.stack(cols, 0).reshape(kh, kw, bsz, ch, oh, ow)
    cols = cols.transpose(2, 4, 5, 3, 0, 1)                 # (B, oh, ow, C, kh, kw)
    return cols.reshape(bsz * oh * ow, ch * kh * kw)


def make_forward(packed, num_actions):
    @jax.jit
    def fwd(x):
        patches1 = im2col(x, 8, 8, 4).astype(jnp.bfloat16)
        q = fused_dqn_pallas(patches1, packed)
        return q[:, :num_actions]
    return fwd


# ------------------------------ init + reference -------------------------------

def init_params(key, input_shape, num_actions):
    c = input_shape[0]
    feat = feature_size(input_shape)
    ks = jax.random.split(key, 10)

    def u(k, shape, fan_in):
        bound = 1.0 / jnp.sqrt(fan_in)
        return jax.random.uniform(k, shape, jnp.float32, -bound, bound)

    return {
        "conv1_w": u(ks[0], (32, c, 8, 8), c * 8 * 8),
        "conv1_b": u(ks[1], (32,), c * 8 * 8),
        "conv2_w": u(ks[2], (64, 32, 4, 4), 32 * 4 * 4),
        "conv2_b": u(ks[3], (64,), 32 * 4 * 4),
        "conv3_w": u(ks[4], (64, 64, 3, 3), 64 * 3 * 3),
        "conv3_b": u(ks[5], (64,), 64 * 3 * 3),
        "fc1_w": u(ks[6], (512, feat), feat),   # torch Linear layout (out, in)
        "fc1_b": u(ks[7], (512,), feat),
        "fc2_w": u(ks[8], (num_actions, 512), 512),
        "fc2_b": u(ks[9], (num_actions,), 512),
    }


def cnn_dqn_reference(x, params):
    """Pure-JAX (f32) reference mirroring the torch module."""
    def conv(z, wt, b, s):
        y = jax.lax.conv_general_dilated(z, wt, (s, s), "VALID",
                                         dimension_numbers=("NCHW", "OIHW", "NCHW"))
        return jax.nn.relu(y + b[None, :, None, None])
    z = conv(x, params["conv1_w"], params["conv1_b"], 4)
    z = conv(z, params["conv2_w"], params["conv2_b"], 2)
    z = conv(z, params["conv3_w"], params["conv3_b"], 1)
    z = z.reshape(z.shape[0], -1)
    z = jax.nn.relu(z @ params["fc1_w"].T + params["fc1_b"])
    return z @ params["fc2_w"].T + params["fc2_b"]


# -------------------------------- main ---------------------------------------

if __name__ == "__main__":
    input_shape = (4, 44, 44)   # (C, H, W); smallest tidy size valid for the conv stack
    num_actions = 6
    batch = 2

    key = jax.random.PRNGKey(0)
    k_params, k_x = jax.random.split(key)
    params = init_params(k_params, input_shape, num_actions)
    x = jax.random.normal(k_x, (batch,) + input_shape, dtype=jnp.float32)

    packed = pack_params(params, input_shape, batch)
    forward = make_forward(packed, num_actions)

    q_values = jax.block_until_ready(forward(x))
    assert q_values.shape == (batch, num_actions)
    assert q_values.dtype == jnp.float32
    assert bool(jnp.all(jnp.isfinite(q_values)))

    # loose check vs f32 reference (kernel runs the MXU in bf16 with f32 accumulation)
    q_ref = jax.block_until_ready(cnn_dqn_reference(x, params))
    err = float(jnp.max(jnp.abs(q_values - q_ref)))
    scale = max(float(jnp.max(jnp.abs(q_ref))), 1.0)
    assert err / scale < 0.1, f"mismatch vs reference: max abs err {err}"

    print("KERNEL_OK")
</pallas_src>

<mosaic_0001>
module attributes {stable_mosaic.version = 11 : i64} {
  func.func @_fused_dqn_kernel(%arg0: memref<200x256xbf16, #tpu.memory_space<vmem>>, %arg1: memref<256x32xbf16, #tpu.memory_space<vmem>>, %arg2: memref<1x32xf32, #tpu.memory_space<vmem>>, %arg3: memref<16x32x200xbf16, #tpu.memory_space<vmem>>, %arg4: memref<16x32x64xbf16, #tpu.memory_space<vmem>>, %arg5: memref<1x64xf32, #tpu.memory_space<vmem>>, %arg6: memref<9x8x32xbf16, #tpu.memory_space<vmem>>, %arg7: memref<9x64x64xbf16, #tpu.memory_space<vmem>>, %arg8: memref<1x64xf32, #tpu.memory_space<vmem>>, %arg9: memref<4x2x8xbf16, #tpu.memory_space<vmem>>, %arg10: memref<4x64x512xbf16, #tpu.memory_space<vmem>>, %arg11: memref<1x512xf32, #tpu.memory_space<vmem>>, %arg12: memref<512x128xbf16, #tpu.memory_space<vmem>>, %arg13: memref<1x128xf32, #tpu.memory_space<vmem>>, %arg14: memref<2x128xf32, #tpu.memory_space<vmem>>) attributes {dimension_semantics = [], scalar_prefetch = 0 : i64, scratch_operands = 0 : i64, tpu.core_type = #tpu.core_type<tc>} {
    %c0 = arith.constant 0 : index
    %c0_0 = arith.constant 0 : index
    %0 = vector.load %arg0[%c0, %c0_0] : memref<200x256xbf16, #tpu.memory_space<vmem>>, vector<200x256xbf16>
    %c0_1 = arith.constant 0 : index
    %c0_2 = arith.constant 0 : index
    %1 = vector.load %arg1[%c0_1, %c0_2] : memref<256x32xbf16, #tpu.memory_space<vmem>>, vector<256x32xbf16>
    %cst = arith.constant dense<0.000000e+00> : vector<200x32xf32>
    %2 = tpu.matmul %0, %1, %cst {dimension_numbers = #tpu.dot_dimension_numbers<[1], [0], [0], [1], [0, 0, 1, 1], [], []>} : vector<200x256xbf16>, vector<256x32xbf16>, vector<200x32xf32> -> vector<200x32xf32>
    %c0_3 = arith.constant 0 : index
    %c0_4 = arith.constant 0 : index
    %3 = vector.load %arg2[%c0_3, %c0_4] : memref<1x32xf32, #tpu.memory_space<vmem>>, vector<1x32xf32>
    %4 = vector.broadcast %3 : vector<1x32xf32> to vector<200x32xf32>
    %5 = arith.addf %2, %4 : vector<200x32xf32>
    %cst_5 = arith.constant 0.000000e+00 : f32
    %6 = vector.broadcast %cst_5 : f32 to vector<200x32xf32>
    %7 = arith.maximumf %5, %6 : vector<200x32xf32>
    %8 = arith.truncf %7 : vector<200x32xf32> to vector<200x32xbf16>
    %cst_6 = arith.constant 0.000000e+00 : f32
    %9 = vector.broadcast %cst_6 : f32 to vector<32x64xf32>
    %c0_7 = arith.constant 0 : index
    %c0_8 = arith.constant 0 : index
    %c0_9 = arith.constant 0 : index
    %10 = vector.load %arg3[%c0_7, %c0_8, %c0_9] : memref<16x32x200xbf16, #tpu.memory_space<vmem>>, vector<1x32x200xbf16>
    %11 = vector.shape_cast %10 : vector<1x32x200xbf16> to vector<32x200xbf16>
    %cst_10 = arith.constant dense<0.000000e+00> : vector<32x32xf32>
    %12 = tpu.matmul %11, %8, %cst_10 {dimension_numbers = #tpu.dot_dimension_numbers<[1], [0], [0], [1], [0, 0, 1, 1], [], []>} : vector<32x200xbf16>, vector<200x32xbf16>, vector<32x32xf32> -> vector<32x32xf32>
    %13 = arith.truncf %12 : vector<32x32xf32> to vector<32x32xbf16>
    %c0_11 = arith.constant 0 : index
    %c0_12 = arith.constant 0 : index
    %c0_13 = arith.constant 0 : index
    %14 = vector.load %arg4[%c0_11, %c0_12, %c0_13] : memref<16x32x64xbf16, #tpu.memory_space<vmem>>, vector<1x32x64xbf16>
    %15 = vector.shape_cast %14 : vector<1x32x64xbf16> to vector<32x64xbf16>
    %cst_14 = arith.constant dense<0.000000e+00> : vector<32x64xf32>
    %16 = tpu.matmul %13, %15, %cst_14 {dimension_numbers = #tpu.dot_dimension_numbers<[1], [0], [0], [1], [0, 0, 1, 1], [], []>} : vector<32x32xbf16>, vector<32x64xbf16>, vector<32x64xf32> -> vector<32x64xf32>
    %17 = arith.addf %9, %16 : vector<32x64xf32>
    %c1 = arith.constant 1 : index
    %c0_15 = arith.constant 0 : index
    %c0_16 = arith.constant 0 : index
    %18 = vector.load %arg3[%c1, %c0_15, %c0_16] : memref<16x32x200xbf16, #tpu.memory_space<vmem>>, vector<1x32x200xbf16>
    %19 = vector.shape_cast %18 : vector<1x32x200xbf16> to vector<32x200xbf16>
    %cst_17 = arith.constant dense<0.000000e+00> : vector<32x32xf32>
    %20 = tpu.matmul %19, %8, %cst_17 {dimension_numbers = #tpu.dot_dimension_numbers<[1], [0], [0], [1], [0, 0, 1, 1], [], []>} : vector<32x200xbf16>, vector<200x32xbf16>, vector<32x32xf32> -> vector<32x32xf32>
    %21 = arith.truncf %20 : vector<32x32xf32> to vector<32x32xbf16>
    %c1_18 = arith.constant 1 : index
    %c0_19 = arith.constant 0 : index
    %c0_20 = arith.constant 0 : index
    %22 = vector.load %arg4[%c1_18, %c0_19, %c0_20] : memref<16x32x64xbf16, #tpu.memory_space<vmem>>, vector<1x32x64xbf16>
    %23 = vector.shape_cast %22 : vector<1x32x64xbf16> to vector<32x64xbf16>
    %cst_21 = arith.constant dense<0.000000e+00> : vector<32x64xf32>
    %24 = tpu.matmul %21, %23, %cst_21 {dimension_numbers = #tpu.dot_dimension_numbers<[1], [0], [0], [1], [0, 0, 1, 1], [], []>} : vector<32x32xbf16>, vector<32x64xbf16>, vector<32x64xf32> -> vector<32x64xf32>
    %25 = arith.addf %17, %24 : vector<32x64xf32>
    %c2 = arith.constant 2 : index
    %c0_22 = arith.constant 0 : index
    %c0_23 = arith.constant 0 : index
    %26 = vector.load %arg3[%c2, %c0_22, %c0_23] : memref<16x32x200xbf16, #tpu.memory_space<vmem>>, vector<1x32x200xbf16>
    %27 = vector.shape_cast %26 : vector<1x32x200xbf16> to vector<32x200xbf16>
    %cst_24 = arith.constant dense<0.000000e+00> : vector<32x32xf32>
    %28 = tpu.matmul %27, %8, %cst_24 {dimension_numbers = #tpu.dot_dimension_numbers<[1], [0], [0], [1], [0, 0, 1, 1], [], []>} : vector<32x200xbf16>, vector<200x32xbf16>, vector<32x32xf32> -> vector<32x32xf32>
    %29 = arith.truncf %28 : vector<32x32xf32> to vector<32x32xbf16>
    %c2_25 = arith.constant 2 : index
    %c0_26 = arith.constant 0 : index
    %c0_27 = arith.constant 0 : index
    %30 = vector.load %arg4[%c2_25, %c0_26, %c0_27] : memref<16x32x64xbf16, #tpu.memory_space<vmem>>, vector<1x32x64xbf16>
    %31 = vector.shape_cast %30 : vector<1x32x64xbf16> to vector<32x64xbf16>
    %cst_28 = arith.constant dense<0.000000e+00> : vector<32x64xf32>
    %32 = tpu.matmul %29, %31, %cst_28 {dimension_numbers = #tpu.dot_dimension_numbers<[1], [0], [0], [1], [0, 0, 1, 1], [], []>} : vector<32x32xbf16>, vector<32x64xbf16>, vector<32x64xf32> -> vector<32x64xf32>
    %33 = arith.addf %25, %32 : vector<32x64xf32>
    %c3 = arith.constant 3 : index
    %c0_29 = arith.constant 0 : index
    %c0_30 = arith.constant 0 : index
    %34 = vector.load %arg3[%c3, %c0_29, %c0_30] : memref<16x32x200xbf16, #tpu.memory_space<vmem>>, vector<1x32x200xbf16>
    %35 = vector.shape_cast %34 : vector<1x32x200xbf16> to vector<32x200xbf16>
    %cst_31 = arith.constant dense<0.000000e+00> : vector<32x32xf32>
    %36 = tpu.matmul %35, %8, %cst_31 {dimension_numbers = #tpu.dot_dimension_numbers<[1], [0], [0], [1], [0, 0, 1, 1], [], []>} : vector<32x200xbf16>, vector<200x32xbf16>, vector<32x32xf32> -> vector<32x32xf32>
    %37 = arith.truncf %36 : vector<32x32xf32> to vector<32x32xbf16>
    %c3_32 = arith.constant 3 : index
    %c0_33 = arith.constant 0 : index
    %c0_34 = arith.constant 0 : index
    %38 = vector.load %arg4[%c3_32, %c0_33, %c0_34] : memref<16x32x64xbf16, #tpu.memory_space<vmem>>, vector<1x32x64xbf16>
    %39 = vector.shape_cast %38 : vector<1x32x64xbf16> to vector<32x64xbf16>
    %cst_35 = arith.constant dense<0.000000e+00> : vector<32x64xf32>
    %40 = tpu.matmul %37, %39, %cst_35 {dimension_numbers = #tpu.dot_dimension_numbers<[1], [0], [0], [1], [0, 0, 1, 1], [], []>} : vector<32x32xbf16>, vector<32x64xbf16>, vector<32x64xf32> -> vector<32x64xf32>
    %41 = arith.addf %33, %40 : vector<32x64xf32>
    %c4 = arith.constant 4 : index
    %c0_36 = arith.constant 0 : index
    %c0_37 = arith.constant 0 : index
    %42 = vector.load %arg3[%c4, %c0_36, %c0_37] : memref<16x32x200xbf16, #tpu.memory_space<vmem>>, vector<1x32x200xbf16>
    %43 = vector.shape_cast %42 : vector<1x32x200xbf16> to vector<32x200xbf16>
    %cst_38 = arith.constant dense<0.000000e+00> : vector<32x32xf32>
    %44 = tpu.matmul %43, %8, %cst_38 {dimension_numbers = #tpu.dot_dimension_numbers<[1], [0], [0], [1], [0, 0, 1, 1], [], []>} : vector<32x200xbf16>, vector<200x32xbf16>, vector<32x32xf32> -> vector<32x32xf32>
    %45 = arith.truncf %44 : vector<32x32xf32> to vector<32x32xbf16>
    %c4_39 = arith.constant 4 : index
    %c0_40 = arith.constant 0 : index
    %c0_41 = arith.constant 0 : index
    %46 = vector.load %arg4[%c4_39, %c0_40, %c0_41] : memref<16x32x64xbf16, #tpu.memory_space<vmem>>, vector<1x32x64xbf16>
    %47 = vector.shape_cast %46 : vector<1x32x64xbf16> to vector<32x64xbf16>
    %cst_42 = arith.constant dense<0.000000e+00> : vector<32x64xf32>
    %48 = tpu.matmul %45, %47, %cst_42 {dimension_numbers = #tpu.dot_dimension_numbers<[1], [0], [0], [1], [0, 0, 1, 1], [], []>} : vector<32x32xbf16>, vector<32x64xbf16>, vector<32x64xf32> -> vector<32x64xf32>
    %49 = arith.addf %41, %48 : vector<32x64xf32>
    %c5 = arith.constant 5 : index
    %c0_43 = arith.constant 0 : index
    %c0_44 = arith.constant 0 : index
    %50 = vector.load %arg3[%c5, %c0_43, %c0_44] : memref<16x32x200xbf16, #tpu.memory_space<vmem>>, vector<1x32x200xbf16>
    %51 = vector.shape_cast %50 : vector<1x32x200xbf16> to vector<32x200xbf16>
    %cst_45 = arith.constant dense<0.000000e+00> : vector<32x32xf32>
    %52 = tpu.matmul %51, %8, %cst_45 {dimension_numbers = #tpu.dot_dimension_numbers<[1], [0], [0], [1], [0, 0, 1, 1], [], []>} : vector<32x200xbf16>, vector<200x32xbf16>, vector<32x32xf32> -> vector<32x32xf32>
    %53 = arith.truncf %52 : vector<32x32xf32> to vector<32x32xbf16>
    %c5_46 = arith.constant 5 : index
    %c0_47 = arith.constant 0 : index
    %c0_48 = arith.constant 0 : index
    %54 = vector.load %arg4[%c5_46, %c0_47, %c0_48] : memref<16x32x64xbf16, #tpu.memory_space<vmem>>, vector<1x32x64xbf16>
    %55 = vector.shape_cast %54 : vector<1x32x64xbf16> to vector<32x64xbf16>
    %cst_49 = arith.constant dense<0.000000e+00> : vector<32x64xf32>
    %56 = tpu.matmul %53, %55, %cst_49 {dimension_numbers = #tpu.dot_dimension_numbers<[1], [0], [0], [1], [0, 0, 1, 1], [], []>} : vector<32x32xbf16>, vector<32x64xbf16>, vector<32x64xf32> -> vector<32x64xf32>
    %57 = arith.addf %49, %56 : vector<32x64xf32>
    %c6 = arith.constant 6 : index
    %c0_50 = arith.constant 0 : index
    %c0_51 = arith.constant 0 : index
    %58 = vector.load %arg3[%c6, %c0_50, %c0_51] : memref<16x32x200xbf16, #tpu.memory_space<vmem>>, vector<1x32x200xbf16>
    %59 = vector.shape_cast %58 : vector<1x32x200xbf16> to vector<32x200xbf16>
    %cst_52 = arith.constant dense<0.000000e+00> : vector<32x32xf32>
    %60 = tpu.matmul %59, %8, %cst_52 {dimension_numbers = #tpu.dot_dimension_numbers<[1], [0], [0], [1], [0, 0, 1, 1], [], []>} : vector<32x200xbf16>, vector<200x32xbf16>, vector<32x32xf32> -> vector<32x32xf32>
    %61 = arith.truncf %60 : vector<32x32xf32> to vector<32x32xbf16>
    %c6_53 = arith.constant 6 : index
    %c0_54 = arith.constant 0 : index
    %c0_55 = arith.constant 0 : index
    %62 = vector.load %arg4[%c6_53, %c0_54, %c0_55] : memref<16x32x64xbf16, #tpu.memory_space<vmem>>, vector<1x32x64xbf16>
    %63 = vector.shape_cast %62 : vector<1x32x64xbf16> to vector<32x64xbf16>
    %cst_56 = arith.constant dense<0.000000e+00> : vector<32x64xf32>
    %64 = tpu.matmul %61, %63, %cst_56 {dimension_numbers = #tpu.dot_dimension_numbers<[1], [0], [0], [1], [0, 0, 1, 1], [], []>} : vector<32x32xbf16>, vector<32x64xbf16>, vector<32x64xf32> -> vector<32x64xf32>
    %65 = arith.addf %57, %64 : vector<32x64xf32>
    %c7 = arith.constant 7 : index
    %c0_57 = arith.constant 0 : index
    %c0_58 = arith.constant 0 : index
    %66 = vector.load %arg3[%c7, %c0_57, %c0_58] : memref<16x32x200xbf16, #tpu.memory_space<vmem>>, vector<1x32x200xbf16>
    %67 = vector.shape_cast %66 : vector<1x32x200xbf16> to vector<32x200xbf16>
    %cst_59 = arith.constant dense<0.000000e+00> : vector<32x32xf32>
    %68 = tpu.matmul %67, %8, %cst_59 {dimension_numbers = #tpu.dot_dimension_numbers<[1], [0], [0], [1], [0, 0, 1, 1], [], []>} : vector<32x200xbf16>, vector<200x32xbf16>, vector<32x32xf32> -> vector<32x32xf32>
    %69 = arith.truncf %68 : vector<32x32xf32> to vector<32x32xbf16>
    %c7_60 = arith.constant 7 : index
    %c0_61 = arith.constant 0 : index
    %c0_62 = arith.constant 0 : index
    %70 = vector.load %arg4[%c7_60, %c0_61, %c0_62] : memref<16x32x64xbf16, #tpu.memory_space<vmem>>, vector<1x32x64xbf16>
    %71 = vector.shape_cast %70 : vector<1x32x64xbf16> to vector<32x64xbf16>
    %cst_63 = arith.constant dense<0.000000e+00> : vector<32x64xf32>
    %72 = tpu.matmul %69, %71, %cst_63 {dimension_numbers = #tpu.dot_dimension_numbers<[1], [0], [0], [1], [0, 0, 1, 1], [], []>} : vector<32x32xbf16>, vector<32x64xbf16>, vector<32x64xf32> -> vector<32x64xf32>
    %73 = arith.addf %65, %72 : vector<32x64xf32>
    %c8 = arith.constant 8 : index
    %c0_64 = arith.constant 0 : index
    %c0_65 = arith.constant 0 : index
    %74 = vector.load %arg3[%c8, %c0_64, %c0_65] : memref<16x32x200xbf16, #tpu.memory_space<vmem>>, vector<1x32x200xbf16>
    %75 = vector.shape_cast %74 : vector<1x32x200xbf16> to vector<32x200xbf16>
    %cst_66 = arith.constant dense<0.000000e+00> : vector<32x32xf32>
    %76 = tpu.matmul %75, %8, %cst_66 {dimension_numbers = #tpu.dot_dimension_numbers<[1], [0], [0], [1], [0, 0, 1, 1], [], []>} : vector<32x200xbf16>, vector<200x32xbf16>, vector<32x32xf32> -> vector<32x32xf32>
    %77 = arith.truncf %76 : vector<32x32xf32> to vector<32x32xbf16>
    %c8_67 = arith.constant 8 : index
    %c0_68 = arith.constant 0 : index
    %c0_69 = arith.constant 0 : index
    %78 = vector.load %arg4[%c8_67, %c0_68, %c0_69] : memref<16x32x64xbf16, #tpu.memory_space<vmem>>, vector<1x32x64xbf16>
    %79 = vector.shape_cast %78 : vector<1x32x64xbf16> to vector<32x64xbf16>
    %cst_70 = arith.constant dense<0.000000e+00> : vector<32x64xf32>
    %80 = tpu.matmul %77, %79, %cst_70 {dimension_numbers = #tpu.dot_dimension_numbers<[1], [0], [0], [1], [0, 0, 1, 1], [], []>} : vector<32x32xbf16>, vector<32x64xbf16>, vector<32x64xf32> -> vector<32x64xf32>
    %81 = arith.addf %73, %80 : vector<32x64xf32>
    %c9 = arith.constant 9 : index
    %c0_71 = arith.constant 0 : index
    %c0_72 = arith.constant 0 : index
    %82 = vector.load %arg3[%c9, %c0_71, %c0_72] : memref<16x32x200xbf16, #tpu.memory_space<vmem>>, vector<1x32x200xbf16>
    %83 = vector.shape_cast %82 : vector<1x32x200xbf16> to vector<32x200xbf16>
    %cst_73 = arith.constant dense<0.000000e+00> : vector<32x32xf32>
    %84 = tpu.matmul %83, %8, %cst_73 {dimension_numbers = #tpu.dot_dimension_numbers<[1], [0], [0], [1], [0, 0, 1, 1], [], []>} : vector<32x200xbf16>, vector<200x32xbf16>, vector<32x32xf32> -> vector<32x32xf32>
    %85 = arith.truncf %84 : vector<32x32xf32> to vector<32x32xbf16>
    %c9_74 = arith.constant 9 : index
    %c0_75 = arith.constant 0 : index
    %c0_76 = arith.constant 0 : index
    %86 = vector.load %arg4[%c9_74, %c0_75, %c0_76] : memref<16x32x64xbf16, #tpu.memory_space<vmem>>, vector<1x32x64xbf16>
    %87 = vector.shape_cast %86 : vector<1x32x64xbf16> to vector<32x64xbf16>
    %cst_77 = arith.constant dense<0.000000e+00> : vector<32x64xf32>
    %88 = tpu.matmul %85, %87, %cst_77 {dimension_numbers = #tpu.dot_dimension_numbers<[1], [0], [0], [1], [0, 0, 1, 1], [], []>} : vector<32x32xbf16>, vector<32x64xbf16>, vector<32x64xf32> -> vector<32x64xf32>
    %89 = arith.addf %81, %88 : vector<32x64xf32>
    %c10 = arith.constant 10 : index
    %c0_78 = arith.constant 0 : index
    %c0_79 = arith.constant 0 : index
    %90 = vector.load %arg3[%c10, %c0_78, %c0_79] : memref<16x32x200xbf16, #tpu.memory_space<vmem>>, vector<1x32x200xbf16>
    %91 = vector.shape_cast %90 : vector<1x32x200xbf16> to vector<32x200xbf16>
    %cst_80 = arith.constant dense<0.000000e+00> : vector<32x32xf32>
    %92 = tpu.matmul %91, %8, %cst_80 {dimension_numbers = #tpu.dot_dimension_numbers<[1], [0], [0], [1], [0, 0, 1, 1], [], []>} : vector<32x200xbf16>, vector<200x32xbf16>, vector<32x32xf32> -> vector<32x32xf32>
    %93 = arith.truncf %92 : vector<32x32xf32> to vector<32x32xbf16>
    %c10_81 = arith.constant 10 : index
    %c0_82 = arith.constant 0 : index
    %c0_83 = arith.constant 0 : index
    %94 = vector.load %arg4[%c10_81, %c0_82, %c0_83] : memref<16x32x64xbf16, #tpu.memory_space<vmem>>, vector<1x32x64xbf16>
    %95 = vector.shape_cast %94 : vector<1x32x64xbf16> to vector<32x64xbf16>
    %cst_84 = arith.constant dense<0.000000e+00> : vector<32x64xf32>
    %96 = tpu.matmul %93, %95, %cst_84 {dimension_numbers = #tpu.dot_dimension_numbers<[1], [0], [0], [1], [0, 0, 1, 1], [], []>} : vector<32x32xbf16>, vector<32x64xbf16>, vector<32x64xf32> -> vector<32x64xf32>
    %97 = arith.addf %89, %96 : vector<32x64xf32>
    %c11 = arith.constant 11 : index
    %c0_85 = arith.constant 0 : index
    %c0_86 = arith.constant 0 : index
    %98 = vector.load %arg3[%c11, %c0_85, %c0_86] : memref<16x32x200xbf16, #tpu.memory_space<vmem>>, vector<1x32x200xbf16>
    %99 = vector.shape_cast %98 : vector<1x32x200xbf16> to vector<32x200xbf16>
    %cst_87 = arith.constant dense<0.000000e+00> : vector<32x32xf32>
    %100 = tpu.matmul %99, %8, %cst_87 {dimension_numbers = #tpu.dot_dimension_numbers<[1], [0], [0], [1], [0, 0, 1, 1], [], []>} : vector<32x200xbf16>, vector<200x32xbf16>, vector<32x32xf32> -> vector<32x32xf32>
    %101 = arith.truncf %100 : vector<32x32xf32> to vector<32x32xbf16>
    %c11_88 = arith.constant 11 : index
    %c0_89 = arith.constant 0 : index
    %c0_90 = arith.constant 0 : index
    %102 = vector.load %arg4[%c11_88, %c0_89, %c0_90] : memref<16x32x64xbf16, #tpu.memory_space<vmem>>, vector<1x32x64xbf16>
    %103 = vector.shape_cast %102 : vector<1x32x64xbf16> to vector<32x64xbf16>
    %cst_91 = arith.constant dense<0.000000e+00> : vector<32x64xf32>
    %104 = tpu.matmul %101, %103, %cst_91 {dimension_numbers = #tpu.dot_dimension_numbers<[1], [0], [0], [1], [0, 0, 1, 1], [], []>} : vector<32x32xbf16>, vector<32x64xbf16>, vector<32x64xf32> -> vector<32x64xf32>
    %105 = arith.addf %97, %104 : vector<32x64xf32>
    %c12 = arith.constant 12 : index
    %c0_92 = arith.constant 0 : index
    %c0_93 = arith.constant 0 : index
    %106 = vector.load %arg3[%c12, %c0_92, %c0_93] : memref<16x32x200xbf16, #tpu.memory_space<vmem>>, vector<1x32x200xbf16>
    %107 = vector.shape_cast %106 : vector<1x32x200xbf16> to vector<32x200xbf16>
    %cst_94 = arith.constant dense<0.000000e+00> : vector<32x32xf32>
    %108 = tpu.matmul %107, %8, %cst_94 {dimension_numbers = #tpu.dot_dimension_numbers<[1], [0], [0], [1], [0, 0, 1, 1], [], []>} : vector<32x200xbf16>, vector<200x32xbf16>, vector<32x32xf32> -> vector<32x32xf32>
    %109 = arith.truncf %108 : vector<32x32xf32> to vector<32x32xbf16>
    %c12_95 = arith.constant 12 : index
    %c0_96 = arith.constant 0 : index
    %c0_97 = arith.constant 0 : index
    %110 = vector.load %arg4[%c12_95, %c0_96, %c0_97] : memref<16x32x64xbf16, #tpu.memory_space<vmem>>, vector<1x32x64xbf16>
    %111 = vector.shape_cast %110 : vector<1x32x64xbf16> to vector<32x64xbf16>
    %cst_98 = arith.constant dense<0.000000e+00> : vector<32x64xf32>
    %112 = tpu.matmul %109, %111, %cst_98 {dimension_numbers = #tpu.dot_dimension_numbers<[1], [0], [0], [1], [0, 0, 1, 1], [], []>} : vector<32x32xbf16>, vector<32x64xbf16>, vector<32x64xf32> -> vector<32x64xf32>
    %113 = arith.addf %105, %112 : vector<32x64xf32>
    %c13 = arith.constant 13 : index
    %c0_99 = arith.constant 0 : index
    %c0_100 = arith.constant 0 : index
    %114 = vector.load %arg3[%c13, %c0_99, %c0_100] : memref<16x32x200xbf16, #tpu.memory_space<vmem>>, vector<1x32x200xbf16>
    %115 = vector.shape_cast %114 : vector<1x32x200xbf16> to vector<32x200xbf16>
    %cst_101 = arith.constant dense<0.000000e+00> : vector<32x32xf32>
    %116 = tpu.matmul %115, %8, %cst_101 {dimension_numbers = #tpu.dot_dimension_numbers<[1], [0], [0], [1], [0, 0, 1, 1], [], []>} : vector<32x200xbf16>, vector<200x32xbf16>, vector<32x32xf32> -> vector<32x32xf32>
    %117 = arith.truncf %116 : vector<32x32xf32> to vector<32x32xbf16>
    %c13_102 = arith.constant 13 : index
    %c0_103 = arith.constant 0 : index
    %c0_104 = arith.constant 0 : index
    %118 = vector.load %arg4[%c13_102, %c0_103, %c0_104] : memref<16x32x64xbf16, #tpu.memory_space<vmem>>, vector<1x32x64xbf16>
    %119 = vector.shape_cast %118 : vector<1x32x64xbf16> to vector<32x64xbf16>
    %cst_105 = arith.constant dense<0.000000e+00> : vector<32x64xf32>
    %120 = tpu.matmul %117, %119, %cst_105 {dimension_numbers = #tpu.dot_dimension_numbers<[1], [0], [0], [1], [0, 0, 1, 1], [], []>} : vector<32x32xbf16>, vector<32x64xbf16>, vector<32x64xf32> -> vector<32x64xf32>
    %121 = arith.addf %113, %120 : vector<32x64xf32>
    %c14 = arith.constant 14 : index
    %c0_106 = arith.constant 0 : index
    %c0_107 = arith.constant 0 : index
    %122 = vector.load %arg3[%c14, %c0_106, %c0_107] : memref<16x32x200xbf16, #tpu.memory_space<vmem>>, vector<1x32x200xbf16>
    %123 = vector.shape_cast %122 : vector<1x32x200xbf16> to vector<32x200xbf16>
    %cst_108 = arith.constant dense<0.000000e+00> : vector<32x32xf32>
    %124 = tpu.matmul %123, %8, %cst_108 {dimension_numbers = #tpu.dot_dimension_numbers<[1], [0], [0], [1], [0, 0, 1, 1], [], []>} : vector<32x200xbf16>, vector<200x32xbf16>, vector<32x32xf32> -> vector<32x32xf32>
    %125 = arith.truncf %124 : vector<32x32xf32> to vector<32x32xbf16>
    %c14_109 = arith.constant 14 : index
    %c0_110 = arith.constant 0 : index
    %c0_111 = arith.constant 0 : index
    %126 = vector.load %arg4[%c14_109, %c0_110, %c0_111] : memref<16x32x64xbf16, #tpu.memory_space<vmem>>, vector<1x32x64xbf16>
    %127 = vector.shape_cast %126 : vector<1x32x64xbf16> to vector<32x64xbf16>
    %cst_112 = arith.constant dense<0.000000e+00> : vector<32x64xf32>
    %128 = tpu.matmul %125, %127, %cst_112 {dimension_numbers = #tpu.dot_dimension_numbers<[1], [0], [0], [1], [0, 0, 1, 1], [], []>} : vector<32x32xbf16>, vector<32x64xbf16>, vector<32x64xf32> -> vector<32x64xf32>
    %129 = arith.addf %121, %128 : vector<32x64xf32>
    %c15 = arith.constant 15 : index
    %c0_113 = arith.constant 0 : index
    %c0_114 = arith.constant 0 : index
    %130 = vector.load %arg3[%c15, %c0_113, %c0_114] : memref<16x32x200xbf16, #tpu.memory_space<vmem>>, vector<1x32x200xbf16>
    %131 = vector.shape_cast %130 : vector<1x32x200xbf16> to vector<32x200xbf16>
    %cst_115 = arith.constant dense<0.000000e+00> : vector<32x32xf32>
    %132 = tpu.matmul %131, %8, %cst_115 {dimension_numbers = #tpu.dot_dimension_numbers<[1], [0], [0], [1], [0, 0, 1, 1], [], []>} : vector<32x200xbf16>, vector<200x32xbf16>, vector<32x32xf32> -> vector<32x32xf32>
    %133 = arith.truncf %132 : vector<32x32xf32> to vector<32x32xbf16>
    %c15_116 = arith.constant 15 : index
    %c0_117 = arith.constant 0 : index
    %c0_118 = arith.constant 0 : index
    %134 = vector.load %arg4[%c15_116, %c0_117, %c0_118] : memref<16x32x64xbf16, #tpu.memory_space<vmem>>, vector<1x32x64xbf16>
    %135 = vector.shape_cast %134 : vector<1x32x64xbf16> to vector<32x64xbf16>
    %cst_119 = arith.constant dense<0.000000e+00> : vector<32x64xf32>
    %136 = tpu.matmul %133, %135, %cst_119 {dimension_numbers = #tpu.dot_dimension_numbers<[1], [0], [0], [1], [0, 0, 1, 1], [], []>} : vector<32x32xbf16>, vector<32x64xbf16>, vector<32x64xf32> -> vector<32x64xf32>
    %137 = arith.addf %129, %136 : vector<32x64xf32>
    %c0_120 = arith.constant 0 : index
    %c0_121 = arith.constant 0 : index
    %138 = vector.load %arg5[%c0_120, %c0_121] : memref<1x64xf32, #tpu.memory_space<vmem>>, vector<1x64xf32>
    %139 = vector.broadcast %138 : vector<1x64xf32> to vector<32x64xf32>
    %140 = arith.addf %137, %139 : vector<32x64xf32>
    %cst_122 = arith.constant 0.000000e+00 : f32
    %141 = vector.broadcast %cst_122 : f32 to vector<32x64xf32>
    %142 = arith.maximumf %140, %141 : vector<32x64xf32>
    %143 = arith.truncf %142 : vector<32x64xf32> to vector<32x64xbf16>
    %cst_123 = arith.constant 0.000000e+00 : f32
    %144 = vector.broadcast %cst_123 : f32 to vector<8x64xf32>
    %c0_124 = arith.constant 0 : index
    %c0_125 = arith.constant 0 : index
    %c0_126 = arith.constant 0 : index
    %145 = vector.load %arg6[%c0_124, %c0_125, %c0_126] : memref<9x8x32xbf16, #tpu.memory_space<vmem>>, vector<1x8x32xbf16>
    %146 = vector.shape_cast %145 : vector<1x8x32xbf16> to vector<8x32xbf16>
    %cst_127 = arith.constant dense<0.000000e+00> : vector<8x64xf32>
    %147 = tpu.matmul %146, %143, %cst_127 {dimension_numbers = #tpu.dot_dimension_numbers<[1], [0], [0], [1], [0, 0, 1, 1], [], []>} : vector<8x32xbf16>, vector<32x64xbf16>, vector<8x64xf32> -> vector<8x64xf32>
    %148 = arith.truncf %147 : vector<8x64xf32> to vector<8x64xbf16>
    %c0_128 = arith.constant 0 : index
    %c0_129 = arith.constant 0 : index
    %c0_130 = arith.constant 0 : index
    %149 = vector.load %arg7[%c0_128, %c0_129, %c0_130] : memref<9x64x64xbf16, #tpu.memory_space<vmem>>, vector<1x64x64xbf16>
    %150 = vector.shape_cast %149 : vector<1x64x64xbf16> to vector<64x64xbf16>
    %cst_131 = arith.constant dense<0.000000e+00> : vector<8x64xf32>
    %151 = tpu.matmul %148, %150, %cst_131 {dimension_numbers = #tpu.dot_dimension_numbers<[1], [0], [0], [1], [0, 0, 1, 1], [], []>} : vector<8x64xbf16>, vector<64x64xbf16>, vector<8x64xf32> -> vector<8x64xf32>
    %152 = arith.addf %144, %151 : vector<8x64xf32>
    %c1_132 = arith.constant 1 : index
    %c0_133 = arith.constant 0 : index
    %c0_134 = arith.constant 0 : index
    %153 = vector.load %arg6[%c1_132, %c0_133, %c0_134] : memref<9x8x32xbf16, #tpu.memory_space<vmem>>, vector<1x8x32xbf16>
    %154 = vector.shape_cast %153 : vector<1x8x32xbf16> to vector<8x32xbf16>
    %cst_135 = arith.constant dense<0.000000e+00> : vector<8x64xf32>
    %155 = tpu.matmul %154, %143, %cst_135 {dimension_numbers = #tpu.dot_dimension_numbers<[1], [0], [0], [1], [0, 0, 1, 1], [], []>} : vector<8x32xbf16>, vector<32x64xbf16>, vector<8x64xf32> -> vector<8x64xf32>
    %156 = arith.truncf %155 : vector<8x64xf32> to vector<8x64xbf16>
    %c1_136 = arith.constant 1 : index
    %c0_137 = arith.constant 0 : index
    %c0_138 = arith.constant 0 : index
    %157 = vector.load %arg7[%c1_136, %c0_137, %c0_138] : memref<9x64x64xbf16, #tpu.memory_space<vmem>>, vector<1x64x64xbf16>
    %158 = vector.shape_cast %157 : vector<1x64x64xbf16> to vector<64x64xbf16>
    %cst_139 = arith.constant dense<0.000000e+00> : vector<8x64xf32>
    %159 = tpu.matmul %156, %158, %cst_139 {dimension_numbers = #tpu.dot_dimension_numbers<[1], [0], [0], [1], [0, 0, 1, 1], [], []>} : vector<8x64xbf16>, vector<64x64xbf16>, vector<8x64xf32> -> vector<8x64xf32>
    %160 = arith.addf %152, %159 : vector<8x64xf32>
    %c2_140 = arith.constant 2 : index
    %c0_141 = arith.constant 0 : index
    %c0_142 = arith.constant 0 : index
    %161 = vector.load %arg6[%c2_140, %c0_141, %c0_142] : memref<9x8x32xbf16, #tpu.memory_space<vmem>>, vector<1x8x32xbf16>
    %162 = vector.shape_cast %161 : vector<1x8x32xbf16> to vector<8x32xbf16>
    %cst_143 = arith.constant dense<0.000000e+00> : vector<8x64xf32>
    %163 = tpu.matmul %162, %143, %cst_143 {dimension_numbers = #tpu.dot_dimension_numbers<[1], [0], [0], [1], [0, 0, 1, 1], [], []>} : vector<8x32xbf16>, vector<32x64xbf16>, vector<8x64xf32> -> vector<8x64xf32>
    %164 = arith.truncf %163 : vector<8x64xf32> to vector<8x64xbf16>
    %c2_144 = arith.constant 2 : index
    %c0_145 = arith.constant 0 : index
    %c0_146 = arith.constant 0 : index
    %165 = vector.load %arg7[%c2_144, %c0_145, %c0_146] : memref<9x64x64xbf16, #tpu.memory_space<vmem>>, vector<1x64x64xbf16>
    %166 = vector.shape_cast %165 : vector<1x64x64xbf16> to vector<64x64xbf16>
    %cst_147 = arith.constant dense<0.000000e+00> : vector<8x64xf32>
    %167 = tpu.matmul %164, %166, %cst_147 {dimension_numbers = #tpu.dot_dimension_numbers<[1], [0], [0], [1], [0, 0, 1, 1], [], []>} : vector<8x64xbf16>, vector<64x64xbf16>, vector<8x64xf32> -> vector<8x64xf32>
    %168 = arith.addf %160, %167 : vector<8x64xf32>
    %c3_148 = arith.constant 3 : index
    %c0_149 = arith.constant 0 : index
    %c0_150 = arith.constant 0 : index
    %169 = vector.load %arg6[%c3_148, %c0_149, %c0_150] : memref<9x8x32xbf16, #tpu.memory_space<vmem>>, vector<1x8x32xbf16>
    %170 = vector.shape_cast %169 : vector<1x8x32xbf16> to vector<8x32xbf16>
    %cst_151 = arith.constant dense<0.000000e+00> : vector<8x64xf32>
    %171 = tpu.matmul %170, %143, %cst_151 {dimension_numbers = #tpu.dot_dimension_numbers<[1], [0], [0], [1], [0, 0, 1, 1], [], []>} : vector<8x32xbf16>, vector<32x64xbf16>, vector<8x64xf32> -> vector<8x64xf32>
    %172 = arith.truncf %171 : vector<8x64xf32> to vector<8x64xbf16>
    %c3_152 = arith.constant 3 : index
    %c0_153 = arith.constant 0 : index
    %c0_154 = arith.constant 0 : index
    %173 = vector.load %arg7[%c3_152, %c0_153, %c0_154] : memref<9x64x64xbf16, #tpu.memory_space<vmem>>, vector<1x64x64xbf16>
    %174 = vector.shape_cast %173 : vector<1x64x64xbf16> to vector<64x64xbf16>
    %cst_155 = arith.constant dense<0.000000e+00> : vector<8x64xf32>
    %175 = tpu.matmul %172, %174, %cst_155 {dimension_numbers = #tpu.dot_dimension_numbers<[1], [0], [0], [1], [0, 0, 1, 1], [], []>} : vector<8x64xbf16>, vector<64x64xbf16>, vector<8x64xf32> -> vector<8x64xf32>
    %176 = arith.addf %168, %175 : vector<8x64xf32>
    %c4_156 = arith.constant 4 : index
    %c0_157 = arith.constant 0 : index
    %c0_158 = arith.constant 0 : index
    %177 = vector.load %arg6[%c4_156, %c0_157, %c0_158] : memref<9x8x32xbf16, #tpu.memory_space<vmem>>, vector<1x8x32xbf16>
    %178 = vector.shape_cast %177 : vector<1x8x32xbf16> to vector<8x32xbf16>
    %cst_159 = arith.constant dense<0.000000e+00> : vector<8x64xf32>
    %179 = tpu.matmul %178, %143, %cst_159 {dimension_numbers = #tpu.dot_dimension_numbers<[1], [0], [0], [1], [0, 0, 1, 1], [], []>} : vector<8x32xbf16>, vector<32x64xbf16>, vector<8x64xf32> -> vector<8x64xf32>
    %180 = arith.truncf %179 : vector<8x64xf32> to vector<8x64xbf16>
    %c4_160 = arith.constant 4 : index
    %c0_161 = arith.constant 0 : index
    %c0_162 = arith.constant 0 : index
    %181 = vector.load %arg7[%c4_160, %c0_161, %c0_162] : memref<9x64x64xbf16, #tpu.memory_space<vmem>>, vector<1x64x64xbf16>
    %182 = vector.shape_cast %181 : vector<1x64x64xbf16> to vector<64x64xbf16>
    %cst_163 = arith.constant dense<0.000000e+00> : vector<8x64xf32>
    %183 = tpu.matmul %180, %182, %cst_163 {dimension_numbers = #tpu.dot_dimension_numbers<[1], [0], [0], [1], [0, 0, 1, 1], [], []>} : vector<8x64xbf16>, vector<64x64xbf16>, vector<8x64xf32> -> vector<8x64xf32>
    %184 = arith.addf %176, %183 : vector<8x64xf32>
    %c5_164 = arith.constant 5 : index
    %c0_165 = arith.constant 0 : index
    %c0_166 = arith.constant 0 : index
    %185 = vector.load %arg6[%c5_164, %c0_165, %c0_166] : memref<9x8x32xbf16, #tpu.memory_space<vmem>>, vector<1x8x32xbf16>
    %186 = vector.shape_cast %185 : vector<1x8x32xbf16> to vector<8x32xbf16>
    %cst_167 = arith.constant dense<0.000000e+00> : vector<8x64xf32>
    %187 = tpu.matmul %186, %143, %cst_167 {dimension_numbers = #tpu.dot_dimension_numbers<[1], [0], [0], [1], [0, 0, 1, 1], [], []>} : vector<8x32xbf16>, vector<32x64xbf16>, vector<8x64xf32> -> vector<8x64xf32>
    %188 = arith.truncf %187 : vector<8x64xf32> to vector<8x64xbf16>
    %c5_168 = arith.constant 5 : index
    %c0_169 = arith.constant 0 : index
    %c0_170 = arith.constant 0 : index
    %189 = vector.load %arg7[%c5_168, %c0_169, %c0_170] : memref<9x64x64xbf16, #tpu.memory_space<vmem>>, vector<1x64x64xbf16>
    %190 = vector.shape_cast %189 : vector<1x64x64xbf16> to vector<64x64xbf16>
    %cst_171 = arith.constant dense<0.000000e+00> : vector<8x64xf32>
    %191 = tpu.matmul %188, %190, %cst_171 {dimension_numbers = #tpu.dot_dimension_numbers<[1], [0], [0], [1], [0, 0, 1, 1], [], []>} : vector<8x64xbf16>, vector<64x64xbf16>, vector<8x64xf32> -> vector<8x64xf32>
    %192 = arith.addf %184, %191 : vector<8x64xf32>
    %c6_172 = arith.constant 6 : index
    %c0_173 = arith.constant 0 : index
    %c0_174 = arith.constant 0 : index
    %193 = vector.load %arg6[%c6_172, %c0_173, %c0_174] : memref<9x8x32xbf16, #tpu.memory_space<vmem>>, vector<1x8x32xbf16>
    %194 = vector.shape_cast %193 : vector<1x8x32xbf16> to vector<8x32xbf16>
    %cst_175 = arith.constant dense<0.000000e+00> : vector<8x64xf32>
    %195 = tpu.matmul %194, %143, %cst_175 {dimension_numbers = #tpu.dot_dimension_numbers<[1], [0], [0], [1], [0, 0, 1, 1], [], []>} : vector<8x32xbf16>, vector<32x64xbf16>, vector<8x64xf32> -> vector<8x64xf32>
    %196 = arith.truncf %195 : vector<8x64xf32> to vector<8x64xbf16>
    %c6_176 = arith.constant 6 : index
    %c0_177 = arith.constant 0 : index
    %c0_178 = arith.constant 0 : index
    %197 = vector.load %arg7[%c6_176, %c0_177, %c0_178] : memref<9x64x64xbf16, #tpu.memory_space<vmem>>, vector<1x64x64xbf16>
    %198 = vector.shape_cast %197 : vector<1x64x64xbf16> to vector<64x64xbf16>
    %cst_179 = arith.constant dense<0.000000e+00> : vector<8x64xf32>
    %199 = tpu.matmul %196, %198, %cst_179 {dimension_numbers = #tpu.dot_dimension_numbers<[1], [0], [0], [1], [0, 0, 1, 1], [], []>} : vector<8x64xbf16>, vector<64x64xbf16>, vector<8x64xf32> -> vector<8x64xf32>
    %200 = arith.addf %192, %199 : vector<8x64xf32>
    %c7_180 = arith.constant 7 : index
    %c0_181 = arith.constant 0 : index
    %c0_182 = arith.constant 0 : index
    %201 = vector.load %arg6[%c7_180, %c0_181, %c0_182] : memref<9x8x32xbf16, #tpu.memory_space<vmem>>, vector<1x8x32xbf16>
    %202 = vector.shape_cast %201 : vector<1x8x32xbf16> to vector<8x32xbf16>
    %cst_183 = arith.constant dense<0.000000e+00> : vector<8x64xf32>
    %203 = tpu.matmul %202, %143, %cst_183 {dimension_numbers = #tpu.dot_dimension_numbers<[1], [0], [0], [1], [0, 0, 1, 1], [], []>} : vector<8x32xbf16>, vector<32x64xbf16>, vector<8x64xf32> -> vector<8x64xf32>
    %204 = arith.truncf %203 : vector<8x64xf32> to vector<8x64xbf16>
    %c7_184 = arith.constant 7 : index
    %c0_185 = arith.constant 0 : index
    %c0_186 = arith.constant 0 : index
    %205 = vector.load %arg7[%c7_184, %c0_185, %c0_186] : memref<9x64x64xbf16, #tpu.memory_space<vmem>>, vector<1x64x64xbf16>
    %206 = vector.shape_cast %205 : vector<1x64x64xbf16> to vector<64x64xbf16>
    %cst_187 = arith.constant dense<0.000000e+00> : vector<8x64xf32>
    %207 = tpu.matmul %204, %206, %cst_187 {dimension_numbers = #tpu.dot_dimension_numbers<[1], [0], [0], [1], [0, 0, 1, 1], [], []>} : vector<8x64xbf16>, vector<64x64xbf16>, vector<8x64xf32> -> vector<8x64xf32>
    %208 = arith.addf %200, %207 : vector<8x64xf32>
    %c8_188 = arith.constant 8 : index
    %c0_189 = arith.constant 0 : index
    %c0_190 = arith.constant 0 : index
    %209 = vector.load %arg6[%c8_188, %c0_189, %c0_190] : memref<9x8x32xbf16, #tpu.memory_space<vmem>>, vector<1x8x32xbf16>
    %210 = vector.shape_cast %209 : vector<1x8x32xbf16> to vector<8x32xbf16>
    %cst_191 = arith.constant dense<0.000000e+00> : vector<8x64xf32>
    %211 = tpu.matmul %210, %143, %cst_191 {dimension_numbers = #tpu.dot_dimension_numbers<[1], [0], [0], [1], [0, 0, 1, 1], [], []>} : vector<8x32xbf16>, vector<32x64xbf16>, vector<8x64xf32> -> vector<8x64xf32>
    %212 = arith.truncf %211 : vector<8x64xf32> to vector<8x64xbf16>
    %c8_192 = arith.constant 8 : index
    %c0_193 = arith.constant 0 : index
    %c0_194 = arith.constant 0 : index
    %213 = vector.load %arg7[%c8_192, %c0_193, %c0_194] : memref<9x64x64xbf16, #tpu.memory_space<vmem>>, vector<1x64x64xbf16>
    %214 = vector.shape_cast %213 : vector<1x64x64xbf16> to vector<64x64xbf16>
    %cst_195 = arith.constant dense<0.000000e+00> : vector<8x64xf32>
    %215 = tpu.matmul %212, %214, %cst_195 {dimension_numbers = #tpu.dot_dimension_numbers<[1], [0], [0], [1], [0, 0, 1, 1], [], []>} : vector<8x64xbf16>, vector<64x64xbf16>, vector<8x64xf32> -> vector<8x64xf32>
    %216 = arith.addf %208, %215 : vector<8x64xf32>
    %c0_196 = arith.constant 0 : index
    %c0_197 = arith.constant 0 : index
    %217 = vector.load %arg8[%c0_196, %c0_197] : memref<1x64xf32, #tpu.memory_space<vmem>>, vector<1x64xf32>
    %218 = vector.broadcast %217 : vector<1x64xf32> to vector<8x64xf32>
    %219 = arith.addf %216, %218 : vector<8x64xf32>
    %cst_198 = arith.constant 0.000000e+00 : f32
    %220 = vector.broadcast %cst_198 : f32 to vector<8x64xf32>
    %221 = arith.maximumf %219, %220 : vector<8x64xf32>
    %222 = arith.truncf %221 : vector<8x64xf32> to vector<8x64xbf16>
    %cst_199 = arith.constant 0.000000e+00 : f32
    %223 = vector.broadcast %cst_199 : f32 to vector<2x512xf32>
    %c0_200 = arith.constant 0 : index
    %c0_201 = arith.constant 0 : index
    %c0_202 = arith.constant 0 : index
    %224 = vector.load %arg9[%c0_200, %c0_201, %c0_202] : memref<4x2x8xbf16, #tpu.memory_space<vmem>>, vector<1x2x8xbf16>
    %225 = vector.shape_cast %224 : vector<1x2x8xbf16> to vector<2x8xbf16>
    %cst_203 = arith.constant dense<0.000000e+00> : vector<2x64xf32>
    %226 = tpu.matmul %225, %222, %cst_203 {dimension_numbers = #tpu.dot_dimension_numbers<[1], [0], [0], [1], [0, 0, 1, 1], [], []>} : vector<2x8xbf16>, vector<8x64xbf16>, vector<2x64xf32> -> vector<2x64xf32>
    %227 = arith.truncf %226 : vector<2x64xf32> to vector<2x64xbf16>
    %c0_204 = arith.constant 0 : index
    %c0_205 = arith.constant 0 : index
    %c0_206 = arith.constant 0 : index
    %228 = vector.load %arg10[%c0_204, %c0_205, %c0_206] : memref<4x64x512xbf16, #tpu.memory_space<vmem>>, vector<1x64x512xbf16>
    %229 = vector.shape_cast %228 : vector<1x64x512xbf16> to vector<64x512xbf16>
    %cst_207 = arith.constant dense<0.000000e+00> : vector<2x512xf32>
    %230 = tpu.matmul %227, %229, %cst_207 {dimension_numbers = #tpu.dot_dimension_numbers<[1], [0], [0], [1], [0, 0, 1, 1], [], []>} : vector<2x64xbf16>, vector<64x512xbf16>, vector<2x512xf32> -> vector<2x512xf32>
    %231 = arith.addf %223, %230 : vector<2x512xf32>
    %c1_208 = arith.constant 1 : index
    %c0_209 = arith.constant 0 : index
    %c0_210 = arith.constant 0 : index
    %232 = vector.load %arg9[%c1_208, %c0_209, %c0_210] : memref<4x2x8xbf16, #tpu.memory_space<vmem>>, vector<1x2x8xbf16>
    %233 = vector.shape_cast %232 : vector<1x2x8xbf16> to vector<2x8xbf16>
    %cst_211 = arith.constant dense<0.000000e+00> : vector<2x64xf32>
    %234 = tpu.matmul %233, %222, %cst_211 {dimension_numbers = #tpu.dot_dimension_numbers<[1], [0], [0], [1], [0, 0, 1, 1], [], []>} : vector<2x8xbf16>, vector<8x64xbf16>, vector<2x64xf32> -> vector<2x64xf32>
    %235 = arith.truncf %234 : vector<2x64xf32> to vector<2x64xbf16>
    %c1_212 = arith.constant 1 : index
    %c0_213 = arith.constant 0 : index
    %c0_214 = arith.constant 0 : index
    %236 = vector.load %arg10[%c1_212, %c0_213, %c0_214] : memref<4x64x512xbf16, #tpu.memory_space<vmem>>, vector<1x64x512xbf16>
    %237 = vector.shape_cast %236 : vector<1x64x512xbf16> to vector<64x512xbf16>
    %cst_215 = arith.constant dense<0.000000e+00> : vector<2x512xf32>
    %238 = tpu.matmul %235, %237, %cst_215 {dimension_numbers = #tpu.dot_dimension_numbers<[1], [0], [0], [1], [0, 0, 1, 1], [], []>} : vector<2x64xbf16>, vector<64x512xbf16>, vector<2x512xf32> -> vector<2x512xf32>
    %239 = arith.addf %231, %238 : vector<2x512xf32>
    %c2_216 = arith.constant 2 : index
    %c0_217 = arith.constant 0 : index
    %c0_218 = arith.constant 0 : index
    %240 = vector.load %arg9[%c2_216, %c0_217, %c0_218] : memref<4x2x8xbf16, #tpu.memory_space<vmem>>, vector<1x2x8xbf16>
    %241 = vector.shape_cast %240 : vector<1x2x8xbf16> to vector<2x8xbf16>
    %cst_219 = arith.constant dense<0.000000e+00> : vector<2x64xf32>
    %242 = tpu.matmul %241, %222, %cst_219 {dimension_numbers = #tpu.dot_dimension_numbers<[1], [0], [0], [1], [0, 0, 1, 1], [], []>} : vector<2x8xbf16>, vector<8x64xbf16>, vector<2x64xf32> -> vector<2x64xf32>
    %243 = arith.truncf %242 : vector<2x64xf32> to vector<2x64xbf16>
    %c2_220 = arith.constant 2 : index
    %c0_221 = arith.constant 0 : index
    %c0_222 = arith.constant 0 : index
    %244 = vector.load %arg10[%c2_220, %c0_221, %c0_222] : memref<4x64x512xbf16, #tpu.memory_space<vmem>>, vector<1x64x512xbf16>
    %245 = vector.shape_cast %244 : vector<1x64x512xbf16> to vector<64x512xbf16>
    %cst_223 = arith.constant dense<0.000000e+00> : vector<2x512xf32>
    %246 = tpu.matmul %243, %245, %cst_223 {dimension_numbers = #tpu.dot_dimension_numbers<[1], [0], [0], [1], [0, 0, 1, 1], [], []>} : vector<2x64xbf16>, vector<64x512xbf16>, vector<2x512xf32> -> vector<2x512xf32>
    %247 = arith.addf %239, %246 : vector<2x512xf32>
    %c3_224 = arith.constant 3 : index
    %c0_225 = arith.constant 0 : index
    %c0_226 = arith.constant 0 : index
    %248 = vector.load %arg9[%c3_224, %c0_225, %c0_226] : memref<4x2x8xbf16, #tpu.memory_space<vmem>>, vector<1x2x8xbf16>
    %249 = vector.shape_cast %248 : vector<1x2x8xbf16> to vector<2x8xbf16>
    %cst_227 = arith.constant dense<0.000000e+00> : vector<2x64xf32>
    %250 = tpu.matmul %249, %222, %cst_227 {dimension_numbers = #tpu.dot_dimension_numbers<[1], [0], [0], [1], [0, 0, 1, 1], [], []>} : vector<2x8xbf16>, vector<8x64xbf16>, vector<2x64xf32> -> vector<2x64xf32>
    %251 = arith.truncf %250 : vector<2x64xf32> to vector<2x64xbf16>
    %c3_228 = arith.constant 3 : index
    %c0_229 = arith.constant 0 : index
    %c0_230 = arith.constant 0 : index
    %252 = vector.load %arg10[%c3_228, %c0_229, %c0_230] : memref<4x64x512xbf16, #tpu.memory_space<vmem>>, vector<1x64x512xbf16>
    %253 = vector.shape_cast %252 : vector<1x64x512xbf16> to vector<64x512xbf16>
    %cst_231 = arith.constant dense<0.000000e+00> : vector<2x512xf32>
    %254 = tpu.matmul %251, %253, %cst_231 {dimension_numbers = #tpu.dot_dimension_numbers<[1], [0], [0], [1], [0, 0, 1, 1], [], []>} : vector<2x64xbf16>, vector<64x512xbf16>, vector<2x512xf32> -> vector<2x512xf32>
    %255 = arith.addf %247, %254 : vector<2x512xf32>
    %c0_232 = arith.constant 0 : index
    %c0_233 = arith.constant 0 : index
    %256 = vector.load %arg11[%c0_232, %c0_233] : memref<1x512xf32, #tpu.memory_space<vmem>>, vector<1x512xf32>
    %257 = vector.broadcast %256 : vector<1x512xf32> to vector<2x512xf32>
    %258 = arith.addf %255, %257 : vector<2x512xf32>
    %cst_234 = arith.constant 0.000000e+00 : f32
    %259 = vector.broadcast %cst_234 : f32 to vector<2x512xf32>
    %260 = arith.maximumf %258, %259 : vector<2x512xf32>
    %261 = arith.truncf %260 : vector<2x512xf32> to vector<2x512xbf16>
    %c0_235 = arith.constant 0 : index
    %c0_236 = arith.constant 0 : index
    %262 = vector.load %arg12[%c0_235, %c0_236] : memref<512x128xbf16, #tpu.memory_space<vmem>>, vector<512x128xbf16>
    %cst_237 = arith.constant dense<0.000000e+00> : vector<2x128xf32>
    %263 = tpu.matmul %261, %262, %cst_237 {dimension_numbers = #tpu.dot_dimension_numbers<[1], [0], [0], [1], [0, 0, 1, 1], [], []>} : vector<2x512xbf16>, vector<512x128xbf16>, vector<2x128xf32> -> vector<2x128xf32>
    %c0_238 = arith.constant 0 : index
    %c0_239 = arith.constant 0 : index
    %264 = vector.load %arg13[%c0_238, %c0_239] : memref<1x128xf32, #tpu.memory_space<vmem>>, vector<1x128xf32>
    %265 = vector.broadcast %264 : vector<1x128xf32> to vector<2x128xf32>
    %266 = arith.addf %263, %265 : vector<2x128xf32>
    %c0_240 = arith.constant 0 : index
    %c0_241 = arith.constant 0 : index
    %267 = vector.load %arg14[%c0_240, %c0_241] : memref<2x128xf32, #tpu.memory_space<vmem>>, vector<2x128xf32>
    tpu.vector_store %arg14[%c0_240, %c0_241], %266 {strides = array<i32>} : memref<2x128xf32, #tpu.memory_space<vmem>>, vector<2x128xf32>,
    return
  }
}

</mosaic_0001>

<llo_original>
// kernel: fwd.1
$region0: #{fwd.1}
  #allocation0 [shape = 'u32[]', space=smem, size = 0x4, offset = 0x4, fixed_abs, tag = 'smem constant byte address 0x4 - core index']
  #allocation1 [shape = 'u32[72,128]{1,0:T(1,128)}', space=vmem, size = 0x9000, scoped, tag = 'internal scratch']
  %s0 = inlined_call_operand.vmem [shape: bf16[200,256], index: 0, kind: input, shape index: {}]
  %s1 = inlined_call_operand.vmem [shape: bf16[256,32], index: 1, kind: input, shape index: {}]
  %s2 = inlined_call_operand.vmem [shape: f32[1,32], index: 2, kind: input, shape index: {}]
  %s3 = inlined_call_operand.vmem [shape: bf16[16,32,200], index: 3, kind: input, shape index: {}]
  %s4 = inlined_call_operand.vmem [shape: bf16[16,32,64], index: 4, kind: input, shape index: {}]
  %s5 = inlined_call_operand.vmem [shape: f32[1,64], index: 5, kind: input, shape index: {}]
  %s6 = inlined_call_operand.vmem [shape: bf16[9,8,32], index: 6, kind: input, shape index: {}]
  %s7 = inlined_call_operand.vmem [shape: bf16[9,64,64], index: 7, kind: input, shape index: {}]
  %s8 = inlined_call_operand.vmem [shape: f32[1,64], index: 8, kind: input, shape index: {}]
  %s9 = inlined_call_operand.vmem [shape: bf16[4,2,8], index: 9, kind: input, shape index: {}]
  %s10 = inlined_call_operand.vmem [shape: bf16[4,64,512], index: 10, kind: input, shape index: {}]
  %s11 = inlined_call_operand.vmem [shape: f32[1,512], index: 11, kind: input, shape index: {}]
  %s12 = inlined_call_operand.vmem [shape: bf16[512,128], index: 12, kind: input, shape index: {}]
  %s13 = inlined_call_operand.vmem [shape: f32[1,128], index: 13, kind: input, shape index: {}]
  %s14 = inlined_call_operand.hbm [shape: f32[2,128], index: 14, kind: output, shape index: {}]
  %s15 = sld [smem:[#allocation0]]
  $region66: #{fwd.1} parent=0
    _
  %s17 = ssub.s32 1, %s15
  %s18 = scalar_select 0, %s17, %s15
  $region1: #{fwd.1} parent=0
    #allocation2 [shape = 'u8[1024]{0}', space=vmem, size = 0x400, scoped, tag = 'output window, operand 0, single buffered']
    #allocation3 [shape = 's32[1]{0}', space=sflag, size = 0x4, scoped, tag = 'scoped memory for fwd.1']
    %19 = vsyncpa [#allocation3], 0
    // Predicated region
    $region2: #{fwd.1} parent=1 // pred_check
      _
    $region3: #{fwd.1} parent=1 // pred_check_branch
      %21 = sbr.rel (0) target = $region5
    $region4: #{fwd.1} parent=1 // pred_region
      _
    $region5: #{fwd.1} parent=1 // pred_fallthru
      _
    // Predicated region
    $region6: #{fwd.1} parent=1 // pred_check
      _
    $region7: #{fwd.1} parent=1 // pred_check_branch
      %23 = sbr.rel (0) target = $region9
    $region8: #{fwd.1} parent=1 // pred_region
      _
    $region9: #{fwd.1} parent=1 // pred_fallthru
      _
    // Predicated region
    $region10: #{fwd.1} parent=1 // pred_check
      _
    $region11: #{fwd.1} parent=1 // pred_check_branch
      %25 = sbr.rel (0) target = $region13
    $region12: #{fwd.1} parent=1 // pred_region
      _
    $region13: #{fwd.1} parent=1 // pred_fallthru
      _
    // Predicated region
    $region14: #{fwd.1} parent=1 // pred_check
      _
    $region15: #{fwd.1} parent=1 // pred_check_branch
      %27 = sbr.rel (0) target = $region17
    $region16: #{fwd.1} parent=1 // pred_region
      _
    $region17: #{fwd.1} parent=1 // pred_fallthru
      _
    // Predicated region
    $region18: #{fwd.1} parent=1 // pred_check
      _
    $region19: #{fwd.1} parent=1 // pred_check_branch
      %29 = sbr.rel (0) target = $region21
    $region20: #{fwd.1} parent=1 // pred_region
      _
    $region21: #{fwd.1} parent=1 // pred_fallthru
      _
    // Predicated region
    $region22: #{fwd.1} parent=1 // pred_check
      _
    $region23: #{fwd.1} parent=1 // pred_check_branch
      %31 = sbr.rel (0) target = $region25
    $region24: #{fwd.1} parent=1 // pred_region
      _
    $region25: #{fwd.1} parent=1 // pred_fallthru
      _
    // Predicated region
    $region26: #{fwd.1} parent=1 // pred_check
      _
    $region27: #{fwd.1} parent=1 // pred_check_branch
      %33 = sbr.rel (0) target = $region29
    $region28: #{fwd.1} parent=1 // pred_region
      _
    $region29: #{fwd.1} parent=1 // pred_fallthru
      _
    // Predicated region
    $region30: #{fwd.1} parent=1 // pred_check
      _
    $region31: #{fwd.1} parent=1 // pred_check_branch
      %35 = sbr.rel (0) target = $region33
    $region32: #{fwd.1} parent=1 // pred_region
      _
    $region33: #{fwd.1} parent=1 // pred_fallthru
      _
    // Predicated region
    $region34: #{fwd.1} parent=1 // pred_check
      _
    $region35: #{fwd.1} parent=1 // pred_check_branch
      %37 = sbr.rel (0) target = $region37
    $region36: #{fwd.1} parent=1 // pred_region
      _
    $region37: #{fwd.1} parent=1 // pred_fallthru
      _
    // Predicated region
    $region38: #{fwd.1} parent=1 // pred_check
      _
    $region39: #{fwd.1} parent=1 // pred_check_branch
      %39 = sbr.rel (0) target = $region41
    $region40: #{fwd.1} parent=1 // pred_region
      _
    $region41: #{fwd.1} parent=1 // pred_fallthru
      _
    // Predicated region
    $region42: #{fwd.1} parent=1 // pred_check
      _
    $region43: #{fwd.1} parent=1 // pred_check_branch
      %41 = sbr.rel (0) target = $region45
    $region44: #{fwd.1} parent=1 // pred_region
      _
    $region45: #{fwd.1} parent=1 // pred_fallthru
      _
    // Predicated region
    $region46: #{fwd.1} parent=1 // pred_check
      _
    $region47: #{fwd.1} parent=1 // pred_check_branch
      %43 = sbr.rel (0) target = $region49
    $region48: #{fwd.1} parent=1 // pred_region
      _
    $region49: #{fwd.1} parent=1 // pred_fallthru
      _
    // Predicated region
    $region50: #{fwd.1} parent=1 // pred_check
      _
    $region51: #{fwd.1} parent=1 // pred_check_branch
      %45 = sbr.rel (0) target = $region53
    $region52: #{fwd.1} parent=1 // pred_region
      _
    $region53: #{fwd.1} parent=1 // pred_fallthru
      _
    // Predicated region
    $region54: #{fwd.1} parent=1 // pred_check
      _
    $region55: #{fwd.1} parent=1 // pred_check_branch
      %47 = sbr.rel (0) target = $region57
    $region56: #{fwd.1} parent=1 // pred_region
      _
    $region57: #{fwd.1} parent=1 // pred_fallthru
      _
    %v49 = vld [vmem:[%s0] sm:$0xff]
    %v50 = vld [vmem:[%s0 + $0x8] sm:$0xff]
    %v51 = vld [vmem:[%s0 + $0x10] sm:$0xff]
    %v52 = vld [vmem:[%s0 + $0x18] sm:$0xff]
    %v53 = vld [vmem:[%s0 + $0x20] sm:$0xff]
    %v54 = vld [vmem:[%s0 + $0x28] sm:$0xff]
    %v55 = vld [vmem:[%s0 + $0x30] sm:$0xff]
    %v56 = vld [vmem:[%s0 + $0x38] sm:$0xff]
    %v57 = vld [vmem:[%s0 + $0x40] sm:$0xff]
    %v58 = vld [vmem:[%s0 + $0x48] sm:$0xff]
    %v59 = vld [vmem:[%s0 + $0x50] sm:$0xff]
    %v60 = vld [vmem:[%s0 + $0x58] sm:$0xff]
    %v61 = vld [vmem:[%s0 + $0x60] sm:$0xff]
    %v62 = vld [vmem:[%s0 + $0x68] sm:$0xff]
    %v63 = vld [vmem:[%s0 + $0x70] sm:$0xff]
    %v64 = vld [vmem:[%s0 + $0x78] sm:$0xff]
    %v65 = vld [vmem:[%s0 + $0x80] sm:$0xff]
    %v66 = vld [vmem:[%s0 + $0x88] sm:$0xff]
    %v67 = vld [vmem:[%s0 + $0x90] sm:$0xff]
    %v68 = vld [vmem:[%s0 + $0x98] sm:$0xff]
    %v69 = vld [vmem:[%s0 + $0xa0] sm:$0xff]
    %v70 = vld [vmem:[%s0 + $0xa8] sm:$0xff]
    %v71 = vld [vmem:[%s0 + $0xb0] sm:$0xff]
    %v72 = vld [vmem:[%s0 + $0xb8] sm:$0xff]
    %v73 = vld [vmem:[%s0 + $0xc0] sm:$0xff]
    %v74 = vld [vmem:[%s1] sm:$0xf]
    %v75 = vld [vmem:[%s1 + $0x4] sm:$0xf]
    %v76 = vld [vmem:[%s1 + $0x8] sm:$0xf]
    %v77 = vld [vmem:[%s1 + $0xc] sm:$0xf]
    %v78 = vld [vmem:[%s1 + $0x10] sm:$0xf]
    %v79 = vld [vmem:[%s1 + $0x14] sm:$0xf]
    %v80 = vld [vmem:[%s1 + $0x18] sm:$0xf]
    %v81 = vld [vmem:[%s1 + $0x1c] sm:$0xf]
    %v82 = vld [vmem:[%s1 + $0x20] sm:$0xf]
    %v83 = vld [vmem:[%s1 + $0x24] sm:$0xf]
    %v84 = vld [vmem:[%s1 + $0x28] sm:$0xf]
    %v85 = vld [vmem:[%s1 + $0x2c] sm:$0xf]
    %v86 = vld [vmem:[%s1 + $0x30] sm:$0xf]
    %v87 = vld [vmem:[%s1 + $0x34] sm:$0xf]
    %v88 = vld [vmem:[%s1 + $0x38] sm:$0xf]
    %v89 = vld [vmem:[%s1 + $0x3c] sm:$0xf]
    %v90 = vld [vmem:[%s1 + $0x40] sm:$0xf]
    %v91 = vld [vmem:[%s1 + $0x44] sm:$0xf]
    %v92 = vld [vmem:[%s1 + $0x48] sm:$0xf]
    %v93 = vld [vmem:[%s1 + $0x4c] sm:$0xf]
    %v94 = vld [vmem:[%s1 + $0x50] sm:$0xf]
    %v95 = vld [vmem:[%s1 + $0x54] sm:$0xf]
    %v96 = vld [vmem:[%s1 + $0x58] sm:$0xf]
    %v97 = vld [vmem:[%s1 + $0x5c] sm:$0xf]
    %v98 = vld [vmem:[%s1 + $0x60] sm:$0xf]
    %v99 = vld [vmem:[%s1 + $0x64] sm:$0xf]
    %v100 = vld [vmem:[%s1 + $0x68] sm:$0xf]
    %v101 = vld [vmem:[%s1 + $0x6c] sm:$0xf]
    %v102 = vld [vmem:[%s1 + $0x70] sm:$0xf]
    %v103 = vld [vmem:[%s1 + $0x74] sm:$0xf]
    %v104 = vld [vmem:[%s1 + $0x78] sm:$0xf]
    %v105 = vld [vmem:[%s1 + $0x7c] sm:$0xf]
    %v106 = vld [vmem:[%s2] sm:$0x1]
    %v108 = vperm.slane %v106, 0
    %v135 = vunpack.c.l.b16 %v49
    %v136 = vunpack.c.h.b16 %v49
    %v137 = vunpack.c.l.b16 %v50
    %v138 = vunpack.c.h.b16 %v50
    %v139 = vunpack.c.l.b16 %v51
    %v140 = vunpack.c.h.b16 %v51
    %v141 = vunpack.c.l.b16 %v52
    %v142 = vunpack.c.h.b16 %v52
    %v143 = vunpack.c.l.b16 %v53
    %v144 = vunpack.c.h.b16 %v53
    %v145 = vunpack.c.l.b16 %v54
    %v146 = vunpack.c.h.b16 %v54
    %v147 = vunpack.c.l.b16 %v55
    %v148 = vunpack.c.h.b16 %v55
    %v149 = vunpack.c.l.b16 %v56
    %v150 = vunpack.c.h.b16 %v56
    %v151 = vunpack.c.l.b16 %v57
    %v152 = vunpack.c.h.b16 %v57
    %v153 = vunpack.c.l.b16 %v58
    %v154 = vunpack.c.h.b16 %v58
    %v155 = vunpack.c.l.b16 %v59
    %v156 = vunpack.c.h.b16 %v59
    %v157 = vunpack.c.l.b16 %v60
    %v158 = vunpack.c.h.b16 %v60
    %v159 = vunpack.c.l.b16 %v61
    %v160 = vunpack.c.h.b16 %v61
    %v161 = vunpack.c.l.b16 %v62
    %v162 = vunpack.c.h.b16 %v62
    %v163 = vunpack.c.l.b16 %v63
    %v164 = vunpack.c.h.b16 %v63
    %v165 = vunpack.c.l.b16 %v64
    %v166 = vunpack.c.h.b16 %v64
    %v167 = vunpack.c.l.b16 %v65
    %v168 = vunpack.c.h.b16 %v65
    %v169 = vunpack.c.l.b16 %v66
    %v170 = vunpack.c.h.b16 %v66
    %v171 = vunpack.c.l.b16 %v67
    %v172 = vunpack.c.h.b16 %v67
    %v173 = vunpack.c.l.b16 %v68
    %v174 = vunpack.c.h.b16 %v68
    %v175 = vunpack.c.l.b16 %v69
    %v176 = vunpack.c.h.b16 %v69
    %v177 = vunpack.c.l.b16 %v70
    %v178 = vunpack.c.h.b16 %v70
    %v179 = vunpack.c.l.b16 %v71
    %v180 = vunpack.c.h.b16 %v71
    %v181 = vunpack.c.l.b16 %v72
    %v182 = vunpack.c.h.b16 %v72
    %v183 = vunpack.c.l.b16 %v73
    %v184 = vunpack.c.h.b16 %v73
    %v185 = vpack.c.b16 %v137, %v135
    %v186 = vpack.c.b16 %v138, %v136
    %v187 = vpack.c.b16 %v141, %v139
    %v188 = vpack.c.b16 %v142, %v140
    %v189 = vpack.c.b16 %v145, %v143
    %v190 = vpack.c.b16 %v146, %v144
    %v191 = vpack.c.b16 %v149, %v147
    %v192 = vpack.c.b16 %v150, %v148
    %v193 = vpack.c.b16 %v153, %v151
    %v194 = vpack.c.b16 %v154, %v152
    %v195 = vpack.c.b16 %v157, %v155
    %v196 = vpack.c.b16 %v158, %v156
    %v197 = vpack.c.b16 %v161, %v159
    %v198 = vpack.c.b16 %v162, %v160
    %v199 = vpack.c.b16 %v165, %v163
    %v200 = vpack.c.b16 %v166, %v164
    %v201 = vpack.c.b16 %v169, %v167
    %v202 = vpack.c.b16 %v170, %v168
    %v203 = vpack.c.b16 %v173, %v171
    %v204 = vpack.c.b16 %v174, %v172
    %v205 = vpack.c.b16 %v177, %v175
    %v206 = vpack.c.b16 %v178, %v176
    %v207 = vpack.c.b16 %v181, %v179
    %v208 = vpack.c.b16 %v182, %v180
    %v209 = vpack.c.b16 %v183, %v183
    %v210 = vpack.c.b16 %v184, %v184
    %v269 = vunpack.c.l.b16 %v74
    %v270 = vunpack.c.l.b16 %v75
    %v271 = vunpack.c.l.b16 %v76
    %v272 = vunpack.c.l.b16 %v77
    %v273 = vunpack.c.l.b16 %v78
    %v274 = vunpack.c.l.b16 %v79
    %v275 = vunpack.c.l.b16 %v80
    %v276 = vunpack.c.l.b16 %v81
    %v277 = vunpack.c.l.b16 %v82
    %v278 = vunpack.c.l.b16 %v83
    %v279 = vunpack.c.l.b16 %v84
    %v280 = vunpack.c.l.b16 %v85
    %v281 = vunpack.c.l.b16 %v86
    %v282 = vunpack.c.l.b16 %v87
    %v283 = vunpack.c.l.b16 %v88
    %v284 = vunpack.c.l.b16 %v89
    %v285 = vunpack.c.l.b16 %v90
    %v286 = vunpack.c.l.b16 %v91
    %v287 = vunpack.c.l.b16 %v92
    %v288 = vunpack.c.l.b16 %v93
    %v289 = vunpack.c.l.b16 %v94
    %v290 = vunpack.c.l.b16 %v95
    %v291 = vunpack.c.l.b16 %v96
    %v292 = vunpack.c.l.b16 %v97
    %v293 = vunpack.c.l.b16 %v98
    %v294 = vunpack.c.l.b16 %v99
    %v295 = vunpack.c.l.b16 %v100
    %v296 = vunpack.c.l.b16 %v101
    %v297 = vunpack.c.l.b16 %v102
    %v298 = vunpack.c.l.b16 %v103
    %v299 = vunpack.c.l.b16 %v104
    %v300 = vunpack.c.l.b16 %v105
    %v301 = vpack.c.b16 %v270, %v269
    %v302 = vpack.c.b16 %v272, %v271
    %v303 = vpack.c.b16 %v274, %v273
    %v304 = vpack.c.b16 %v276, %v275
    %v305 = vpack.c.b16 %v278, %v277
    %v306 = vpack.c.b16 %v280, %v279
    %v307 = vpack.c.b16 %v282, %v281
    %v308 = vpack.c.b16 %v284, %v283
    %v309 = vpack.c.b16 %v286, %v285
    %v310 = vpack.c.b16 %v288, %v287
    %v311 = vpack.c.b16 %v290, %v289
    %v312 = vpack.c.b16 %v292, %v291
    %v313 = vpack.c.b16 %v294, %v293
    %v314 = vpack.c.b16 %v296, %v295
    %v315 = vpack.c.b16 %v298, %v297
    %v316 = vpack.c.b16 %v300, %v299
    %333 = vmatpush.bf16.msra.mxu0 %v308
    %334 = vmatpush.bf16.msra.mxu0 %v307
    %335 = vmatpush.bf16.msra.mxu0 %v306
    %336 = vmatpush.bf16.msra.mxu0 %v305
    %337 = vmatpush.bf16.msra.mxu0 %v304
    %338 = vmatpush.bf16.msra.mxu0 %v303
    %339 = vmatpush.bf16.msra.mxu0 %v302
    %340 = vmatpush.bf16.msra.mxu0 %v301
    %341 = vmatmul.bf16.gmra.mxu0 %v185
    %v342 = vpop.f32.mrf.mxu0
    %v343 = vadd.f32 %v108, %v342
    %v344 = vpop.f32.mrf.mxu0
    %v345 = vadd.f32 %v108, %v344
    %346 = vmatmul.bf16.gmra.mxu0 %v187
    %v347 = vpop.f32.mrf.mxu0
    %v348 = vadd.f32 %v108, %v347
    %v349 = vpop.f32.mrf.mxu0
    %v350 = vadd.f32 %v108, %v349
    %351 = vmatmul.bf16.gmra.mxu0 %v189
    %v352 = vpop.f32.mrf.mxu0
    %v353 = vadd.f32 %v108, %v352
    %v354 = vpop.f32.mrf.mxu0
    %v355 = vadd.f32 %v108, %v354
    %356 = vmatmul.bf16.gmra.mxu0 %v191
    %v357 = vpop.f32.mrf.mxu0
    %v358 = vadd.f32 %v108, %v357
    %v359 = vpop.f32.mrf.mxu0
    %v360 = vadd.f32 %v108, %v359
    %361 = vmatmul.bf16.gmra.mxu0 %v193
    %v362 = vpop.f32.mrf.mxu0
    %v363 = vadd.f32 %v108, %v362
    %v364 = vpop.f32.mrf.mxu0
    %v365 = vadd.f32 %v108, %v364
    %366 = vmatmul.bf16.gmra.mxu0 %v195
    %v367 = vpop.f32.mrf.mxu0
    %v368 = vadd.f32 %v108, %v367
    %v369 = vpop.f32.mrf.mxu0
    %v370 = vadd.f32 %v108, %v369
    %371 = vmatmul.bf16.gmra.mxu0 %v197
    %v372 = vpop.f32.mrf.mxu0
    %v373 = vadd.f32 %v108, %v372
    %v374 = vpop.f32.mrf.mxu0
    %v375 = vadd.f32 %v108, %v374
    %376 = vmatmul.bf16.gmra.mxu0 %v199
    %v377 = vpop.f32.mrf.mxu0
    %v378 = vadd.f32 %v108, %v377
    %v379 = vpop.f32.mrf.mxu0
    %v380 = vadd.f32 %v108, %v379
    %381 = vmatmul.bf16.gmra.mxu0 %v201
    %v382 = vpop.f32.mrf.mxu0
    %v383 = vadd.f32 %v108, %v382
    %v384 = vpop.f32.mrf.mxu0
    %v385 = vadd.f32 %v108, %v384
    %386 = vmatmul.bf16.gmra.mxu0 %v203
    %v387 = vpop.f32.mrf.mxu0
    %v388 = vadd.f32 %v108, %v387
    %v389 = vpop.f32.mrf.mxu0
    %v390 = vadd.f32 %v108, %v389
    %391 = vmatmul.bf16.gmra.mxu0 %v205
    %v392 = vpop.f32.mrf.mxu0
    %v393 = vadd.f32 %v108, %v392
    %v394 = vpop.f32.mrf.mxu0
    %v395 = vadd.f32 %v108, %v394
    %396 = vmatmul.bf16.gmra.mxu0 %v207
    %v397 = vpop.f32.mrf.mxu0
    %v398 = vadd.f32 %v108, %v397
    %v399 = vpop.f32.mrf.mxu0
    %v400 = vadd.f32 %v108, %v399
    %401 = vmatmul.bf16.gmra.mxu0 %v209
    %v402 = vpop.f32.mrf.mxu0
    %v403 = vadd.f32 %v108, %v402
    %v404 = vpop.f32.mrf.mxu0
    %405 = vdwg.mxu0
    %406 = vmatpush.bf16.msra.mxu0 %v316
    %407 = vmatpush.bf16.msra.mxu0 %v315
    %408 = vmatpush.bf16.msra.mxu0 %v314
    %409 = vmatpush.bf16.msra.mxu0 %v313
    %410 = vmatpush.bf16.msra.mxu0 %v312
    %411 = vmatpush.bf16.msra.mxu0 %v311
    %412 = vmatpush.bf16.msra.mxu0 %v310
    %413 = vmatpush.bf16.msra.mxu0 %v309
    %414 = vmatmul.bf16.gmra.mxu0 %v186
    %v415 = vpop.f32.mrf.mxu0
    %v416 = vadd.f32 %v343, %v415
    %v417 = vpop.f32.mrf.mxu0
    %v418 = vadd.f32 %v345, %v417
    %419 = vmatmul.bf16.gmra.mxu0 %v188
    %v420 = vpop.f32.mrf.mxu0
    %v421 = vadd.f32 %v348, %v420
    %v422 = vpop.f32.mrf.mxu0
    %v423 = vadd.f32 %v350, %v422
    %424 = vmatmul.bf16.gmra.mxu0 %v190
    %v425 = vpop.f32.mrf.mxu0
    %v426 = vadd.f32 %v353, %v425
    %v427 = vpop.f32.mrf.mxu0
    %v428 = vadd.f32 %v355, %v427
    %429 = vmatmul.bf16.gmra.mxu0 %v192
    %v430 = vpop.f32.mrf.mxu0
    %v431 = vadd.f32 %v358, %v430
    %v432 = vpop.f32.mrf.mxu0
    %v433 = vadd.f32 %v360, %v432
    %434 = vmatmul.bf16.gmra.mxu0 %v194
    %v435 = vpop.f32.mrf.mxu0
    %v436 = vadd.f32 %v363, %v435
    %v437 = vpop.f32.mrf.mxu0
    %v438 = vadd.f32 %v365, %v437
    %439 = vmatmul.bf16.gmra.mxu0 %v196
    %v440 = vpop.f32.mrf.mxu0
    %v441 = vadd.f32 %v368, %v440
    %v442 = vpop.f32.mrf.mxu0
    %v443 = vadd.f32 %v370, %v442
    %444 = vmatmul.bf16.gmra.mxu0 %v198
    %v445 = vpop.f32.mrf.mxu0
    %v446 = vadd.f32 %v373, %v445
    %v447 = vpop.f32.mrf.mxu0
    %v448 = vadd.f32 %v375, %v447
    %449 = vmatmul.bf16.gmra.mxu0 %v200
    %v450 = vpop.f32.mrf.mxu0
    %v451 = vadd.f32 %v378, %v450
    %v452 = vpop.f32.mrf.mxu0
    %v453 = vadd.f32 %v380, %v452
    %454 = vmatmul.bf16.gmra.mxu0 %v202
    %v455 = vpop.f32.mrf.mxu0
    %v456 = vadd.f32 %v383, %v455
    %v457 = vpop.f32.mrf.mxu0
    %v458 = vadd.f32 %v385, %v457
    %459 = vmatmul.bf16.gmra.mxu0 %v204
    %v460 = vpop.f32.mrf.mxu0
    %v461 = vadd.f32 %v388, %v460
    %v462 = vpop.f32.mrf.mxu0
    %v463 = vadd.f32 %v390, %v462
    %464 = vmatmul.bf16.gmra.mxu0 %v206
    %v465 = vpop.f32.mrf.mxu0
    %v466 = vadd.f32 %v393, %v465
    %v467 = vpop.f32.mrf.mxu0
    %v468 = vadd.f32 %v395, %v467
    %469 = vmatmul.bf16.gmra.mxu0 %v208
    %v470 = vpop.f32.mrf.mxu0
    %v471 = vadd.f32 %v398, %v470
    %v472 = vpop.f32.mrf.mxu0
    %v473 = vadd.f32 %v400, %v472
    %474 = vmatmul.bf16.gmra.mxu0 %v210
    %v475 = vpop.f32.mrf.mxu0
    %v476 = vadd.f32 %v403, %v475
    %v477 = vpop.f32.mrf.mxu0
    %478 = vdwg.mxu0
    %v479 = vmax.f32 %v416, 0.0
    %v480 = vmax.f32 %v418, 0.0
    %v481 = vmax.f32 %v421, 0.0
    %v482 = vmax.f32 %v423, 0.0
    %v483 = vmax.f32 %v426, 0.0
    %v484 = vmax.f32 %v428, 0.0
    %v485 = vmax.f32 %v431, 0.0
    %v486 = vmax.f32 %v433, 0.0
    %v487 = vmax.f32 %v436, 0.0
    %v488 = vmax.f32 %v438, 0.0
    %v489 = vmax.f32 %v441, 0.0
    %v490 = vmax.f32 %v443, 0.0
    %v491 = vmax.f32 %v446, 0.0
    %v492 = vmax.f32 %v448, 0.0
    %v493 = vmax.f32 %v451, 0.0
    %v494 = vmax.f32 %v453, 0.0
    %v495 = vmax.f32 %v456, 0.0
    %v496 = vmax.f32 %v458, 0.0
    %v497 = vmax.f32 %v461, 0.0
    %v498 = vmax.f32 %v463, 0.0
    %v499 = vmax.f32 %v466, 0.0
    %v500 = vmax.f32 %v468, 0.0
    %v501 = vmax.f32 %v471, 0.0
    %v502 = vmax.f32 %v473, 0.0
    %v503 = vmax.f32 %v476, 0.0
    %v504 = vpack.c.bf16 %v480, %v479
    %v505 = vpack.c.bf16 %v482, %v481
    %v506 = vpack.c.bf16 %v484, %v483
    %v507 = vpack.c.bf16 %v486, %v485
    %v508 = vpack.c.bf16 %v488, %v487
    %v509 = vpack.c.bf16 %v490, %v489
    %v510 = vpack.c.bf16 %v492, %v491
    %v511 = vpack.c.bf16 %v494, %v493
    %v512 = vpack.c.bf16 %v496, %v495
    %v513 = vpack.c.bf16 %v498, %v497
    %v514 = vpack.c.bf16 %v500, %v499
    %v515 = vpack.c.bf16 %v502, %v501
    %v516 = vpack.c.bf16 %v503, %v503
    %v517 = vld [vmem:[%s3] sm:$0xff]
    %v518 = vld [vmem:[%s3 + $0x8] sm:$0xff]
    %v519 = vld [vmem:[%s3 + $0x10] sm:$0xff]
    %v520 = vld [vmem:[%s3 + $0x18] sm:$0xff]
    %v525 = vunpack.c.l.b16 %v517
    %v526 = vunpack.c.h.b16 %v517
    %v527 = vunpack.c.l.b16 %v518
    %v528 = vunpack.c.h.b16 %v518
    %v529 = vunpack.c.l.b16 %v519
    %v530 = vunpack.c.h.b16 %v519
    %v531 = vunpack.c.l.b16 %v520
    %v532 = vunpack.c.h.b16 %v520
    %v533 = vpack.c.b16 %v527, %v525
    %v534 = vpack.c.b16 %v528, %v526
    %v535 = vpack.c.b16 %v531, %v529
    %v536 = vpack.c.b16 %v532, %v530
    %vm539 = vcmask 588800
    %v541 = vsel %vm539, %v534, 0
    %v544 = vsel %vm539, %v536, 0
    %vm546 = vcmask 1043456
    %v548 = vsel %vm546, %v516, 0
    %550 = vmatpush.bf16.msra.mxu0 %v511
    %551 = vmatpush.bf16.msra.mxu0 %v510
    %552 = vmatpush.bf16.msra.mxu0 %v509
    %553 = vmatpush.bf16.msra.mxu0 %v508
    %554 = vmatpush.bf16.msra.mxu0 %v507
    %555 = vmatpush.bf16.msra.mxu0 %v506
    %556 = vmatpush.bf16.msra.mxu0 %v505
    %557 = vmatpush.bf16.msra.mxu0 %v504
    %558 = vmatmul.bf16.gmra.mxu0 %v533
    %v559 = vpop.f32.mrf.mxu0
    %v560 = vadd.f32 0.0, %v559
    %v561 = vpop.f32.mrf.mxu0
    %v562 = vadd.f32 0.0, %v561
    %563 = vmatmul.bf16.gmra.mxu0 %v535
    %v564 = vpop.f32.mrf.mxu0
    %v565 = vadd.f32 0.0, %v564
    %v566 = vpop.f32.mrf.mxu0
    %v567 = vadd.f32 0.0, %v566
    %568 = vdwg.mxu0
    %569 = vmatpush.bf16.msra.mxu0 0
    %570 = vmatpush.bf16.msra.mxu0 0
    %571 = vmatpush.bf16.msra.mxu0 0
    %572 = vmatpush.bf16.msra.mxu0 %v548
    %573 = vmatpush.bf16.msra.mxu0 %v515
    %574 = vmatpush.bf16.msra.mxu0 %v514
    %575 = vmatpush.bf16.msra.mxu0 %v513
    %576 = vmatpush.bf16.msra.mxu0 %v512
    %577 = vmatmul.bf16.gmra.mxu0 %v541
    %v578 = vpop.f32.mrf.mxu0
    %v579 = vadd.f32 %v560, %v578
    %v580 = vpop.f32.mrf.mxu0
    %v581 = vadd.f32 %v562, %v580
    %582 = vmatmul.bf16.gmra.mxu0 %v544
    %v583 = vpop.f32.mrf.mxu0
    %v584 = vadd.f32 %v565, %v583
    %v585 = vpop.f32.mrf.mxu0
    %v586 = vadd.f32 %v567, %v585
    %587 = vdwg.mxu0
    %v588 = vpack.c.bf16 %v581, %v579
    %v589 = vpack.c.bf16 %v586, %v584
    %v590 = vld [vmem:[%s4] sm:$0xf]
    %v591 = vld [vmem:[%s4 + $0x4] sm:$0xf]
    %v592 = vld [vmem:[%s4 + $0x8] sm:$0xf]
    %v593 = vld [vmem:[%s4 + $0xc] sm:$0xf]
    %s594 = scalar_lea.vmem %s3, 32
    %v595 = vld [vmem:[%s594] sm:$0xff]
    %v596 = vld [vmem:[%s594 + $0x8] sm:$0xff]
    %v597 = vld [vmem:[%s594 + $0x10] sm:$0xff]
    %v598 = vld [vmem:[%s594 + $0x18] sm:$0xff]
    %v603 = vunpack.c.l.b16 %v595
    %v604 = vunpack.c.h.b16 %v595
    %v605 = vunpack.c.l.b16 %v596
    %v606 = vunpack.c.h.b16 %v596
    %v607 = vunpack.c.l.b16 %v597
    %v608 = vunpack.c.h.b16 %v597
    %v609 = vunpack.c.l.b16 %v598
    %v610 = vunpack.c.h.b16 %v598
    %v611 = vpack.c.b16 %v605, %v603
    %v612 = vpack.c.b16 %v606, %v604
    %v613 = vpack.c.b16 %v609, %v607
    %v614 = vpack.c.b16 %v610, %v608
    %v618 = vsel %vm539, %v612, 0
    %v621 = vsel %vm539, %v614, 0
    %623 = vmatpush.bf16.msra.mxu0 %v511
    %624 = vmatpush.bf16.msra.mxu0 %v510
    %625 = vmatpush.bf16.msra.mxu0 %v509
    %626 = vmatpush.bf16.msra.mxu0 %v508
    %627 = vmatpush.bf16.msra.mxu0 %v507
    %628 = vmatpush.bf16.msra.mxu0 %v506
    %629 = vmatpush.bf16.msra.mxu0 %v505
    %630 = vmatpush.bf16.msra.mxu0 %v504
    %631 = vmatmul.bf16.gmra.mxu0 %v611
    %v632 = vpop.f32.mrf.mxu0
    %v633 = vadd.f32 0.0, %v632
    %v634 = vpop.f32.mrf.mxu0
    %v635 = vadd.f32 0.0, %v634
    %636 = vmatmul.bf16.gmra.mxu0 %v613
    %v637 = vpop.f32.mrf.mxu0
    %v638 = vadd.f32 0.0, %v637
    %v639 = vpop.f32.mrf.mxu0
    %v640 = vadd.f32 0.0, %v639
    %641 = vdwg.mxu0
    %642 = vmatpush.bf16.msra.mxu0 0
    %643 = vmatpush.bf16.msra.mxu0 0
    %644 = vmatpush.bf16.msra.mxu0 0
    %645 = vmatpush.bf16.msra.mxu0 %v548
    %646 = vmatpush.bf16.msra.mxu0 %v515
    %647 = vmatpush.bf16.msra.mxu0 %v514
    %648 = vmatpush.bf16.msra.mxu0 %v513
    %649 = vmatpush.bf16.msra.mxu0 %v512
    %650 = vmatmul.bf16.gmra.mxu0 %v618
    %v651 = vpop.f32.mrf.mxu0
    %v652 = vadd.f32 %v633, %v651
    %v653 = vpop.f32.mrf.mxu0
    %v654 = vadd.f32 %v635, %v653
    %655 = vmatmul.bf16.gmra.mxu0 %v621
    %v656 = vpop.f32.mrf.mxu0
    %v657 = vadd.f32 %v638, %v656
    %v658 = vpop.f32.mrf.mxu0
    %v659 = vadd.f32 %v640, %v658
    %660 = vdwg.mxu0
    %v661 = vpack.c.bf16 %v654, %v652
    %v662 = vpack.c.bf16 %v659, %v657
    %s663 = scalar_lea.vmem %s4, 16
    %v664 = vld [vmem:[%s663] sm:$0xf]
    %v665 = vld [vmem:[%s663 + $0x4] sm:$0xf]
    %v666 = vld [vmem:[%s663 + $0x8] sm:$0xf]
    %v667 = vld [vmem:[%s663 + $0xc] sm:$0xf]
    %v672 = vunpack.c.l.b16 %v664
    %v673 = vunpack.c.l.b16 %v665
    %v674 = vunpack.c.l.b16 %v666
    %v675 = vunpack.c.l.b16 %v667
    %v676 = vpack.c.b16 %v673, %v672
    %v677 = vpack.c.b16 %v675, %v674
    %vm680 = vcmask 261120
    %v682 = vsel %vm680, %v661, 0
    %v685 = vsel %vm680, %v662, 0
    %687 = vmatpush.bf16.msra.mxu0 0
    %688 = vmatpush.bf16.msra.mxu0 0
    %689 = vmatpush.bf16.msra.mxu0 0
    %690 = vmatpush.bf16.msra.mxu0 0
    %691 = vmatpush.bf16.msra.mxu0 0
    %692 = vmatpush.bf16.msra.mxu0 0
    %693 = vmatpush.bf16.msra.mxu0 %v677
    %694 = vmatpush.bf16.msra.mxu0 %v676
    %695 = vmatmul.bf16.gmra.mxu0 %v682
    %v696 = vpop.f32.mrf.mxu0
    %v697 = vadd.f32 0.0, %v696
    %v698 = vpop.f32.mrf.mxu0
    %v699 = vadd.f32 0.0, %v698
    %700 = vmatmul.bf16.gmra.mxu0 %v685
    %v701 = vpop.f32.mrf.mxu0
    %v702 = vadd.f32 0.0, %v701
    %v703 = vpop.f32.mrf.mxu0
    %v704 = vadd.f32 0.0, %v703
    %705 = vdwg.mxu0
    %v710 = vunpack.c.l.b16 %v590
    %v711 = vunpack.c.l.b16 %v591
    %v712 = vunpack.c.l.b16 %v592
    %v713 = vunpack.c.l.b16 %v593
    %v714 = vpack.c.b16 %v711, %v710
    %v715 = vpack.c.b16 %v713, %v712
    %v719 = vsel %vm680, %v588, 0
    %v722 = vsel %vm680, %v589, 0
    %724 = vmatpush.bf16.msra.mxu0 0
    %725 = vmatpush.bf16.msra.mxu0 0
    %726 = vmatpush.bf16.msra.mxu0 0
    %727 = vmatpush.bf16.msra.mxu0 0
    %728 = vmatpush.bf16.msra.mxu0 0
    %729 = vmatpush.bf16.msra.mxu0 0
    %730 = vmatpush.bf16.msra.mxu0 %v715
    %731 = vmatpush.bf16.msra.mxu0 %v714
    %732 = vmatmul.bf16.gmra.mxu0 %v719
    %v733 = vpop.f32.mrf.mxu0
    %v734 = vadd.f32 %v697, %v733
    %v735 = vpop.f32.mrf.mxu0
    %v736 = vadd.f32 %v699, %v735
    %737 = vmatmul.bf16.gmra.mxu0 %v722
    %v738 = vpop.f32.mrf.mxu0
    %v739 = vadd.f32 %v702, %v738
    %v740 = vpop.f32.mrf.mxu0
    %v741 = vadd.f32 %v704, %v740
    %742 = vdwg.mxu0
    %s743 = scalar_lea.vmem %s3, 64
    %v744 = vld [vmem:[%s743] sm:$0xff]
    %v745 = vld [vmem:[%s743 + $0x8] sm:$0xff]
    %v746 = vld [vmem:[%s743 + $0x10] sm:$0xff]
    %v747 = vld [vmem:[%s743 + $0x18] sm:$0xff]
    %v752 = vunpack.c.l.b16 %v744
    %v753 = vunpack.c.h.b16 %v744
    %v754 = vunpack.c.l.b16 %v745
    %v755 = vunpack.c.h.b16 %v745
    %v756 = vunpack.c.l.b16 %v746
    %v757 = vunpack.c.h.b16 %v746
    %v758 = vunpack.c.l.b16 %v747
    %v759 = vunpack.c.h.b16 %v747
    %v760 = vpack.c.b16 %v754, %v752
    %v761 = vpack.c.b16 %v755, %v753
    %v762 = vpack.c.b16 %v758, %v756
    %v763 = vpack.c.b16 %v759, %v757
    %v767 = vsel %vm539, %v761, 0
    %v770 = vsel %vm539, %v763, 0
    %772 = vmatpush.bf16.msra.mxu0 %v511
    %773 = vmatpush.bf16.msra.mxu0 %v510
    %774 = vmatpush.bf16.msra.mxu0 %v509
    %775 = vmatpush.bf16.msra.mxu0 %v508
    %776 = vmatpush.bf16.msra.mxu0 %v507
    %777 = vmatpush.bf16.msra.mxu0 %v506
    %778 = vmatpush.bf16.msra.mxu0 %v505
    %779 = vmatpush.bf16.msra.mxu0 %v504
    %780 = vmatmul.bf16.gmra.mxu0 %v760
    %v781 = vpop.f32.mrf.mxu0
    %v782 = vadd.f32 0.0, %v781
    %v783 = vpop.f32.mrf.mxu0
    %v784 = vadd.f32 0.0, %v783
    %785 = vmatmul.bf16.gmra.mxu0 %v762
    %v786 = vpop.f32.mrf.mxu0
    %v787 = vadd.f32 0.0, %v786
    %v788 = vpop.f32.mrf.mxu0
    %v789 = vadd.f32 0.0, %v788
    %790 = vdwg.mxu0
    %791 = vmatpush.bf16.msra.mxu0 0
    %792 = vmatpush.bf16.msra.mxu0 0
    %793 = vmatpush.bf16.msra.mxu0 0
    %794 = vmatpush.bf16.msra.mxu0 %v548
    %795 = vmatpush.bf16.msra.mxu0 %v515
    %796 = vmatpush.bf16.msra.mxu0 %v514
    %797 = vmatpush.bf16.msra.mxu0 %v513
    %798 = vmatpush.bf16.msra.mxu0 %v512
    %799 = vmatmul.bf16.gmra.mxu0 %v767
    %v800 = vpop.f32.mrf.mxu0
    %v801 = vadd.f32 %v782, %v800
    %v802 = vpop.f32.mrf.mxu0
    %v803 = vadd.f32 %v784, %v802
    %804 = vmatmul.bf16.gmra.mxu0 %v770
    %v805 = vpop.f32.mrf.mxu0
    %v806 = vadd.f32 %v787, %v805
    %v807 = vpop.f32.mrf.mxu0
    %v808 = vadd.f32 %v789, %v807
    %809 = vdwg.mxu0
    %v810 = vpack.c.bf16 %v803, %v801
    %v811 = vpack.c.bf16 %v808, %v806
    %s812 = scalar_lea.vmem %s4, 32
    %v813 = vld [vmem:[%s812] sm:$0xf]
    %v814 = vld [vmem:[%s812 + $0x4] sm:$0xf]
    %v815 = vld [vmem:[%s812 + $0x8] sm:$0xf]
    %v816 = vld [vmem:[%s812 + $0xc] sm:$0xf]
    %v821 = vunpack.c.l.b16 %v813
    %v822 = vunpack.c.l.b16 %v814
    %v823 = vunpack.c.l.b16 %v815
    %v824 = vunpack.c.l.b16 %v816
    %v825 = vpack.c.b16 %v822, %v821
    %v826 = vpack.c.b16 %v824, %v823
    %v830 = vsel %vm680, %v810, 0
    %v833 = vsel %vm680, %v811, 0
    %835 = vmatpush.bf16.msra.mxu0 0
    %836 = vmatpush.bf16.msra.mxu0 0
    %837 = vmatpush.bf16.msra.mxu0 0
    %838 = vmatpush.bf16.msra.mxu0 0
    %839 = vmatpush.bf16.msra.mxu0 0
    %840 = vmatpush.bf16.msra.mxu0 0
    %841 = vmatpush.bf16.msra.mxu0 %v826
    %842 = vmatpush.bf16.msra.mxu0 %v825
    %843 = vmatmul.bf16.gmra.mxu0 %v830
    %v844 = vpop.f32.mrf.mxu0
    %v845 = vadd.f32 0.0, %v844
    %v846 = vpop.f32.mrf.mxu0
    %v847 = vadd.f32 0.0, %v846
    %848 = vmatmul.bf16.gmra.mxu0 %v833
    %v849 = vpop.f32.mrf.mxu0
    %v850 = vadd.f32 0.0, %v849
    %v851 = vpop.f32.mrf.mxu0
    %v852 = vadd.f32 0.0, %v851
    %853 = vdwg.mxu0
    %v854 = vadd.f32 %v734, %v845
    %v855 = vadd.f32 %v736, %v847
    %v856 = vadd.f32 %v739, %v850
    %v857 = vadd.f32 %v741, %v852
    %s858 = scalar_lea.vmem %s3, 96
    %v859 = vld [vmem:[%s858] sm:$0xff]
    %v860 = vld [vmem:[%s858 + $0x8] sm:$0xff]
    %v861 = vld [vmem:[%s858 + $0x10] sm:$0xff]
    %v862 = vld [vmem:[%s858 + $0x18] sm:$0xff]
    %v867 = vunpack.c.l.b16 %v859
    %v868 = vunpack.c.h.b16 %v859
    %v869 = vunpack.c.l.b16 %v860
    %v870 = vunpack.c.h.b16 %v860
    %v871 = vunpack.c.l.b16 %v861
    %v872 = vunpack.c.h.b16 %v861
    %v873 = vunpack.c.l.b16 %v862
    %v874 = vunpack.c.h.b16 %v862
    %v875 = vpack.c.b16 %v869, %v867
    %v876 = vpack.c.b16 %v870, %v868
    %v877 = vpack.c.b16 %v873, %v871
    %v878 = vpack.c.b16 %v874, %v872
    %v882 = vsel %vm539, %v876, 0
    %v885 = vsel %vm539, %v878, 0
    %887 = vmatpush.bf16.msra.mxu0 %v511
    %888 = vmatpush.bf16.msra.mxu0 %v510
    %889 = vmatpush.bf16.msra.mxu0 %v509
    %890 = vmatpush.bf16.msra.mxu0 %v508
    %891 = vmatpush.bf16.msra.mxu0 %v507
    %892 = vmatpush.bf16.msra.mxu0 %v506
    %893 = vmatpush.bf16.msra.mxu0 %v505
    %894 = vmatpush.bf16.msra.mxu0 %v504
    %895 = vmatmul.bf16.gmra.mxu0 %v875
    %v896 = vpop.f32.mrf.mxu0
    %v897 = vadd.f32 0.0, %v896
    %v898 = vpop.f32.mrf.mxu0
    %v899 = vadd.f32 0.0, %v898
    %900 = vmatmul.bf16.gmra.mxu0 %v877
    %v901 = vpop.f32.mrf.mxu0
    %v902 = vadd.f32 0.0, %v901
    %v903 = vpop.f32.mrf.mxu0
    %v904 = vadd.f32 0.0, %v903
    %905 = vdwg.mxu0
    %906 = vmatpush.bf16.msra.mxu0 0
    %907 = vmatpush.bf16.msra.mxu0 0
    %908 = vmatpush.bf16.msra.mxu0 0
    %909 = vmatpush.bf16.msra.mxu0 %v548
    %910 = vmatpush.bf16.msra.mxu0 %v515
    %911 = vmatpush.bf16.msra.mxu0 %v514
    %912 = vmatpush.bf16.msra.mxu0 %v513
    %913 = vmatpush.bf16.msra.mxu0 %v512
    %914 = vmatmul.bf16.gmra.mxu0 %v882
    %v915 = vpop.f32.mrf.mxu0
    %v916 = vadd.f32 %v897, %v915
    %v917 = vpop.f32.mrf.mxu0
    %v918 = vadd.f32 %v899, %v917
    %919 = vmatmul.bf16.gmra.mxu0 %v885
    %v920 = vpop.f32.mrf.mxu0
    %v921 = vadd.f32 %v902, %v920
    %v922 = vpop.f32.mrf.mxu0
    %v923 = vadd.f32 %v904, %v922
    %924 = vdwg.mxu0
    %v925 = vpack.c.bf16 %v918, %v916
    %v926 = vpack.c.bf16 %v923, %v921
    %s927 = scalar_lea.vmem %s4, 48
    %v928 = vld [vmem:[%s927] sm:$0xf]
    %v929 = vld [vmem:[%s927 + $0x4] sm:$0xf]
    %v930 = vld [vmem:[%s927 + $0x8] sm:$0xf]
    %v931 = vld [vmem:[%s927 + $0xc] sm:$0xf]
    %v936 = vunpack.c.l.b16 %v928
    %v937 = vunpack.c.l.b16 %v929
    %v938 = vunpack.c.l.b16 %v930
    %v939 = vunpack.c.l.b16 %v931
    %v940 = vpack.c.b16 %v937, %v936
    %v941 = vpack.c.b16 %v939, %v938
    %v945 = vsel %vm680, %v925, 0
    %v948 = vsel %vm680, %v926, 0
    %950 = vmatpush.bf16.msra.mxu0 0
    %951 = vmatpush.bf16.msra.mxu0 0
    %952 = vmatpush.bf16.msra.mxu0 0
    %953 = vmatpush.bf16.msra.mxu0 0
    %954 = vmatpush.bf16.msra.mxu0 0
    %955 = vmatpush.bf16.msra.mxu0 0
    %956 = vmatpush.bf16.msra.mxu0 %v941
    %957 = vmatpush.bf16.msra.mxu0 %v940
    %958 = vmatmul.bf16.gmra.mxu0 %v945
    %v959 = vpop.f32.mrf.mxu0
    %v960 = vadd.f32 0.0, %v959
    %v961 = vpop.f32.mrf.mxu0
    %v962 = vadd.f32 0.0, %v961
    %963 = vmatmul.bf16.gmra.mxu0 %v948
    %v964 = vpop.f32.mrf.mxu0
    %v965 = vadd.f32 0.0, %v964
    %v966 = vpop.f32.mrf.mxu0
    %v967 = vadd.f32 0.0, %v966
    %968 = vdwg.mxu0
    %v969 = vadd.f32 %v854, %v960
    %v970 = vadd.f32 %v855, %v962
    %v971 = vadd.f32 %v856, %v965
    %v972 = vadd.f32 %v857, %v967
    %s973 = scalar_lea.vmem %s3, 128
    %v974 = vld [vmem:[%s973] sm:$0xff]
    %v975 = vld [vmem:[%s973 + $0x8] sm:$0xff]
    %v976 = vld [vmem:[%s973 + $0x10] sm:$0xff]
    %v977 = vld [vmem:[%s973 + $0x18] sm:$0xff]
    %v982 = vunpack.c.l.b16 %v974
    %v983 = vunpack.c.h.b16 %v974
    %v984 = vunpack.c.l.b16 %v975
    %v985 = vunpack.c.h.b16 %v975
    %v986 = vunpack.c.l.b16 %v976
    %v987 = vunpack.c.h.b16 %v976
    %v988 = vunpack.c.l.b16 %v977
    %v989 = vunpack.c.h.b16 %v977
    %v990 = vpack.c.b16 %v984, %v982
    %v991 = vpack.c.b16 %v985, %v983
    %v992 = vpack.c.b16 %v988, %v986
    %v993 = vpack.c.b16 %v989, %v987
    %v997 = vsel %vm539, %v991, 0
    %v1000 = vsel %vm539, %v993, 0
    %1002 = vmatpush.bf16.msra.mxu0 %v511
    %1003 = vmatpush.bf16.msra.mxu0 %v510
    %1004 = vmatpush.bf16.msra.mxu0 %v509
    %1005 = vmatpush.bf16.msra.mxu0 %v508
    %1006 = vmatpush.bf16.msra.mxu0 %v507
    %1007 = vmatpush.bf16.msra.mxu0 %v506
    %1008 = vmatpush.bf16.msra.mxu0 %v505
    %1009 = vmatpush.bf16.msra.mxu0 %v504
    %1010 = vmatmul.bf16.gmra.mxu0 %v990
    %v1011 = vpop.f32.mrf.mxu0
    %v1012 = vadd.f32 0.0, %v1011
    %v1013 = vpop.f32.mrf.mxu0
    %v1014 = vadd.f32 0.0, %v1013
    %1015 = vmatmul.bf16.gmra.mxu0 %v992
    %v1016 = vpop.f32.mrf.mxu0
    %v1017 = vadd.f32 0.0, %v1016
    %v1018 = vpop.f32.mrf.mxu0
    %v1019 = vadd.f32 0.0, %v1018
    %1020 = vdwg.mxu0
    %1021 = vmatpush.bf16.msra.mxu0 0
    %1022 = vmatpush.bf16.msra.mxu0 0
    %1023 = vmatpush.bf16.msra.mxu0 0
    %1024 = vmatpush.bf16.msra.mxu0 %v548
    %1025 = vmatpush.bf16.msra.mxu0 %v515
    %1026 = vmatpush.bf16.msra.mxu0 %v514
    %1027 = vmatpush.bf16.msra.mxu0 %v513
    %1028 = vmatpush.bf16.msra.mxu0 %v512
    %1029 = vmatmul.bf16.gmra.mxu0 %v997
    %v1030 = vpop.f32.mrf.mxu0
    %v1031 = vadd.f32 %v1012, %v1030
    %v1032 = vpop.f32.mrf.mxu0
    %v1033 = vadd.f32 %v1014, %v1032
    %1034 = vmatmul.bf16.gmra.mxu0 %v1000
    %v1035 = vpop.f32.mrf.mxu0
    %v1036 = vadd.f32 %v1017, %v1035
    %v1037 = vpop.f32.mrf.mxu0
    %v1038 = vadd.f32 %v1019, %v1037
    %1039 = vdwg.mxu0
    %v1040 = vpack.c.bf16 %v1033, %v1031
    %v1041 = vpack.c.bf16 %v1038, %v1036
    %s1042 = scalar_lea.vmem %s4, 64
    %v1043 = vld [vmem:[%s1042] sm:$0xf]
    %v1044 = vld [vmem:[%s1042 + $0x4] sm:$0xf]
    %v1045 = vld [vmem:[%s1042 + $0x8] sm:$0xf]
    %v1046 = vld [vmem:[%s1042 + $0xc] sm:$0xf]
    %v1051 = vunpack.c.l.b16 %v1043
    %v1052 = vunpack.c.l.b16 %v1044
    %v1053 = vunpack.c.l.b16 %v1045
    %v1054 = vunpack.c.l.b16 %v1046
    %v1055 = vpack.c.b16 %v1052, %v1051
    %v1056 = vpack.c.b16 %v1054, %v1053
    %v1060 = vsel %vm680, %v1040, 0
    %v1063 = vsel %vm680, %v1041, 0
    %1065 = vmatpush.bf16.msra.mxu0 0
    %1066 = vmatpush.bf16.msra.mxu0 0
    %1067 = vmatpush.bf16.msra.mxu0 0
    %1068 = vmatpush.bf16.msra.mxu0 0
    %1069 = vmatpush.bf16.msra.mxu0 0
    %1070 = vmatpush.bf16.msra.mxu0 0
    %1071 = vmatpush.bf16.msra.mxu0 %v1056
    %1072 = vmatpush.bf16.msra.mxu0 %v1055
    %1073 = vmatmul.bf16.gmra.mxu0 %v1060
    %v1074 = vpop.f32.mrf.mxu0
    %v1075 = vadd.f32 0.0, %v1074
    %v1076 = vpop.f32.mrf.mxu0
    %v1077 = vadd.f32 0.0, %v1076
    %1078 = vmatmul.bf16.gmra.mxu0 %v1063
    %v1079 = vpop.f32.mrf.mxu0
    %v1080 = vadd.f32 0.0, %v1079
    %v1081 = vpop.f32.mrf.mxu0
    %v1082 = vadd.f32 0.0, %v1081
    %1083 = vdwg.mxu0
    %v1084 = vadd.f32 %v969, %v1075
    %v1085 = vadd.f32 %v970, %v1077
    %v1086 = vadd.f32 %v971, %v1080
    %v1087 = vadd.f32 %v972, %v1082
    %s1088 = scalar_lea.vmem %s3, 160
    %v1089 = vld [vmem:[%s1088] sm:$0xff]
    %v1090 = vld [vmem:[%s1088 + $0x8] sm:$0xff]
    %v1091 = vld [vmem:[%s1088 + $0x10] sm:$0xff]
    %v1092 = vld [vmem:[%s1088 + $0x18] sm:$0xff]
    %v1097 = vunpack.c.l.b16 %v1089
    %v1098 = vunpack.c.h.b16 %v1089
    %v1099 = vunpack.c.l.b16 %v1090
    %v1100 = vunpack.c.h.b16 %v1090
    %v1101 = vunpack.c.l.b16 %v1091
    %v1102 = vunpack.c.h.b16 %v1091
    %v1103 = vunpack.c.l.b16 %v1092
    %v1104 = vunpack.c.h.b16 %v1092
    %v1105 = vpack.c.b16 %v1099, %v1097
    %v1106 = vpack.c.b16 %v1100, %v1098
    %v1107 = vpack.c.b16 %v1103, %v1101
    %v1108 = vpack.c.b16 %v1104, %v1102
    %v1112 = vsel %vm539, %v1106, 0
    %v1115 = vsel %vm539, %v1108, 0
    %1117 = vmatpush.bf16.msra.mxu0 %v511
    %1118 = vmatpush.bf16.msra.mxu0 %v510
    %1119 = vmatpush.bf16.msra.mxu0 %v509
    %1120 = vmatpush.bf16.msra.mxu0 %v508
    %1121 = vmatpush.bf16.msra.mxu0 %v507
    %1122 = vmatpush.bf16.msra.mxu0 %v506
    %1123 = vmatpush.bf16.msra.mxu0 %v505
    %1124 = vmatpush.bf16.msra.mxu0 %v504
    %1125 = vmatmul.bf16.gmra.mxu0 %v1105
    %v1126 = vpop.f32.mrf.mxu0
    %v1127 = vadd.f32 0.0, %v1126
    %v1128 = vpop.f32.mrf.mxu0
    %v1129 = vadd.f32 0.0, %v1128
    %1130 = vmatmul.bf16.gmra.mxu0 %v1107
    %v1131 = vpop.f32.mrf.mxu0
    %v1132 = vadd.f32 0.0, %v1131
    %v1133 = vpop.f32.mrf.mxu0
    %v1134 = vadd.f32 0.0, %v1133
    %1135 = vdwg.mxu0
    %1136 = vmatpush.bf16.msra.mxu0 0
    %1137 = vmatpush.bf16.msra.mxu0 0
    %1138 = vmatpush.bf16.msra.mxu0 0
    %1139 = vmatpush.bf16.msra.mxu0 %v548
    %1140 = vmatpush.bf16.msra.mxu0 %v515
    %1141 = vmatpush.bf16.msra.mxu0 %v514
    %1142 = vmatpush.bf16.msra.mxu0 %v513
    %1143 = vmatpush.bf16.msra.mxu0 %v512
    %1144 = vmatmul.bf16.gmra.mxu0 %v1112
    %v1145 = vpop.f32.mrf.mxu0
    %v1146 = vadd.f32 %v1127, %v1145
    %v1147 = vpop.f32.mrf.mxu0
    %v1148 = vadd.f32 %v1129, %v1147
    %1149 = vmatmul.bf16.gmra.mxu0 %v1115
    %v1150 = vpop.f32.mrf.mxu0
    %v1151 = vadd.f32 %v1132, %v1150
    %v1152 = vpop.f32.mrf.mxu0
    %v1153 = vadd.f32 %v1134, %v1152
    %1154 = vdwg.mxu0
    %v1155 = vpack.c.bf16 %v1148, %v1146
    %v1156 = vpack.c.bf16 %v1153, %v1151
    %s1157 = scalar_lea.vmem %s4, 80
    %v1158 = vld [vmem:[%s1157] sm:$0xf]
    %v1159 = vld [vmem:[%s1157 + $0x4] sm:$0xf]
    %v1160 = vld [vmem:[%s1157 + $0x8] sm:$0xf]
    %v1161 = vld [vmem:[%s1157 + $0xc] sm:$0xf]
    %v1166 = vunpack.c.l.b16 %v1158
    %v1167 = vunpack.c.l.b16 %v1159
    %v1168 = vunpack.c.l.b16 %v1160
    %v1169 = vunpack.c.l.b16 %v1161
    %v1170 = vpack.c.b16 %v1167, %v1166
    %v1171 = vpack.c.b16 %v1169, %v1168
    %v1175 = vsel %vm680, %v1155, 0
    %v1178 = vsel %vm680, %v1156, 0
    %1180 = vmatpush.bf16.msra.mxu0 0
    %1181 = vmatpush.bf16.msra.mxu0 0
    %1182 = vmatpush.bf16.msra.mxu0 0
    %1183 = vmatpush.bf16.msra.mxu0 0
    %1184 = vmatpush.bf16.msra.mxu0 0
    %1185 = vmatpush.bf16.msra.mxu0 0
    %1186 = vmatpush.bf16.msra.mxu0 %v1171
    %1187 = vmatpush.bf16.msra.mxu0 %v1170
    %1188 = vmatmul.bf16.gmra.mxu0 %v1175
    %v1189 = vpop.f32.mrf.mxu0
    %v1190 = vadd.f32 0.0, %v1189
    %v1191 = vpop.f32.mrf.mxu0
    %v1192 = vadd.f32 0.0, %v1191
    %1193 = vmatmul.bf16.gmra.mxu0 %v1178
    %v1194 = vpop.f32.mrf.mxu0
    %v1195 = vadd.f32 0.0, %v1194
    %v1196 = vpop.f32.mrf.mxu0
    %v1197 = vadd.f32 0.0, %v1196
    %1198 = vdwg.mxu0
    %v1199 = vadd.f32 %v1084, %v1190
    %v1200 = vadd.f32 %v1085, %v1192
    %v1201 = vadd.f32 %v1086, %v1195
    %v1202 = vadd.f32 %v1087, %v1197
    %s1203 = scalar_lea.vmem %s3, 192
    %v1204 = vld [vmem:[%s1203] sm:$0xff]
    %v1205 = vld [vmem:[%s1203 + $0x8] sm:$0xff]
    %v1206 = vld [vmem:[%s1203 + $0x10] sm:$0xff]
    %v1207 = vld [vmem:[%s1203 + $0x18] sm:$0xff]
    %v1212 = vunpack.c.l.b16 %v1204
    %v1213 = vunpack.c.h.b16 %v1204
    %v1214 = vunpack.c.l.b16 %v1205
    %v1215 = vunpack.c.h.b16 %v1205
    %v1216 = vunpack.c.l.b16 %v1206
    %v1217 = vunpack.c.h.b16 %v1206
    %v1218 = vunpack.c.l.b16 %v1207
    %v1219 = vunpack.c.h.b16 %v1207
    %v1220 = vpack.c.b16 %v1214, %v1212
    %v1221 = vpack.c.b16 %v1215, %v1213
    %v1222 = vpack.c.b16 %v1218, %v1216
    %v1223 = vpack.c.b16 %v1219, %v1217
    %v1227 = vsel %vm539, %v1221, 0
    %v1230 = vsel %vm539, %v1223, 0
    %1232 = vmatpush.bf16.msra.mxu0 %v511
    %1233 = vmatpush.bf16.msra.mxu0 %v510
    %1234 = vmatpush.bf16.msra.mxu0 %v509
    %1235 = vmatpush.bf16.msra.mxu0 %v508
    %1236 = vmatpush.bf16.msra.mxu0 %v507
    %1237 = vmatpush.bf16.msra.mxu0 %v506
    %1238 = vmatpush.bf16.msra.mxu0 %v505
    %1239 = vmatpush.bf16.msra.mxu0 %v504
    %1240 = vmatmul.bf16.gmra.mxu0 %v1220
    %v1241 = vpop.f32.mrf.mxu0
    %v1242 = vadd.f32 0.0, %v1241
    %v1243 = vpop.f32.mrf.mxu0
    %v1244 = vadd.f32 0.0, %v1243
    %1245 = vmatmul.bf16.gmra.mxu0 %v1222
    %v1246 = vpop.f32.mrf.mxu0
    %v1247 = vadd.f32 0.0, %v1246
    %v1248 = vpop.f32.mrf.mxu0
    %v1249 = vadd.f32 0.0, %v1248
    %1250 = vdwg.mxu0
    %1251 = vmatpush.bf16.msra.mxu0 0
    %1252 = vmatpush.bf16.msra.mxu0 0
    %1253 = vmatpush.bf16.msra.mxu0 0
    %1254 = vmatpush.bf16.msra.mxu0 %v548
    %1255 = vmatpush.bf16.msra.mxu0 %v515
    %1256 = vmatpush.bf16.msra.mxu0 %v514
    %1257 = vmatpush.bf16.msra.mxu0 %v513
    %1258 = vmatpush.bf16.msra.mxu0 %v512
    %1259 = vmatmul.bf16.gmra.mxu0 %v1227
    %v1260 = vpop.f32.mrf.mxu0
    %v1261 = vadd.f32 %v1242, %v1260
    %v1262 = vpop.f32.mrf.mxu0
    %v1263 = vadd.f32 %v1244, %v1262
    %1264 = vmatmul.bf16.gmra.mxu0 %v1230
    %v1265 = vpop.f32.mrf.mxu0
    %v1266 = vadd.f32 %v1247, %v1265
    %v1267 = vpop.f32.mrf.mxu0
    %v1268 = vadd.f32 %v1249, %v1267
    %1269 = vdwg.mxu0
    %v1270 = vpack.c.bf16 %v1263, %v1261
    %v1271 = vpack.c.bf16 %v1268, %v1266
    %s1272 = scalar_lea.vmem %s4, 96
    %v1273 = vld [vmem:[%s1272] sm:$0xf]
    %v1274 = vld [vmem:[%s1272 + $0x4] sm:$0xf]
    %v1275 = vld [vmem:[%s1272 + $0x8] sm:$0xf]
    %v1276 = vld [vmem:[%s1272 + $0xc] sm:$0xf]
    %v1281 = vunpack.c.l.b16 %v1273
    %v1282 = vunpack.c.l.b16 %v1274
    %v1283 = vunpack.c.l.b16 %v1275
    %v1284 = vunpack.c.l.b16 %v1276
    %v1285 = vpack.c.b16 %v1282, %v1281
    %v1286 = vpack.c.b16 %v1284, %v1283
    %v1290 = vsel %vm680, %v1270, 0
    %v1293 = vsel %vm680, %v1271, 0
    %1295 = vmatpush.bf16.msra.mxu0 0
    %1296 = vmatpush.bf16.msra.mxu0 0
    %1297 = vmatpush.bf16.msra.mxu0 0
    %1298 = vmatpush.bf16.msra.mxu0 0
    %1299 = vmatpush.bf16.msra.mxu0 0
    %1300 = vmatpush.bf16.msra.mxu0 0
    %1301 = vmatpush.bf16.msra.mxu0 %v1286
    %1302 = vmatpush.bf16.msra.mxu0 %v1285
    %1303 = vmatmul.bf16.gmra.mxu0 %v1290
    %v1304 = vpop.f32.mrf.mxu0
    %v1305 = vadd.f32 0.0, %v1304
    %v1306 = vpop.f32.mrf.mxu0
    %v1307 = vadd.f32 0.0, %v1306
    %1308 = vmatmul.bf16.gmra.mxu0 %v1293
    %v1309 = vpop.f32.mrf.mxu0
    %v1310 = vadd.f32 0.0, %v1309
    %v1311 = vpop.f32.mrf.mxu0
    %v1312 = vadd.f32 0.0, %v1311
    %1313 = vdwg.mxu0
    %v1314 = vadd.f32 %v1199, %v1305
    %v1315 = vadd.f32 %v1200, %v1307
    %v1316 = vadd.f32 %v1201, %v1310
    %v1317 = vadd.f32 %v1202, %v1312
    %s1318 = scalar_lea.vmem %s3, 224
    %v1319 = vld [vmem:[%s1318] sm:$0xff]
    %v1320 = vld [vmem:[%s1318 + $0x8] sm:$0xff]
    %v1321 = vld [vmem:[%s1318 + $0x10] sm:$0xff]
    %v1322 = vld [vmem:[%s1318 + $0x18] sm:$0xff]
    %v1327 = vunpack.c.l.b16 %v1319
    %v1328 = vunpack.c.h.b16 %v1319
    %v1329 = vunpack.c.l.b16 %v1320
    %v1330 = vunpack.c.h.b16 %v1320
    %v1331 = vunpack.c.l.b16 %v1321
    %v1332 = vunpack.c.h.b16 %v1321
    %v1333 = vunpack.c.l.b16 %v1322
    %v1334 = vunpack.c.h.b16 %v1322
    %v1335 = vpack.c.b16 %v1329, %v1327
    %v1336 = vpack.c.b16 %v1330, %v1328
    %v1337 = vpack.c.b16 %v1333, %v1331
    %v1338 = vpack.c.b16 %v1334, %v1332
    %v1342 = vsel %vm539, %v1336, 0
    %v1345 = vsel %vm539, %v1338, 0
    %1347 = vmatpush.bf16.msra.mxu0 %v511
    %1348 = vmatpush.bf16.msra.mxu0 %v510
    %1349 = vmatpush.bf16.msra.mxu0 %v509
    %1350 = vmatpush.bf16.msra.mxu0 %v508
    %1351 = vmatpush.bf16.msra.mxu0 %v507
    %1352 = vmatpush.bf16.msra.mxu0 %v506
    %1353 = vmatpush.bf16.msra.mxu0 %v505
    %1354 = vmatpush.bf16.msra.mxu0 %v504
    %1355 = vmatmul.bf16.gmra.mxu0 %v1335
    %v1356 = vpop.f32.mrf.mxu0
    %v1357 = vadd.f32 0.0, %v1356
    %v1358 = vpop.f32.mrf.mxu0
    %v1359 = vadd.f32 0.0, %v1358
    %1360 = vmatmul.bf16.gmra.mxu0 %v1337
    %v1361 = vpop.f32.mrf.mxu0
    %v1362 = vadd.f32 0.0, %v1361
    %v1363 = vpop.f32.mrf.mxu0
    %v1364 = vadd.f32 0.0, %v1363
    %1365 = vdwg.mxu0
    %1366 = vmatpush.bf16.msra.mxu0 0
    %1367 = vmatpush.bf16.msra.mxu0 0
    %1368 = vmatpush.bf16.msra.mxu0 0
    %1369 = vmatpush.bf16.msra.mxu0 %v548
    %1370 = vmatpush.bf16.msra.mxu0 %v515
    %1371 = vmatpush.bf16.msra.mxu0 %v514
    %1372 = vmatpush.bf16.msra.mxu0 %v513
    %1373 = vmatpush.bf16.msra.mxu0 %v512
    %1374 = vmatmul.bf16.gmra.mxu0 %v1342
    %v1375 = vpop.f32.mrf.mxu0
    %v1376 = vadd.f32 %v1357, %v1375
    %v1377 = vpop.f32.mrf.mxu0
    %v1378 = vadd.f32 %v1359, %v1377
    %1379 = vmatmul.bf16.gmra.mxu0 %v1345
    %v1380 = vpop.f32.mrf.mxu0
    %v1381 = vadd.f32 %v1362, %v1380
    %v1382 = vpop.f32.mrf.mxu0
    %v1383 = vadd.f32 %v1364, %v1382
    %1384 = vdwg.mxu0
    %v1385 = vpack.c.bf16 %v1378, %v1376
    %v1386 = vpack.c.bf16 %v1383, %v1381
    %s1387 = scalar_lea.vmem %s4, 112
    %v1388 = vld [vmem:[%s1387] sm:$0xf]
    %v1389 = vld [vmem:[%s1387 + $0x4] sm:$0xf]
    %v1390 = vld [vmem:[%s1387 + $0x8] sm:$0xf]
    %v1391 = vld [vmem:[%s1387 + $0xc] sm:$0xf]
    %v1396 = vunpack.c.l.b16 %v1388
    %v1397 = vunpack.c.l.b16 %v1389
    %v1398 = vunpack.c.l.b16 %v1390
    %v1399 = vunpack.c.l.b16 %v1391
    %v1400 = vpack.c.b16 %v1397, %v1396
    %v1401 = vpack.c.b16 %v1399, %v1398
    %v1405 = vsel %vm680, %v1385, 0
    %v1408 = vsel %vm680, %v1386, 0
    %1410 = vmatpush.bf16.msra.mxu0 0
    %1411 = vmatpush.bf16.msra.mxu0 0
    %1412 = vmatpush.bf16.msra.mxu0 0
    %1413 = vmatpush.bf16.msra.mxu0 0
    %1414 = vmatpush.bf16.msra.mxu0 0
    %1415 = vmatpush.bf16.msra.mxu0 0
    %1416 = vmatpush.bf16.msra.mxu0 %v1401
    %1417 = vmatpush.bf16.msra.mxu0 %v1400
    %1418 = vmatmul.bf16.gmra.mxu0 %v1405
    %v1419 = vpop.f32.mrf.mxu0
    %v1420 = vadd.f32 0.0, %v1419
    %v1421 = vpop.f32.mrf.mxu0
    %v1422 = vadd.f32 0.0, %v1421
    %1423 = vmatmul.bf16.gmra.mxu0 %v1408
    %v1424 = vpop.f32.mrf.mxu0
    %v1425 = vadd.f32 0.0, %v1424
    %v1426 = vpop.f32.mrf.mxu0
    %v1427 = vadd.f32 0.0, %v1426
    %1428 = vdwg.mxu0
    %v1429 = vadd.f32 %v1314, %v1420
    %v1430 = vadd.f32 %v1315, %v1422
    %v1431 = vadd.f32 %v1316, %v1425
    %v1432 = vadd.f32 %v1317, %v1427
    %s1433 = scalar_lea.vmem %s3, 256
    %v1434 = vld [vmem:[%s1433] sm:$0xff]
    %v1435 = vld [vmem:[%s1433 + $0x8] sm:$0xff]
    %v1436 = vld [vmem:[%s1433 + $0x10] sm:$0xff]
    %v1437 = vld [vmem:[%s1433 + $0x18] sm:$0xff]
    %v1442 = vunpack.c.l.b16 %v1434
    %v1443 = vunpack.c.h.b16 %v1434
    %v1444 = vunpack.c.l.b16 %v1435
    %v1445 = vunpack.c.h.b16 %v1435
    %v1446 = vunpack.c.l.b16 %v1436
    %v1447 = vunpack.c.h.b16 %v1436
    %v1448 = vunpack.c.l.b16 %v1437
    %v1449 = vunpack.c.h.b16 %v1437
    %v1450 = vpack.c.b16 %v1444, %v1442
    %v1451 = vpack.c.b16 %v1445, %v1443
    %v1452 = vpack.c.b16 %v1448, %v1446
    %v1453 = vpack.c.b16 %v1449, %v1447
    %v1457 = vsel %vm539, %v1451, 0
    %v1460 = vsel %vm539, %v1453, 0
    %1462 = vmatpush.bf16.msra.mxu0 %v511
    %1463 = vmatpush.bf16.msra.mxu0 %v510
    %1464 = vmatpush.bf16.msra.mxu0 %v509
    %1465 = vmatpush.bf16.msra.mxu0 %v508
    %1466 = vmatpush.bf16.msra.mxu0 %v507
    %1467 = vmatpush.bf16.msra.mxu0 %v506
    %1468 = vmatpush.bf16.msra.mxu0 %v505
    %1469 = vmatpush.bf16.msra.mxu0 %v504
    %1470 = vmatmul.bf16.gmra.mxu0 %v1450
    %v1471 = vpop.f32.mrf.mxu0
    %v1472 = vadd.f32 0.0, %v1471
    %v1473 = vpop.f32.mrf.mxu0
    %v1474 = vadd.f32 0.0, %v1473
    %1475 = vmatmul.bf16.gmra.mxu0 %v1452
    %v1476 = vpop.f32.mrf.mxu0
    %v1477 = vadd.f32 0.0, %v1476
    %v1478 = vpop.f32.mrf.mxu0
    %v1479 = vadd.f32 0.0, %v1478
    %1480 = vdwg.mxu0
    %1481 = vmatpush.bf16.msra.mxu0 0
    %1482 = vmatpush.bf16.msra.mxu0 0
    %1483 = vmatpush.bf16.msra.mxu0 0
    %1484 = vmatpush.bf16.msra.mxu0 %v548
    %1485 = vmatpush.bf16.msra.mxu0 %v515
    %1486 = vmatpush.bf16.msra.mxu0 %v514
    %1487 = vmatpush.bf16.msra.mxu0 %v513
    %1488 = vmatpush.bf16.msra.mxu0 %v512
    %1489 = vmatmul.bf16.gmra.mxu0 %v1457
    %v1490 = vpop.f32.mrf.mxu0
    %v1491 = vadd.f32 %v1472, %v1490
    %v1492 = vpop.f32.mrf.mxu0
    %v1493 = vadd.f32 %v1474, %v1492
    %1494 = vmatmul.bf16.gmra.mxu0 %v1460
    %v1495 = vpop.f32.mrf.mxu0
    %v1496 = vadd.f32 %v1477, %v1495
    %v1497 = vpop.f32.mrf.mxu0
    %v1498 = vadd.f32 %v1479, %v1497
    %1499 = vdwg.mxu0
    %v1500 = vpack.c.bf16 %v1493, %v1491
    %v1501 = vpack.c.bf16 %v1498, %v1496
    %s1502 = scalar_lea.vmem %s4, 128
    %v1503 = vld [vmem:[%s1502] sm:$0xf]
    %v1504 = vld [vmem:[%s1502 + $0x4] sm:$0xf]
    %v1505 = vld [vmem:[%s1502 + $0x8] sm:$0xf]
    %v1506 = vld [vmem:[%s1502 + $0xc] sm:$0xf]
    %v1511 = vunpack.c.l.b16 %v1503
    %v1512 = vunpack.c.l.b16 %v1504
    %v1513 = vunpack.c.l.b16 %v1505
    %v1514 = vunpack.c.l.b16 %v1506
    %v1515 = vpack.c.b16 %v1512, %v1511
    %v1516 = vpack.c.b16 %v1514, %v1513
    %v1520 = vsel %vm680, %v1500, 0
    %v1523 = vsel %vm680, %v1501, 0
    %1525 = vmatpush.bf16.msra.mxu0 0
    %1526 = vmatpush.bf16.msra.mxu0 0
    %1527 = vmatpush.bf16.msra.mxu0 0
    %1528 = vmatpush.bf16.msra.mxu0 0
    %1529 = vmatpush.bf16.msra.mxu0 0
    %1530 = vmatpush.bf16.msra.mxu0 0
    %1531 = vmatpush.bf16.msra.mxu0 %v1516
    %1532 = vmatpush.bf16.msra.mxu0 %v1515
    %1533 = vmatmul.bf16.gmra.mxu0 %v1520
    %v1534 = vpop.f32.mrf.mxu0
    %v1535 = vadd.f32 0.0, %v1534
    %v1536 = vpop.f32.mrf.mxu0
    %v1537 = vadd.f32 0.0, %v1536
    %1538 = vmatmul.bf16.gmra.mxu0 %v1523
    %v1539 = vpop.f32.mrf.mxu0
    %v1540 = vadd.f32 0.0, %v1539
    %v1541 = vpop.f32.mrf.mxu0
    %v1542 = vadd.f32 0.0, %v1541
    %1543 = vdwg.mxu0
    %v1544 = vadd.f32 %v1429, %v1535
    %v1545 = vadd.f32 %v1430, %v1537
    %v1546 = vadd.f32 %v1431, %v1540
    %v1547 = vadd.f32 %v1432, %v1542
    %s1548 = scalar_lea.vmem %s3, 288
    %v1549 = vld [vmem:[%s1548] sm:$0xff]
    %v1550 = vld [vmem:[%s1548 + $0x8] sm:$0xff]
    %v1551 = vld [vmem:[%s1548 + $0x10] sm:$0xff]
    %v1552 = vld [vmem:[%s1548 + $0x18] sm:$0xff]
    %v1557 = vunpack.c.l.b16 %v1549
    %v1558 = vunpack.c.h.b16 %v1549
    %v1559 = vunpack.c.l.b16 %v1550
    %v1560 = vunpack.c.h.b16 %v1550
    %v1561 = vunpack.c.l.b16 %v1551
    %v1562 = vunpack.c.h.b16 %v1551
    %v1563 = vunpack.c.l.b16 %v1552
    %v1564 = vunpack.c.h.b16 %v1552
    %v1565 = vpack.c.b16 %v1559, %v1557
    %v1566 = vpack.c.b16 %v1560, %v1558
    %v1567 = vpack.c.b16 %v1563, %v1561
    %v1568 = vpack.c.b16 %v1564, %v1562
    %v1572 = vsel %vm539, %v1566, 0
    %v1575 = vsel %vm539, %v1568, 0
    %1577 = vmatpush.bf16.msra.mxu0 %v511
    %1578 = vmatpush.bf16.msra.mxu0 %v510
    %1579 = vmatpush.bf16.msra.mxu0 %v509
    %1580 = vmatpush.bf16.msra.mxu0 %v508
    %1581 = vmatpush.bf16.msra.mxu0 %v507
    %1582 = vmatpush.bf16.msra.mxu0 %v506
    %1583 = vmatpush.bf16.msra.mxu0 %v505
    %1584 = vmatpush.bf16.msra.mxu0 %v504
    %1585 = vmatmul.bf16.gmra.mxu0 %v1565
    %v1586 = vpop.f32.mrf.mxu0
    %v1587 = vadd.f32 0.0, %v1586
    %v1588 = vpop.f32.mrf.mxu0
    %v1589 = vadd.f32 0.0, %v1588
    %1590 = vmatmul.bf16.gmra.mxu0 %v1567
    %v1591 = vpop.f32.mrf.mxu0
    %v1592 = vadd.f32 0.0, %v1591
    %v1593 = vpop.f32.mrf.mxu0
    %v1594 = vadd.f32 0.0, %v1593
    %1595 = vdwg.mxu0
    %1596 = vmatpush.bf16.msra.mxu0 0
    %1597 = vmatpush.bf16.msra.mxu0 0
    %1598 = vmatpush.bf16.msra.mxu0 0
    %1599 = vmatpush.bf16.msra.mxu0 %v548
    %1600 = vmatpush.bf16.msra.mxu0 %v515
    %1601 = vmatpush.bf16.msra.mxu0 %v514
    %1602 = vmatpush.bf16.msra.mxu0 %v513
    %1603 = vmatpush.bf16.msra.mxu0 %v512
    %1604 = vmatmul.bf16.gmra.mxu0 %v1572
    %v1605 = vpop.f32.mrf.mxu0
    %v1606 = vadd.f32 %v1587, %v1605
    %v1607 = vpop.f32.mrf.mxu0
    %v1608 = vadd.f32 %v1589, %v1607
    %1609 = vmatmul.bf16.gmra.mxu0 %v1575
    %v1610 = vpop.f32.mrf.mxu0
    %v1611 = vadd.f32 %v1592, %v1610
    %v1612 = vpop.f32.mrf.mxu0
    %v1613 = vadd.f32 %v1594, %v1612
    %1614 = vdwg.mxu0
    %v1615 = vpack.c.bf16 %v1608, %v1606
    %v1616 = vpack.c.bf16 %v1613, %v1611
    %s1617 = scalar_lea.vmem %s4, 144
    %v1618 = vld [vmem:[%s1617] sm:$0xf]
    %v1619 = vld [vmem:[%s1617 + $0x4] sm:$0xf]
    %v1620 = vld [vmem:[%s1617 + $0x8] sm:$0xf]
    %v1621 = vld [vmem:[%s1617 + $0xc] sm:$0xf]
    %v1626 = vunpack.c.l.b16 %v1618
    %v1627 = vunpack.c.l.b16 %v1619
    %v1628 = vunpack.c.l.b16 %v1620
    %v1629 = vunpack.c.l.b16 %v1621
    %v1630 = vpack.c.b16 %v1627, %v1626
    %v1631 = vpack.c.b16 %v1629, %v1628
    %v1635 = vsel %vm680, %v1615, 0
    %v1638 = vsel %vm680, %v1616, 0
    %1640 = vmatpush.bf16.msra.mxu0 0
    %1641 = vmatpush.bf16.msra.mxu0 0
    %1642 = vmatpush.bf16.msra.mxu0 0
    %1643 = vmatpush.bf16.msra.mxu0 0
    %1644 = vmatpush.bf16.msra.mxu0 0
    %1645 = vmatpush.bf16.msra.mxu0 0
    %1646 = vmatpush.bf16.msra.mxu0 %v1631
    %1647 = vmatpush.bf16.msra.mxu0 %v1630
    %1648 = vmatmul.bf16.gmra.mxu0 %v1635
    %v1649 = vpop.f32.mrf.mxu0
    %v1650 = vadd.f32 0.0, %v1649
    %v1651 = vpop.f32.mrf.mxu0
    %v1652 = vadd.f32 0.0, %v1651
    %1653 = vmatmul.bf16.gmra.mxu0 %v1638
    %v1654 = vpop.f32.mrf.mxu0
    %v1655 = vadd.f32 0.0, %v1654
    %v1656 = vpop.f32.mrf.mxu0
    %v1657 = vadd.f32 0.0, %v1656
    %1658 = vdwg.mxu0
    %v1659 = vadd.f32 %v1544, %v1650
    %v1660 = vadd.f32 %v1545, %v1652
    %v1661 = vadd.f32 %v1546, %v1655
    %v1662 = vadd.f32 %v1547, %v1657
    %s1663 = scalar_lea.vmem %s3, 320
    %v1664 = vld [vmem:[%s1663] sm:$0xff]
    %v1665 = vld [vmem:[%s1663 + $0x8] sm:$0xff]
    %v1666 = vld [vmem:[%s1663 + $0x10] sm:$0xff]
    %v1667 = vld [vmem:[%s1663 + $0x18] sm:$0xff]
    %v1672 = vunpack.c.l.b16 %v1664
    %v1673 = vunpack.c.h.b16 %v1664
    %v1674 = vunpack.c.l.b16 %v1665
    %v1675 = vunpack.c.h.b16 %v1665
    %v1676 = vunpack.c.l.b16 %v1666
    %v1677 = vunpack.c.h.b16 %v1666
    %v1678 = vunpack.c.l.b16 %v1667
    %v1679 = vunpack.c.h.b16 %v1667
    %v1680 = vpack.c.b16 %v1674, %v1672
    %v1681 = vpack.c.b16 %v1675, %v1673
    %v1682 = vpack.c.b16 %v1678, %v1676
    %v1683 = vpack.c.b16 %v1679, %v1677
    %v1687 = vsel %vm539, %v1681, 0
    %v1690 = vsel %vm539, %v1683, 0
    %1692 = vmatpush.bf16.msra.mxu0 %v511
    %1693 = vmatpush.bf16.msra.mxu0 %v510
    %1694 = vmatpush.bf16.msra.mxu0 %v509
    %1695 = vmatpush.bf16.msra.mxu0 %v508
    %1696 = vmatpush.bf16.msra.mxu0 %v507
    %1697 = vmatpush.bf16.msra.mxu0 %v506
    %1698 = vmatpush.bf16.msra.mxu0 %v505
    %1699 = vmatpush.bf16.msra.mxu0 %v504
    %1700 = vmatmul.bf16.gmra.mxu0 %v1680
    %v1701 = vpop.f32.mrf.mxu0
    %v1702 = vadd.f32 0.0, %v1701
    %v1703 = vpop.f32.mrf.mxu0
    %v1704 = vadd.f32 0.0, %v1703
    %1705 = vmatmul.bf16.gmra.mxu0 %v1682
    %v1706 = vpop.f32.mrf.mxu0
    %v1707 = vadd.f32 0.0, %v1706
    %v1708 = vpop.f32.mrf.mxu0
    %v1709 = vadd.f32 0.0, %v1708
    %1710 = vdwg.mxu0
    %1711 = vmatpush.bf16.msra.mxu0 0
    %1712 = vmatpush.bf16.msra.mxu0 0
    %1713 = vmatpush.bf16.msra.mxu0 0
    %1714 = vmatpush.bf16.msra.mxu0 %v548
    %1715 = vmatpush.bf16.msra.mxu0 %v515
    %1716 = vmatpush.bf16.msra.mxu0 %v514
    %1717 = vmatpush.bf16.msra.mxu0 %v513
    %1718 = vmatpush.bf16.msra.mxu0 %v512
    %1719 = vmatmul.bf16.gmra.mxu0 %v1687
    %v1720 = vpop.f32.mrf.mxu0
    %v1721 = vadd.f32 %v1702, %v1720
    %v1722 = vpop.f32.mrf.mxu0
    %v1723 = vadd.f32 %v1704, %v1722
    %1724 = vmatmul.bf16.gmra.mxu0 %v1690
    %v1725 = vpop.f32.mrf.mxu0
    %v1726 = vadd.f32 %v1707, %v1725
    %v1727 = vpop.f32.mrf.mxu0
    %v1728 = vadd.f32 %v1709, %v1727
    %1729 = vdwg.mxu0
    %v1730 = vpack.c.bf16 %v1723, %v1721
    %v1731 = vpack.c.bf16 %v1728, %v1726
    %s1732 = scalar_lea.vmem %s4, 160
    %v1733 = vld [vmem:[%s1732] sm:$0xf]
    %v1734 = vld [vmem:[%s1732 + $0x4] sm:$0xf]
    %v1735 = vld [vmem:[%s1732 + $0x8] sm:$0xf]
    %v1736 = vld [vmem:[%s1732 + $0xc] sm:$0xf]
    %v1741 = vunpack.c.l.b16 %v1733
    %v1742 = vunpack.c.l.b16 %v1734
    %v1743 = vunpack.c.l.b16 %v1735
    %v1744 = vunpack.c.l.b16 %v1736
    %v1745 = vpack.c.b16 %v1742, %v1741
    %v1746 = vpack.c.b16 %v1744, %v1743
    %v1750 = vsel %vm680, %v1730, 0
    %v1753 = vsel %vm680, %v1731, 0
    %1755 = vmatpush.bf16.msra.mxu0 0
    %1756 = vmatpush.bf16.msra.mxu0 0
    %1757 = vmatpush.bf16.msra.mxu0 0
    %1758 = vmatpush.bf16.msra.mxu0 0
    %1759 = vmatpush.bf16.msra.mxu0 0
    %1760 = vmatpush.bf16.msra.mxu0 0
    %1761 = vmatpush.bf16.msra.mxu0 %v1746
    %1762 = vmatpush.bf16.msra.mxu0 %v1745
    %1763 = vmatmul.bf16.gmra.mxu0 %v1750
    %v1764 = vpop.f32.mrf.mxu0
    %v1765 = vadd.f32 0.0, %v1764
    %v1766 = vpop.f32.mrf.mxu0
    %v1767 = vadd.f32 0.0, %v1766
    %1768 = vmatmul.bf16.gmra.mxu0 %v1753
    %v1769 = vpop.f32.mrf.mxu0
    %v1770 = vadd.f32 0.0, %v1769
    %v1771 = vpop.f32.mrf.mxu0
    %v1772 = vadd.f32 0.0, %v1771
    %1773 = vdwg.mxu0
    %v1774 = vadd.f32 %v1659, %v1765
    %v1775 = vadd.f32 %v1660, %v1767
    %v1776 = vadd.f32 %v1661, %v1770
    %v1777 = vadd.f32 %v1662, %v1772
    %s1778 = scalar_lea.vmem %s3, 352
    %v1779 = vld [vmem:[%s1778] sm:$0xff]
    %v1780 = vld [vmem:[%s1778 + $0x8] sm:$0xff]
    %v1781 = vld [vmem:[%s1778 + $0x10] sm:$0xff]
    %v1782 = vld [vmem:[%s1778 + $0x18] sm:$0xff]
    %v1787 = vunpack.c.l.b16 %v1779
    %v1788 = vunpack.c.h.b16 %v1779
    %v1789 = vunpack.c.l.b16 %v1780
    %v1790 = vunpack.c.h.b16 %v1780
    %v1791 = vunpack.c.l.b16 %v1781
    %v1792 = vunpack.c.h.b16 %v1781
    %v1793 = vunpack.c.l.b16 %v1782
    %v1794 = vunpack.c.h.b16 %v1782
    %v1795 = vpack.c.b16 %v1789, %v1787
    %v1796 = vpack.c.b16 %v1790, %v1788
    %v1797 = vpack.c.b16 %v1793, %v1791
    %v1798 = vpack.c.b16 %v1794, %v1792
    %v1802 = vsel %vm539, %v1796, 0
    %v1805 = vsel %vm539, %v1798, 0
    %1807 = vmatpush.bf16.msra.mxu0 %v511
    %1808 = vmatpush.bf16.msra.mxu0 %v510
    %1809 = vmatpush.bf16.msra.mxu0 %v509
    %1810 = vmatpush.bf16.msra.mxu0 %v508
    %1811 = vmatpush.bf16.msra.mxu0 %v507
    %1812 = vmatpush.bf16.msra.mxu0 %v506
    %1813 = vmatpush.bf16.msra.mxu0 %v505
    %1814 = vmatpush.bf16.msra.mxu0 %v504
    %1815 = vmatmul.bf16.gmra.mxu0 %v1795
    %v1816 = vpop.f32.mrf.mxu0
    %v1817 = vadd.f32 0.0, %v1816
    %v1818 = vpop.f32.mrf.mxu0
    %v1819 = vadd.f32 0.0, %v1818
    %1820 = vmatmul.bf16.gmra.mxu0 %v1797
    %v1821 = vpop.f32.mrf.mxu0
    %v1822 = vadd.f32 0.0, %v1821
    %v1823 = vpop.f32.mrf.mxu0
    %v1824 = vadd.f32 0.0, %v1823
    %1825 = vdwg.mxu0
    %1826 = vmatpush.bf16.msra.mxu0 0
    %1827 = vmatpush.bf16.msra.mxu0 0
    %1828 = vmatpush.bf16.msra.mxu0 0
    %1829 = vmatpush.bf16.msra.mxu0 %v548
    %1830 = vmatpush.bf16.msra.mxu0 %v515
    %1831 = vmatpush.bf16.msra.mxu0 %v514
    %1832 = vmatpush.bf16.msra.mxu0 %v513
    %1833 = vmatpush.bf16.msra.mxu0 %v512
    %1834 = vmatmul.bf16.gmra.mxu0 %v1802
    %v1835 = vpop.f32.mrf.mxu0
    %v1836 = vadd.f32 %v1817, %v1835
    %v1837 = vpop.f32.mrf.mxu0
    %v1838 = vadd.f32 %v1819, %v1837
    %1839 = vmatmul.bf16.gmra.mxu0 %v1805
    %v1840 = vpop.f32.mrf.mxu0
    %v1841 = vadd.f32 %v1822, %v1840
    %v1842 = vpop.f32.mrf.mxu0
    %v1843 = vadd.f32 %v1824, %v1842
    %1844 = vdwg.mxu0
    %v1845 = vpack.c.bf16 %v1838, %v1836
    %v1846 = vpack.c.bf16 %v1843, %v1841
    %s1847 = scalar_lea.vmem %s4, 176
    %v1848 = vld [vmem:[%s1847] sm:$0xf]
    %v1849 = vld [vmem:[%s1847 + $0x4] sm:$0xf]
    %v1850 = vld [vmem:[%s1847 + $0x8] sm:$0xf]
    %v1851 = vld [vmem:[%s1847 + $0xc] sm:$0xf]
    %v1856 = vunpack.c.l.b16 %v1848
    %v1857 = vunpack.c.l.b16 %v1849
    %v1858 = vunpack.c.l.b16 %v1850
    %v1859 = vunpack.c.l.b16 %v1851
    %v1860 = vpack.c.b16 %v1857, %v1856
    %v1861 = vpack.c.b16 %v1859, %v1858
    %v1865 = vsel %vm680, %v1845, 0
    %v1868 = vsel %vm680, %v1846, 0
    %1870 = vmatpush.bf16.msra.mxu0 0
    %1871 = vmatpush.bf16.msra.mxu0 0
    %1872 = vmatpush.bf16.msra.mxu0 0
    %1873 = vmatpush.bf16.msra.mxu0 0
    %1874 = vmatpush.bf16.msra.mxu0 0
    %1875 = vmatpush.bf16.msra.mxu0 0
    %1876 = vmatpush.bf16.msra.mxu0 %v1861
    %1877 = vmatpush.bf16.msra.mxu0 %v1860
    %1878 = vmatmul.bf16.gmra.mxu0 %v1865
    %v1879 = vpop.f32.mrf.mxu0
    %v1880 = vadd.f32 0.0, %v1879
    %v1881 = vpop.f32.mrf.mxu0
    %v1882 = vadd.f32 0.0, %v1881
    %1883 = vmatmul.bf16.gmra.mxu0 %v1868
    %v1884 = vpop.f32.mrf.mxu0
    %v1885 = vadd.f32 0.0, %v1884
    %v1886 = vpop.f32.mrf.mxu0
    %v1887 = vadd.f32 0.0, %v1886
    %1888 = vdwg.mxu0
    %v1889 = vadd.f32 %v1774, %v1880
    %v1890 = vadd.f32 %v1775, %v1882
    %v1891 = vadd.f32 %v1776, %v1885
    %v1892 = vadd.f32 %v1777, %v1887
    %s1893 = scalar_lea.vmem %s3, 384
    %v1894 = vld [vmem:[%s1893] sm:$0xff]
    %v1895 = vld [vmem:[%s1893 + $0x8] sm:$0xff]
    %v1896 = vld [vmem:[%s1893 + $0x10] sm:$0xff]
    %v1897 = vld [vmem:[%s1893 + $0x18] sm:$0xff]
    %v1902 = vunpack.c.l.b16 %v1894
    %v1903 = vunpack.c.h.b16 %v1894
    %v1904 = vunpack.c.l.b16 %v1895
    %v1905 = vunpack.c.h.b16 %v1895
    %v1906 = vunpack.c.l.b16 %v1896
    %v1907 = vunpack.c.h.b16 %v1896
    %v1908 = vunpack.c.l.b16 %v1897
    %v1909 = vunpack.c.h.b16 %v1897
    %v1910 = vpack.c.b16 %v1904, %v1902
    %v1911 = vpack.c.b16 %v1905, %v1903
    %v1912 = vpack.c.b16 %v1908, %v1906
    %v1913 = vpack.c.b16 %v1909, %v1907
    %v1917 = vsel %vm539, %v1911, 0
    %v1920 = vsel %vm539, %v1913, 0
    %1922 = vmatpush.bf16.msra.mxu0 %v511
    %1923 = vmatpush.bf16.msra.mxu0 %v510
    %1924 = vmatpush.bf16.msra.mxu0 %v509
    %1925 = vmatpush.bf16.msra.mxu0 %v508
    %1926 = vmatpush.bf16.msra.mxu0 %v507
    %1927 = vmatpush.bf16.msra.mxu0 %v506
    %1928 = vmatpush.bf16.msra.mxu0 %v505
    %1929 = vmatpush.bf16.msra.mxu0 %v504
    %1930 = vmatmul.bf16.gmra.mxu0 %v1910
    %v1931 = vpop.f32.mrf.mxu0
    %v1932 = vadd.f32 0.0, %v1931
    %v1933 = vpop.f32.mrf.mxu0
    %v1934 = vadd.f32 0.0, %v1933
    %1935 = vmatmul.bf16.gmra.mxu0 %v1912
    %v1936 = vpop.f32.mrf.mxu0
    %v1937 = vadd.f32 0.0, %v1936
    %v1938 = vpop.f32.mrf.mxu0
    %v1939 = vadd.f32 0.0, %v1938
    %1940 = vdwg.mxu0
    %1941 = vmatpush.bf16.msra.mxu0 0
    %1942 = vmatpush.bf16.msra.mxu0 0
    %1943 = vmatpush.bf16.msra.mxu0 0
    %1944 = vmatpush.bf16.msra.mxu0 %v548
    %1945 = vmatpush.bf16.msra.mxu0 %v515
    %1946 = vmatpush.bf16.msra.mxu0 %v514
    %1947 = vmatpush.bf16.msra.mxu0 %v513
    %1948 = vmatpush.bf16.msra.mxu0 %v512
    %1949 = vmatmul.bf16.gmra.mxu0 %v1917
    %v1950 = vpop.f32.mrf.mxu0
    %v1951 = vadd.f32 %v1932, %v1950
    %v1952 = vpop.f32.mrf.mxu0
    %v1953 = vadd.f32 %v1934, %v1952
    %1954 = vmatmul.bf16.gmra.mxu0 %v1920
    %v1955 = vpop.f32.mrf.mxu0
    %v1956 = vadd.f32 %v1937, %v1955
    %v1957 = vpop.f32.mrf.mxu0
    %v1958 = vadd.f32 %v1939, %v1957
    %1959 = vdwg.mxu0
    %v1960 = vpack.c.bf16 %v1953, %v1951
    %v1961 = vpack.c.bf16 %v1958, %v1956
    %s1962 = scalar_lea.vmem %s4, 192
    %v1963 = vld [vmem:[%s1962] sm:$0xf]
    %v1964 = vld [vmem:[%s1962 + $0x4] sm:$0xf]
    %v1965 = vld [vmem:[%s1962 + $0x8] sm:$0xf]
    %v1966 = vld [vmem:[%s1962 + $0xc] sm:$0xf]
    %v1971 = vunpack.c.l.b16 %v1963
    %v1972 = vunpack.c.l.b16 %v1964
    %v1973 = vunpack.c.l.b16 %v1965
    %v1974 = vunpack.c.l.b16 %v1966
    %v1975 = vpack.c.b16 %v1972, %v1971
    %v1976 = vpack.c.b16 %v1974, %v1973
    %v1980 = vsel %vm680, %v1960, 0
    %v1983 = vsel %vm680, %v1961, 0
    %1985 = vmatpush.bf16.msra.mxu0 0
    %1986 = vmatpush.bf16.msra.mxu0 0
    %1987 = vmatpush.bf16.msra.mxu0 0
    %1988 = vmatpush.bf16.msra.mxu0 0
    %1989 = vmatpush.bf16.msra.mxu0 0
    %1990 = vmatpush.bf16.msra.mxu0 0
    %1991 = vmatpush.bf16.msra.mxu0 %v1976
    %1992 = vmatpush.bf16.msra.mxu0 %v1975
    %1993 = vmatmul.bf16.gmra.mxu0 %v1980
    %v1994 = vpop.f32.mrf.mxu0
    %v1995 = vadd.f32 0.0, %v1994
    %v1996 = vpop.f32.mrf.mxu0
    %v1997 = vadd.f32 0.0, %v1996
    %1998 = vmatmul.bf16.gmra.mxu0 %v1983
    %v1999 = vpop.f32.mrf.mxu0
    %v2000 = vadd.f32 0.0, %v1999
    %v2001 = vpop.f32.mrf.mxu0
    %v2002 = vadd.f32 0.0, %v2001
    %2003 = vdwg.mxu0
    %v2004 = vadd.f32 %v1889, %v1995
    %v2005 = vadd.f32 %v1890, %v1997
    %v2006 = vadd.f32 %v1891, %v2000
    %v2007 = vadd.f32 %v1892, %v2002
    %s2008 = scalar_lea.vmem %s3, 416
    %v2009 = vld [vmem:[%s2008] sm:$0xff]
    %v2010 = vld [vmem:[%s2008 + $0x8] sm:$0xff]
    %v2011 = vld [vmem:[%s2008 + $0x10] sm:$0xff]
    %v2012 = vld [vmem:[%s2008 + $0x18] sm:$0xff]
    %v2017 = vunpack.c.l.b16 %v2009
    %v2018 = vunpack.c.h.b16 %v2009
    %v2019 = vunpack.c.l.b16 %v2010
    %v2020 = vunpack.c.h.b16 %v2010
    %v2021 = vunpack.c.l.b16 %v2011
    %v2022 = vunpack.c.h.b16 %v2011
    %v2023 = vunpack.c.l.b16 %v2012
    %v2024 = vunpack.c.h.b16 %v2012
    %v2025 = vpack.c.b16 %v2019, %v2017
    %v2026 = vpack.c.b16 %v2020, %v2018
    %v2027 = vpack.c.b16 %v2023, %v2021
    %v2028 = vpack.c.b16 %v2024, %v2022
    %v2032 = vsel %vm539, %v2026, 0
    %v2035 = vsel %vm539, %v2028, 0
    %2037 = vmatpush.bf16.msra.mxu0 %v511
    %2038 = vmatpush.bf16.msra.mxu0 %v510
    %2039 = vmatpush.bf16.msra.mxu0 %v509
    %2040 = vmatpush.bf16.msra.mxu0 %v508
    %2041 = vmatpush.bf16.msra.mxu0 %v507
    %2042 = vmatpush.bf16.msra.mxu0 %v506
    %2043 = vmatpush.bf16.msra.mxu0 %v505
    %2044 = vmatpush.bf16.msra.mxu0 %v504
    %2045 = vmatmul.bf16.gmra.mxu0 %v2025
    %v2046 = vpop.f32.mrf.mxu0
    %v2047 = vadd.f32 0.0, %v2046
    %v2048 = vpop.f32.mrf.mxu0
    %v2049 = vadd.f32 0.0, %v2048
    %2050 = vmatmul.bf16.gmra.mxu0 %v2027
    %v2051 = vpop.f32.mrf.mxu0
    %v2052 = vadd.f32 0.0, %v2051
    %v2053 = vpop.f32.mrf.mxu0
    %v2054 = vadd.f32 0.0, %v2053
    %2055 = vdwg.mxu0
    %2056 = vmatpush.bf16.msra.mxu0 0
    %2057 = vmatpush.bf16.msra.mxu0 0
    %2058 = vmatpush.bf16.msra.mxu0 0
    %2059 = vmatpush.bf16.msra.mxu0 %v548
    %2060 = vmatpush.bf16.msra.mxu0 %v515
    %2061 = vmatpush.bf16.msra.mxu0 %v514
    %2062 = vmatpush.bf16.msra.mxu0 %v513
    %2063 = vmatpush.bf16.msra.mxu0 %v512
    %2064 = vmatmul.bf16.gmra.mxu0 %v2032
    %v2065 = vpop.f32.mrf.mxu0
    %v2066 = vadd.f32 %v2047, %v2065
    %v2067 = vpop.f32.mrf.mxu0
    %v2068 = vadd.f32 %v2049, %v2067
    %2069 = vmatmul.bf16.gmra.mxu0 %v2035
    %v2070 = vpop.f32.mrf.mxu0
    %v2071 = vadd.f32 %v2052, %v2070
    %v2072 = vpop.f32.mrf.mxu0
    %v2073 = vadd.f32 %v2054, %v2072
    %2074 = vdwg.mxu0
    %v2075 = vpack.c.bf16 %v2068, %v2066
    %v2076 = vpack.c.bf16 %v2073, %v2071
    %s2077 = scalar_lea.vmem %s4, 208
    %v2078 = vld [vmem:[%s2077] sm:$0xf]
    %v2079 = vld [vmem:[%s2077 + $0x4] sm:$0xf]
    %v2080 = vld [vmem:[%s2077 + $0x8] sm:$0xf]
    %v2081 = vld [vmem:[%s2077 + $0xc] sm:$0xf]
    %v2086 = vunpack.c.l.b16 %v2078
    %v2087 = vunpack.c.l.b16 %v2079
    %v2088 = vunpack.c.l.b16 %v2080
    %v2089 = vunpack.c.l.b16 %v2081
    %v2090 = vpack.c.b16 %v2087, %v2086
    %v2091 = vpack.c.b16 %v2089, %v2088
    %v2095 = vsel %vm680, %v2075, 0
    %v2098 = vsel %vm680, %v2076, 0
    %2100 = vmatpush.bf16.msra.mxu0 0
    %2101 = vmatpush.bf16.msra.mxu0 0
    %2102 = vmatpush.bf16.msra.mxu0 0
    %2103 = vmatpush.bf16.msra.mxu0 0
    %2104 = vmatpush.bf16.msra.mxu0 0
    %2105 = vmatpush.bf16.msra.mxu0 0
    %2106 = vmatpush.bf16.msra.mxu0 %v2091
    %2107 = vmatpush.bf16.msra.mxu0 %v2090
    %2108 = vmatmul.bf16.gmra.mxu0 %v2095
    %v2109 = vpop.f32.mrf.mxu0
    %v2110 = vadd.f32 0.0, %v2109
    %v2111 = vpop.f32.mrf.mxu0
    %v2112 = vadd.f32 0.0, %v2111
    %2113 = vmatmul.bf16.gmra.mxu0 %v2098
    %v2114 = vpop.f32.mrf.mxu0
    %v2115 = vadd.f32 0.0, %v2114
    %v2116 = vpop.f32.mrf.mxu0
    %v2117 = vadd.f32 0.0, %v2116
    %2118 = vdwg.mxu0
    %v2119 = vadd.f32 %v2004, %v2110
    %v2120 = vadd.f32 %v2005, %v2112
    %v2121 = vadd.f32 %v2006, %v2115
    %v2122 = vadd.f32 %v2007, %v2117
    %s2123 = scalar_lea.vmem %s3, 448
    %v2124 = vld [vmem:[%s2123] sm:$0xff]
    %v2125 = vld [vmem:[%s2123 + $0x8] sm:$0xff]
    %v2126 = vld [vmem:[%s2123 + $0x10] sm:$0xff]
    %v2127 = vld [vmem:[%s2123 + $0x18] sm:$0xff]
    %v2132 = vunpack.c.l.b16 %v2124
    %v2133 = vunpack.c.h.b16 %v2124
    %v2134 = vunpack.c.l.b16 %v2125
    %v2135 = vunpack.c.h.b16 %v2125
    %v2136 = vunpack.c.l.b16 %v2126
    %v2137 = vunpack.c.h.b16 %v2126
    %v2138 = vunpack.c.l.b16 %v2127
    %v2139 = vunpack.c.h.b16 %v2127
    %v2140 = vpack.c.b16 %v2134, %v2132
    %v2141 = vpack.c.b16 %v2135, %v2133
    %v2142 = vpack.c.b16 %v2138, %v2136
    %v2143 = vpack.c.b16 %v2139, %v2137
    %v2147 = vsel %vm539, %v2141, 0
    %v2150 = vsel %vm539, %v2143, 0
    %2152 = vmatpush.bf16.msra.mxu0 %v511
    %2153 = vmatpush.bf16.msra.mxu0 %v510
    %2154 = vmatpush.bf16.msra.mxu0 %v509
    %2155 = vmatpush.bf16.msra.mxu0 %v508
    %2156 = vmatpush.bf16.msra.mxu0 %v507
    %2157 = vmatpush.bf16.msra.mxu0 %v506
    %2158 = vmatpush.bf16.msra.mxu0 %v505
    %2159 = vmatpush.bf16.msra.mxu0 %v504
    %2160 = vmatmul.bf16.gmra.mxu0 %v2140
    %v2161 = vpop.f32.mrf.mxu0
    %v2162 = vadd.f32 0.0, %v2161
    %v2163 = vpop.f32.mrf.mxu0
    %v2164 = vadd.f32 0.0, %v2163
    %2165 = vmatmul.bf16.gmra.mxu0 %v2142
    %v2166 = vpop.f32.mrf.mxu0
    %v2167 = vadd.f32 0.0, %v2166
    %v2168 = vpop.f32.mrf.mxu0
    %v2169 = vadd.f32 0.0, %v2168
    %2170 = vdwg.mxu0
    %2171 = vmatpush.bf16.msra.mxu0 0
    %2172 = vmatpush.bf16.msra.mxu0 0
    %2173 = vmatpush.bf16.msra.mxu0 0
    %2174 = vmatpush.bf16.msra.mxu0 %v548
    %2175 = vmatpush.bf16.msra.mxu0 %v515
    %2176 = vmatpush.bf16.msra.mxu0 %v514
    %2177 = vmatpush.bf16.msra.mxu0 %v513
    %2178 = vmatpush.bf16.msra.mxu0 %v512
    %2179 = vmatmul.bf16.gmra.mxu0 %v2147
    %v2180 = vpop.f32.mrf.mxu0
    %v2181 = vadd.f32 %v2162, %v2180
    %v2182 = vpop.f32.mrf.mxu0
    %v2183 = vadd.f32 %v2164, %v2182
    %2184 = vmatmul.bf16.gmra.mxu0 %v2150
    %v2185 = vpop.f32.mrf.mxu0
    %v2186 = vadd.f32 %v2167, %v2185
    %v2187 = vpop.f32.mrf.mxu0
    %v2188 = vadd.f32 %v2169, %v2187
    %2189 = vdwg.mxu0
    %v2190 = vpack.c.bf16 %v2183, %v2181
    %v2191 = vpack.c.bf16 %v2188, %v2186
    %s2192 = scalar_lea.vmem %s4, 224
    %v2193 = vld [vmem:[%s2192] sm:$0xf]
    %v2194 = vld [vmem:[%s2192 + $0x4] sm:$0xf]
    %v2195 = vld [vmem:[%s2192 + $0x8] sm:$0xf]
    %v2196 = vld [vmem:[%s2192 + $0xc] sm:$0xf]
    %v2201 = vunpack.c.l.b16 %v2193
    %v2202 = vunpack.c.l.b16 %v2194
    %v2203 = vunpack.c.l.b16 %v2195
    %v2204 = vunpack.c.l.b16 %v2196
    %v2205 = vpack.c.b16 %v2202, %v2201
    %v2206 = vpack.c.b16 %v2204, %v2203
    %v2210 = vsel %vm680, %v2190, 0
    %v2213 = vsel %vm680, %v2191, 0
    %2215 = vmatpush.bf16.msra.mxu0 0
    %2216 = vmatpush.bf16.msra.mxu0 0
    %2217 = vmatpush.bf16.msra.mxu0 0
    %2218 = vmatpush.bf16.msra.mxu0 0
    %2219 = vmatpush.bf16.msra.mxu0 0
    %2220 = vmatpush.bf16.msra.mxu0 0
    %2221 = vmatpush.bf16.msra.mxu0 %v2206
    %2222 = vmatpush.bf16.msra.mxu0 %v2205
    %2223 = vmatmul.bf16.gmra.mxu0 %v2210
    %v2224 = vpop.f32.mrf.mxu0
    %v2225 = vadd.f32 0.0, %v2224
    %v2226 = vpop.f32.mrf.mxu0
    %v2227 = vadd.f32 0.0, %v2226
    %2228 = vmatmul.bf16.gmra.mxu0 %v2213
    %v2229 = vpop.f32.mrf.mxu0
    %v2230 = vadd.f32 0.0, %v2229
    %v2231 = vpop.f32.mrf.mxu0
    %v2232 = vadd.f32 0.0, %v2231
    %2233 = vdwg.mxu0
    %v2234 = vadd.f32 %v2119, %v2225
    %v2235 = vadd.f32 %v2120, %v2227
    %v2236 = vadd.f32 %v2121, %v2230
    %v2237 = vadd.f32 %v2122, %v2232
    %s2238 = scalar_lea.vmem %s3, 480
    %v2239 = vld [vmem:[%s2238] sm:$0xff]
    %v2240 = vld [vmem:[%s2238 + $0x8] sm:$0xff]
    %v2241 = vld [vmem:[%s2238 + $0x10] sm:$0xff]
    %v2242 = vld [vmem:[%s2238 + $0x18] sm:$0xff]
    %v2247 = vunpack.c.l.b16 %v2239
    %v2248 = vunpack.c.h.b16 %v2239
    %v2249 = vunpack.c.l.b16 %v2240
    %v2250 = vunpack.c.h.b16 %v2240
    %v2251 = vunpack.c.l.b16 %v2241
    %v2252 = vunpack.c.h.b16 %v2241
    %v2253 = vunpack.c.l.b16 %v2242
    %v2254 = vunpack.c.h.b16 %v2242
    %v2255 = vpack.c.b16 %v2249, %v2247
    %v2256 = vpack.c.b16 %v2250, %v2248
    %v2257 = vpack.c.b16 %v2253, %v2251
    %v2258 = vpack.c.b16 %v2254, %v2252
    %v2262 = vsel %vm539, %v2256, 0
    %v2265 = vsel %vm539, %v2258, 0
    %2267 = vmatpush.bf16.msra.mxu0 %v511
    %2268 = vmatpush.bf16.msra.mxu0 %v510
    %2269 = vmatpush.bf16.msra.mxu0 %v509
    %2270 = vmatpush.bf16.msra.mxu0 %v508
    %2271 = vmatpush.bf16.msra.mxu0 %v507
    %2272 = vmatpush.bf16.msra.mxu0 %v506
    %2273 = vmatpush.bf16.msra.mxu0 %v505
    %2274 = vmatpush.bf16.msra.mxu0 %v504
    %2275 = vmatmul.bf16.gmra.mxu0 %v2255
    %v2276 = vpop.f32.mrf.mxu0
    %v2277 = vadd.f32 0.0, %v2276
    %v2278 = vpop.f32.mrf.mxu0
    %v2279 = vadd.f32 0.0, %v2278
    %2280 = vmatmul.bf16.gmra.mxu0 %v2257
    %v2281 = vpop.f32.mrf.mxu0
    %v2282 = vadd.f32 0.0, %v2281
    %v2283 = vpop.f32.mrf.mxu0
    %v2284 = vadd.f32 0.0, %v2283
    %2285 = vdwg.mxu0
    %2286 = vmatpush.bf16.msra.mxu0 0
    %2287 = vmatpush.bf16.msra.mxu0 0
    %2288 = vmatpush.bf16.msra.mxu0 0
    %2289 = vmatpush.bf16.msra.mxu0 %v548
    %2290 = vmatpush.bf16.msra.mxu0 %v515
    %2291 = vmatpush.bf16.msra.mxu0 %v514
    %2292 = vmatpush.bf16.msra.mxu0 %v513
    %2293 = vmatpush.bf16.msra.mxu0 %v512
    %2294 = vmatmul.bf16.gmra.mxu0 %v2262
    %v2295 = vpop.f32.mrf.mxu0
    %v2296 = vadd.f32 %v2277, %v2295
    %v2297 = vpop.f32.mrf.mxu0
    %v2298 = vadd.f32 %v2279, %v2297
    %2299 = vmatmul.bf16.gmra.mxu0 %v2265
    %v2300 = vpop.f32.mrf.mxu0
    %v2301 = vadd.f32 %v2282, %v2300
    %v2302 = vpop.f32.mrf.mxu0
    %v2303 = vadd.f32 %v2284, %v2302
    %2304 = vdwg.mxu0
    %v2305 = vpack.c.bf16 %v2298, %v2296
    %v2306 = vpack.c.bf16 %v2303, %v2301
    %s2307 = scalar_lea.vmem %s4, 240
    %v2308 = vld [vmem:[%s2307] sm:$0xf]
    %v2309 = vld [vmem:[%s2307 + $0x4] sm:$0xf]
    %v2310 = vld [vmem:[%s2307 + $0x8] sm:$0xf]
    %v2311 = vld [vmem:[%s2307 + $0xc] sm:$0xf]
    %v2316 = vunpack.c.l.b16 %v2308
    %v2317 = vunpack.c.l.b16 %v2309
    %v2318 = vunpack.c.l.b16 %v2310
    %v2319 = vunpack.c.l.b16 %v2311
    %v2320 = vpack.c.b16 %v2317, %v2316
    %v2321 = vpack.c.b16 %v2319, %v2318
    %v2325 = vsel %vm680, %v2305, 0
    %v2328 = vsel %vm680, %v2306, 0
    %2330 = vmatpush.bf16.msra.mxu0 0
    %2331 = vmatpush.bf16.msra.mxu0 0
    %2332 = vmatpush.bf16.msra.mxu0 0
    %2333 = vmatpush.bf16.msra.mxu0 0
    %2334 = vmatpush.bf16.msra.mxu0 0
    %2335 = vmatpush.bf16.msra.mxu0 0
    %2336 = vmatpush.bf16.msra.mxu0 %v2321
    %2337 = vmatpush.bf16.msra.mxu0 %v2320
    %2338 = vmatmul.bf16.gmra.mxu0 %v2325
    %v2339 = vpop.f32.mrf.mxu0
    %v2340 = vadd.f32 0.0, %v2339
    %v2341 = vpop.f32.mrf.mxu0
    %v2342 = vadd.f32 0.0, %v2341
    %2343 = vmatmul.bf16.gmra.mxu0 %v2328
    %v2344 = vpop.f32.mrf.mxu0
    %v2345 = vadd.f32 0.0, %v2344
    %v2346 = vpop.f32.mrf.mxu0
    %v2347 = vadd.f32 0.0, %v2346
    %2348 = vdwg.mxu0
    %v2349 = vadd.f32 %v2234, %v2340
    %v2350 = vadd.f32 %v2235, %v2342
    %v2351 = vadd.f32 %v2236, %v2345
    %v2352 = vadd.f32 %v2237, %v2347
    %v2353 = vld [vmem:[%s5] sm:$0x1]
    %v2355 = vperm.slane %v2353, 0
    %v2357 = vadd.f32 %v2349, %v2355
    %v2358 = vadd.f32 %v2350, %v2355
    %v2359 = vadd.f32 %v2351, %v2355
    %v2360 = vadd.f32 %v2352, %v2355
    %v2361 = vmax.f32 %v2357, 0.0
    %v2362 = vmax.f32 %v2358, 0.0
    %v2363 = vmax.f32 %v2359, 0.0
    %v2364 = vmax.f32 %v2360, 0.0
    %v2365 = vpack.c.bf16 %v2362, %v2361
    %v2366 = vpack.c.bf16 %v2364, %v2363
    %v2367 = vld [vmem:[%s6] sm:$0xf]
    %v2369 = vsel %vm680, %v2367, 0
    %2371 = vmatpush.bf16.msra.mxu0 0
    %2372 = vmatpush.bf16.msra.mxu0 0
    %2373 = vmatpush.bf16.msra.mxu0 0
    %2374 = vmatpush.bf16.msra.mxu0 0
    %2375 = vmatpush.bf16.msra.mxu0 0
    %2376 = vmatpush.bf16.msra.mxu0 0
    %2377 = vmatpush.bf16.msra.mxu0 %v2366
    %2378 = vmatpush.bf16.msra.mxu0 %v2365
    %2379 = vmatmul.bf16.gmra.mxu0 %v2369
    %v2380 = vpop.f32.mrf.mxu0
    %v2381 = vadd.f32 0.0, %v2380
    %v2382 = vpop.f32.mrf.mxu0
    %2383 = vdwg.mxu0
    %v2384 = vpack.c.bf16 %v2381, %v2381
    %v2385 = vld [vmem:[%s7] sm:$0xf]
    %v2386 = vld [vmem:[%s7 + $0x4] sm:$0xf]
    %v2387 = vld [vmem:[%s7 + $0x8] sm:$0xf]
    %v2388 = vld [vmem:[%s7 + $0xc] sm:$0xf]
    %v2389 = vld [vmem:[%s7 + $0x10] sm:$0xf]
    %v2390 = vld [vmem:[%s7 + $0x14] sm:$0xf]
    %v2391 = vld [vmem:[%s7 + $0x18] sm:$0xf]
    %v2392 = vld [vmem:[%s7 + $0x1c] sm:$0xf]
    %s2393 = scalar_lea.vmem %s6, 4
    %v2394 = vld [vmem:[%s2393] sm:$0xf]
    %v2396 = vsel %vm680, %v2394, 0
    %2398 = vmatpush.bf16.msra.mxu0 0
    %2399 = vmatpush.bf16.msra.mxu0 0
    %2400 = vmatpush.bf16.msra.mxu0 0
    %2401 = vmatpush.bf16.msra.mxu0 0
    %2402 = vmatpush.bf16.msra.mxu0 0
    %2403 = vmatpush.bf16.msra.mxu0 0
    %2404 = vmatpush.bf16.msra.mxu0 %v2366
    %2405 = vmatpush.bf16.msra.mxu0 %v2365
    %2406 = vmatmul.bf16.gmra.mxu0 %v2396
    %v2407 = vpop.f32.mrf.mxu0
    %v2408 = vadd.f32 0.0, %v2407
    %v2409 = vpop.f32.mrf.mxu0
    %2410 = vdwg.mxu0
    %v2411 = vpack.c.bf16 %v2408, %v2408
    %s2412 = scalar_lea.vmem %s7, 32
    %v2413 = vld [vmem:[%s2412] sm:$0xf]
    %v2414 = vld [vmem:[%s2412 + $0x4] sm:$0xf]
    %v2415 = vld [vmem:[%s2412 + $0x8] sm:$0xf]
    %v2416 = vld [vmem:[%s2412 + $0xc] sm:$0xf]
    %v2417 = vld [vmem:[%s2412 + $0x10] sm:$0xf]
    %v2418 = vld [vmem:[%s2412 + $0x14] sm:$0xf]
    %v2419 = vld [vmem:[%s2412 + $0x18] sm:$0xf]
    %v2420 = vld [vmem:[%s2412 + $0x1c] sm:$0xf]
    %v2429 = vunpack.c.l.b16 %v2413
    %v2430 = vunpack.c.l.b16 %v2414
    %v2431 = vunpack.c.l.b16 %v2415
    %v2432 = vunpack.c.l.b16 %v2416
    %v2433 = vunpack.c.l.b16 %v2417
    %v2434 = vunpack.c.l.b16 %v2418
    %v2435 = vunpack.c.l.b16 %v2419
    %v2436 = vunpack.c.l.b16 %v2420
    %v2437 = vpack.c.b16 %v2430, %v2429
    %v2438 = vpack.c.b16 %v2432, %v2431
    %v2439 = vpack.c.b16 %v2434, %v2433
    %v2440 = vpack.c.b16 %v2436, %v2435
    %vm2445 = vcmask 523264
    %v2447 = vsel %vm2445, %v2411, 0
    %2449 = vmatpush.bf16.msra.mxu0 0
    %2450 = vmatpush.bf16.msra.mxu0 0
    %2451 = vmatpush.bf16.msra.mxu0 0
    %2452 = vmatpush.bf16.msra.mxu0 0
    %2453 = vmatpush.bf16.msra.mxu0 %v2440
    %2454 = vmatpush.bf16.msra.mxu0 %v2439
    %2455 = vmatpush.bf16.msra.mxu0 %v2438
    %2456 = vmatpush.bf16.msra.mxu0 %v2437
    %2457 = vmatmul.bf16.gmra.mxu0 %v2447
    %v2458 = vpop.f32.mrf.mxu0
    %v2459 = vadd.f32 0.0, %v2458
    %v2460 = vpop.f32.mrf.mxu0
    %2461 = vdwg.mxu0
    %v2470 = vunpack.c.l.b16 %v2385
    %v2471 = vunpack.c.l.b16 %v2386
    %v2472 = vunpack.c.l.b16 %v2387
    %v2473 = vunpack.c.l.b16 %v2388
    %v2474 = vunpack.c.l.b16 %v2389
    %v2475 = vunpack.c.l.b16 %v2390
    %v2476 = vunpack.c.l.b16 %v2391
    %v2477 = vunpack.c.l.b16 %v2392
    %v2478 = vpack.c.b16 %v2471, %v2470
    %v2479 = vpack.c.b16 %v2473, %v2472
    %v2480 = vpack.c.b16 %v2475, %v2474
    %v2481 = vpack.c.b16 %v2477, %v2476
    %v2487 = vsel %vm2445, %v2384, 0
    %2489 = vmatpush.bf16.msra.mxu0 0
    %2490 = vmatpush.bf16.msra.mxu0 0
    %2491 = vmatpush.bf16.msra.mxu0 0
    %2492 = vmatpush.bf16.msra.mxu0 0
    %2493 = vmatpush.bf16.msra.mxu0 %v2481
    %2494 = vmatpush.bf16.msra.mxu0 %v2480
    %2495 = vmatpush.bf16.msra.mxu0 %v2479
    %2496 = vmatpush.bf16.msra.mxu0 %v2478
    %2497 = vmatmul.bf16.gmra.mxu0 %v2487
    %v2498 = vpop.f32.mrf.mxu0
    %v2499 = vadd.f32 %v2459, %v2498
    %v2500 = vpop.f32.mrf.mxu0
    %2501 = vdwg.mxu0
    %s2502 = scalar_lea.vmem %s6, 8
    %v2503 = vld [vmem:[%s2502] sm:$0xf]
    %v2505 = vsel %vm680, %v2503, 0
    %2507 = vmatpush.bf16.msra.mxu0 0
    %2508 = vmatpush.bf16.msra.mxu0 0
    %2509 = vmatpush.bf16.msra.mxu0 0
    %2510 = vmatpush.bf16.msra.mxu0 0
    %2511 = vmatpush.bf16.msra.mxu0 0
    %2512 = vmatpush.bf16.msra.mxu0 0
    %2513 = vmatpush.bf16.msra.mxu0 %v2366
    %2514 = vmatpush.bf16.msra.mxu0 %v2365
    %2515 = vmatmul.bf16.gmra.mxu0 %v2505
    %v2516 = vpop.f32.mrf.mxu0
    %v2517 = vadd.f32 0.0, %v2516
    %v2518 = vpop.f32.mrf.mxu0
    %2519 = vdwg.mxu0
    %v2520 = vpack.c.bf16 %v2517, %v2517
    %s2521 = scalar_lea.vmem %s7, 64
    %v2522 = vld [vmem:[%s2521] sm:$0xf]
    %v2523 = vld [vmem:[%s2521 + $0x4] sm:$0xf]
    %v2524 = vld [vmem:[%s2521 + $0x8] sm:$0xf]
    %v2525 = vld [vmem:[%s2521 + $0xc] sm:$0xf]
    %v2526 = vld [vmem:[%s2521 + $0x10] sm:$0xf]
    %v2527 = vld [vmem:[%s2521 + $0x14] sm:$0xf]
    %v2528 = vld [vmem:[%s2521 + $0x18] sm:$0xf]
    %v2529 = vld [vmem:[%s2521 + $0x1c] sm:$0xf]
    %v2538 = vunpack.c.l.b16 %v2522
    %v2539 = vunpack.c.l.b16 %v2523
    %v2540 = vunpack.c.l.b16 %v2524
    %v2541 = vunpack.c.l.b16 %v2525
    %v2542 = vunpack.c.l.b16 %v2526
    %v2543 = vunpack.c.l.b16 %v2527
    %v2544 = vunpack.c.l.b16 %v2528
    %v2545 = vunpack.c.l.b16 %v2529
    %v2546 = vpack.c.b16 %v2539, %v2538
    %v2547 = vpack.c.b16 %v2541, %v2540
    %v2548 = vpack.c.b16 %v2543, %v2542
    %v2549 = vpack.c.b16 %v2545, %v2544
    %v2555 = vsel %vm2445, %v2520, 0
    %2557 = vmatpush.bf16.msra.mxu0 0
    %2558 = vmatpush.bf16.msra.mxu0 0
    %2559 = vmatpush.bf16.msra.mxu0 0
    %2560 = vmatpush.bf16.msra.mxu0 0
    %2561 = vmatpush.bf16.msra.mxu0 %v2549
    %2562 = vmatpush.bf16.msra.mxu0 %v2548
    %2563 = vmatpush.bf16.msra.mxu0 %v2547
    %2564 = vmatpush.bf16.msra.mxu0 %v2546
    %2565 = vmatmul.bf16.gmra.mxu0 %v2555
    %v2566 = vpop.f32.mrf.mxu0
    %v2567 = vadd.f32 0.0, %v2566
    %v2568 = vpop.f32.mrf.mxu0
    %2569 = vdwg.mxu0
    %v2570 = vadd.f32 %v2499, %v2567
    %s2571 = scalar_lea.vmem %s6, 12
    %v2572 = vld [vmem:[%s2571] sm:$0xf]
    %v2574 = vsel %vm680, %v2572, 0
    %2576 = vmatpush.bf16.msra.mxu0 0
    %2577 = vmatpush.bf16.msra.mxu0 0
    %2578 = vmatpush.bf16.msra.mxu0 0
    %2579 = vmatpush.bf16.msra.mxu0 0
    %2580 = vmatpush.bf16.msra.mxu0 0
    %2581 = vmatpush.bf16.msra.mxu0 0
    %2582 = vmatpush.bf16.msra.mxu0 %v2366
    %2583 = vmatpush.bf16.msra.mxu0 %v2365
    %2584 = vmatmul.bf16.gmra.mxu0 %v2574
    %v2585 = vpop.f32.mrf.mxu0
    %v2586 = vadd.f32 0.0, %v2585
    %v2587 = vpop.f32.mrf.mxu0
    %2588 = vdwg.mxu0
    %v2589 = vpack.c.bf16 %v2586, %v2586
    %s2590 = scalar_lea.vmem %s7, 96
    %v2591 = vld [vmem:[%s2590] sm:$0xf]
    %v2592 = vld [vmem:[%s2590 + $0x4] sm:$0xf]
    %v2593 = vld [vmem:[%s2590 + $0x8] sm:$0xf]
    %v2594 = vld [vmem:[%s2590 + $0xc] sm:$0xf]
    %v2595 = vld [vmem:[%s2590 + $0x10] sm:$0xf]
    %v2596 = vld [vmem:[%s2590 + $0x14] sm:$0xf]
    %v2597 = vld [vmem:[%s2590 + $0x18] sm:$0xf]
    %v2598 = vld [vmem:[%s2590 + $0x1c] sm:$0xf]
    %v2607 = vunpack.c.l.b16 %v2591
    %v2608 = vunpack.c.l.b16 %v2592
    %v2609 = vunpack.c.l.b16 %v2593
    %v2610 = vunpack.c.l.b16 %v2594
    %v2611 = vunpack.c.l.b16 %v2595
    %v2612 = vunpack.c.l.b16 %v2596
    %v2613 = vunpack.c.l.b16 %v2597
    %v2614 = vunpack.c.l.b16 %v2598
    %v2615 = vpack.c.b16 %v2608, %v2607
    %v2616 = vpack.c.b16 %v2610, %v2609
    %v2617 = vpack.c.b16 %v2612, %v2611
    %v2618 = vpack.c.b16 %v2614, %v2613
    %v2624 = vsel %vm2445, %v2589, 0
    %2626 = vmatpush.bf16.msra.mxu0 0
    %2627 = vmatpush.bf16.msra.mxu0 0
    %2628 = vmatpush.bf16.msra.mxu0 0
    %2629 = vmatpush.bf16.msra.mxu0 0
    %2630 = vmatpush.bf16.msra.mxu0 %v2618
    %2631 = vmatpush.bf16.msra.mxu0 %v2617
    %2632 = vmatpush.bf16.msra.mxu0 %v2616
    %2633 = vmatpush.bf16.msra.mxu0 %v2615
    %2634 = vmatmul.bf16.gmra.mxu0 %v2624
    %v2635 = vpop.f32.mrf.mxu0
    %v2636 = vadd.f32 0.0, %v2635
    %v2637 = vpop.f32.mrf.mxu0
    %2638 = vdwg.mxu0
    %v2639 = vadd.f32 %v2570, %v2636
    %s2640 = scalar_lea.vmem %s6, 16
    %v2641 = vld [vmem:[%s2640] sm:$0xf]
    %v2643 = vsel %vm680, %v2641, 0
    %2645 = vmatpush.bf16.msra.mxu0 0
    %2646 = vmatpush.bf16.msra.mxu0 0
    %2647 = vmatpush.bf16.msra.mxu0 0
    %2648 = vmatpush.bf16.msra.mxu0 0
    %2649 = vmatpush.bf16.msra.mxu0 0
    %2650 = vmatpush.bf16.msra.mxu0 0
    %2651 = vmatpush.bf16.msra.mxu0 %v2366
    %2652 = vmatpush.bf16.msra.mxu0 %v2365
    %2653 = vmatmul.bf16.gmra.mxu0 %v2643
    %v2654 = vpop.f32.mrf.mxu0
    %v2655 = vadd.f32 0.0, %v2654
    %v2656 = vpop.f32.mrf.mxu0
    %2657 = vdwg.mxu0
    %v2658 = vpack.c.bf16 %v2655, %v2655
    %s2659 = scalar_lea.vmem %s7, 128
    %v2660 = vld [vmem:[%s2659] sm:$0xf]
    %v2661 = vld [vmem:[%s2659 + $0x4] sm:$0xf]
    %v2662 = vld [vmem:[%s2659 + $0x8] sm:$0xf]
    %v2663 = vld [vmem:[%s2659 + $0xc] sm:$0xf]
    %v2664 = vld [vmem:[%s2659 + $0x10] sm:$0xf]
    %v2665 = vld [vmem:[%s2659 + $0x14] sm:$0xf]
    %v2666 = vld [vmem:[%s2659 + $0x18] sm:$0xf]
    %v2667 = vld [vmem:[%s2659 + $0x1c] sm:$0xf]
    %v2676 = vunpack.c.l.b16 %v2660
    %v2677 = vunpack.c.l.b16 %v2661
    %v2678 = vunpack.c.l.b16 %v2662
    %v2679 = vunpack.c.l.b16 %v2663
    %v2680 = vunpack.c.l.b16 %v2664
    %v2681 = vunpack.c.l.b16 %v2665
    %v2682 = vunpack.c.l.b16 %v2666
    %v2683 = vunpack.c.l.b16 %v2667
    %v2684 = vpack.c.b16 %v2677, %v2676
    %v2685 = vpack.c.b16 %v2679, %v2678
    %v2686 = vpack.c.b16 %v2681, %v2680
    %v2687 = vpack.c.b16 %v2683, %v2682
    %v2693 = vsel %vm2445, %v2658, 0
    %2695 = vmatpush.bf16.msra.mxu0 0
    %2696 = vmatpush.bf16.msra.mxu0 0
    %2697 = vmatpush.bf16.msra.mxu0 0
    %2698 = vmatpush.bf16.msra.mxu0 0
    %2699 = vmatpush.bf16.msra.mxu0 %v2687
    %2700 = vmatpush.bf16.msra.mxu0 %v2686
    %2701 = vmatpush.bf16.msra.mxu0 %v2685
    %2702 = vmatpush.bf16.msra.mxu0 %v2684
    %2703 = vmatmul.bf16.gmra.mxu0 %v2693
    %v2704 = vpop.f32.mrf.mxu0
    %v2705 = vadd.f32 0.0, %v2704
    %v2706 = vpop.f32.mrf.mxu0
    %2707 = vdwg.mxu0
    %v2708 = vadd.f32 %v2639, %v2705
    %s2709 = scalar_lea.vmem %s6, 20
    %v2710 = vld [vmem:[%s2709] sm:$0xf]
    %v2712 = vsel %vm680, %v2710, 0
    %2714 = vmatpush.bf16.msra.mxu0 0
    %2715 = vmatpush.bf16.msra.mxu0 0
    %2716 = vmatpush.bf16.msra.mxu0 0
    %2717 = vmatpush.bf16.msra.mxu0 0
    %2718 = vmatpush.bf16.msra.mxu0 0
    %2719 = vmatpush.bf16.msra.mxu0 0
    %2720 = vmatpush.bf16.msra.mxu0 %v2366
    %2721 = vmatpush.bf16.msra.mxu0 %v2365
    %2722 = vmatmul.bf16.gmra.mxu0 %v2712
    %v2723 = vpop.f32.mrf.mxu0
    %v2724 = vadd.f32 0.0, %v2723
    %v2725 = vpop.f32.mrf.mxu0
    %2726 = vdwg.mxu0
    %v2727 = vpack.c.bf16 %v2724, %v2724
    %s2728 = scalar_lea.vmem %s7, 160
    %v2729 = vld [vmem:[%s2728] sm:$0xf]
    %v2730 = vld [vmem:[%s2728 + $0x4] sm:$0xf]
    %v2731 = vld [vmem:[%s2728 + $0x8] sm:$0xf]
    %v2732 = vld [vmem:[%s2728 + $0xc] sm:$0xf]
    %v2733 = vld [vmem:[%s2728 + $0x10] sm:$0xf]
    %v2734 = vld [vmem:[%s2728 + $0x14] sm:$0xf]
    %v2735 = vld [vmem:[%s2728 + $0x18] sm:$0xf]
    %v2736 = vld [vmem:[%s2728 + $0x1c] sm:$0xf]
    %v2745 = vunpack.c.l.b16 %v2729
    %v2746 = vunpack.c.l.b16 %v2730
    %v2747 = vunpack.c.l.b16 %v2731
    %v2748 = vunpack.c.l.b16 %v2732
    %v2749 = vunpack.c.l.b16 %v2733
    %v2750 = vunpack.c.l.b16 %v2734
    %v2751 = vunpack.c.l.b16 %v2735
    %v2752 = vunpack.c.l.b16 %v2736
    %v2753 = vpack.c.b16 %v2746, %v2745
    %v2754 = vpack.c.b16 %v2748, %v2747
    %v2755 = vpack.c.b16 %v2750, %v2749
    %v2756 = vpack.c.b16 %v2752, %v2751
    %v2762 = vsel %vm2445, %v2727, 0
    %2764 = vmatpush.bf16.msra.mxu0 0
    %2765 = vmatpush.bf16.msra.mxu0 0
    %2766 = vmatpush.bf16.msra.mxu0 0
    %2767 = vmatpush.bf16.msra.mxu0 0
    %2768 = vmatpush.bf16.msra.mxu0 %v2756
    %2769 = vmatpush.bf16.msra.mxu0 %v2755
    %2770 = vmatpush.bf16.msra.mxu0 %v2754
    %2771 = vmatpush.bf16.msra.mxu0 %v2753
    %2772 = vmatmul.bf16.gmra.mxu0 %v2762
    %v2773 = vpop.f32.mrf.mxu0
    %v2774 = vadd.f32 0.0, %v2773
    %v2775 = vpop.f32.mrf.mxu0
    %2776 = vdwg.mxu0
    %v2777 = vadd.f32 %v2708, %v2774
    %s2778 = scalar_lea.vmem %s6, 24
    %v2779 = vld [vmem:[%s2778] sm:$0xf]
    %v2781 = vsel %vm680, %v2779, 0
    %2783 = vmatpush.bf16.msra.mxu0 0
    %2784 = vmatpush.bf16.msra.mxu0 0
    %2785 = vmatpush.bf16.msra.mxu0 0
    %2786 = vmatpush.bf16.msra.mxu0 0
    %2787 = vmatpush.bf16.msra.mxu0 0
    %2788 = vmatpush.bf16.msra.mxu0 0
    %2789 = vmatpush.bf16.msra.mxu0 %v2366
    %2790 = vmatpush.bf16.msra.mxu0 %v2365
    %2791 = vmatmul.bf16.gmra.mxu0 %v2781
    %v2792 = vpop.f32.mrf.mxu0
    %v2793 = vadd.f32 0.0, %v2792
    %v2794 = vpop.f32.mrf.mxu0
    %2795 = vdwg.mxu0
    %v2796 = vpack.c.bf16 %v2793, %v2793
    %s2797 = scalar_lea.vmem %s7, 192
    %v2798 = vld [vmem:[%s2797] sm:$0xf]
    %v2799 = vld [vmem:[%s2797 + $0x4] sm:$0xf]
    %v2800 = vld [vmem:[%s2797 + $0x8] sm:$0xf]
    %v2801 = vld [vmem:[%s2797 + $0xc] sm:$0xf]
    %v2802 = vld [vmem:[%s2797 + $0x10] sm:$0xf]
    %v2803 = vld [vmem:[%s2797 + $0x14] sm:$0xf]
    %v2804 = vld [vmem:[%s2797 + $0x18] sm:$0xf]
    %v2805 = vld [vmem:[%s2797 + $0x1c] sm:$0xf]
    %v2814 = vunpack.c.l.b16 %v2798
    %v2815 = vunpack.c.l.b16 %v2799
    %v2816 = vunpack.c.l.b16 %v2800
    %v2817 = vunpack.c.l.b16 %v2801
    %v2818 = vunpack.c.l.b16 %v2802
    %v2819 = vunpack.c.l.b16 %v2803
    %v2820 = vunpack.c.l.b16 %v2804
    %v2821 = vunpack.c.l.b16 %v2805
    %v2822 = vpack.c.b16 %v2815, %v2814
    %v2823 = vpack.c.b16 %v2817, %v2816
    %v2824 = vpack.c.b16 %v2819, %v2818
    %v2825 = vpack.c.b16 %v2821, %v2820
    %v2831 = vsel %vm2445, %v2796, 0
    %2833 = vmatpush.bf16.msra.mxu0 0
    %2834 = vmatpush.bf16.msra.mxu0 0
    %2835 = vmatpush.bf16.msra.mxu0 0
    %2836 = vmatpush.bf16.msra.mxu0 0
    %2837 = vmatpush.bf16.msra.mxu0 %v2825
    %2838 = vmatpush.bf16.msra.mxu0 %v2824
    %2839 = vmatpush.bf16.msra.mxu0 %v2823
    %2840 = vmatpush.bf16.msra.mxu0 %v2822
    %2841 = vmatmul.bf16.gmra.mxu0 %v2831
    %v2842 = vpop.f32.mrf.mxu0
    %v2843 = vadd.f32 0.0, %v2842
    %v2844 = vpop.f32.mrf.mxu0
    %2845 = vdwg.mxu0
    %v2846 = vadd.f32 %v2777, %v2843
    %s2847 = scalar_lea.vmem %s6, 28
    %v2848 = vld [vmem:[%s2847] sm:$0xf]
    %v2850 = vsel %vm680, %v2848, 0
    %2852 = vmatpush.bf16.msra.mxu0 0
    %2853 = vmatpush.bf16.msra.mxu0 0
    %2854 = vmatpush.bf16.msra.mxu0 0
    %2855 = vmatpush.bf16.msra.mxu0 0
    %2856 = vmatpush.bf16.msra.mxu0 0
    %2857 = vmatpush.bf16.msra.mxu0 0
    %2858 = vmatpush.bf16.msra.mxu0 %v2366
    %2859 = vmatpush.bf16.msra.mxu0 %v2365
    %2860 = vmatmul.bf16.gmra.mxu0 %v2850
    %v2861 = vpop.f32.mrf.mxu0
    %v2862 = vadd.f32 0.0, %v2861
    %v2863 = vpop.f32.mrf.mxu0
    %2864 = vdwg.mxu0
    %v2865 = vpack.c.bf16 %v2862, %v2862
    %s2866 = scalar_lea.vmem %s7, 224
    %v2867 = vld [vmem:[%s2866] sm:$0xf]
    %v2868 = vld [vmem:[%s2866 + $0x4] sm:$0xf]
    %v2869 = vld [vmem:[%s2866 + $0x8] sm:$0xf]
    %v2870 = vld [vmem:[%s2866 + $0xc] sm:$0xf]
    %v2871 = vld [vmem:[%s2866 + $0x10] sm:$0xf]
    %v2872 = vld [vmem:[%s2866 + $0x14] sm:$0xf]
    %v2873 = vld [vmem:[%s2866 + $0x18] sm:$0xf]
    %v2874 = vld [vmem:[%s2866 + $0x1c] sm:$0xf]
    %v2883 = vunpack.c.l.b16 %v2867
    %v2884 = vunpack.c.l.b16 %v2868
    %v2885 = vunpack.c.l.b16 %v2869
    %v2886 = vunpack.c.l.b16 %v2870
    %v2887 = vunpack.c.l.b16 %v2871
    %v2888 = vunpack.c.l.b16 %v2872
    %v2889 = vunpack.c.l.b16 %v2873
    %v2890 = vunpack.c.l.b16 %v2874
    %v2891 = vpack.c.b16 %v2884, %v2883
    %v2892 = vpack.c.b16 %v2886, %v2885
    %v2893 = vpack.c.b16 %v2888, %v2887
    %v2894 = vpack.c.b16 %v2890, %v2889
    %v2900 = vsel %vm2445, %v2865, 0
    %2902 = vmatpush.bf16.msra.mxu0 0
    %2903 = vmatpush.bf16.msra.mxu0 0
    %2904 = vmatpush.bf16.msra.mxu0 0
    %2905 = vmatpush.bf16.msra.mxu0 0
    %2906 = vmatpush.bf16.msra.mxu0 %v2894
    %2907 = vmatpush.bf16.msra.mxu0 %v2893
    %2908 = vmatpush.bf16.msra.mxu0 %v2892
    %2909 = vmatpush.bf16.msra.mxu0 %v2891
    %2910 = vmatmul.bf16.gmra.mxu0 %v2900
    %v2911 = vpop.f32.mrf.mxu0
    %v2912 = vadd.f32 0.0, %v2911
    %v2913 = vpop.f32.mrf.mxu0
    %2914 = vdwg.mxu0
    %v2915 = vadd.f32 %v2846, %v2912
    %s2916 = scalar_lea.vmem %s6, 32
    %v2917 = vld [vmem:[%s2916] sm:$0xf]
    %v2919 = vsel %vm680, %v2917, 0
    %2921 = vmatpush.bf16.msra.mxu0 0
    %2922 = vmatpush.bf16.msra.mxu0 0
    %2923 = vmatpush.bf16.msra.mxu0 0
    %2924 = vmatpush.bf16.msra.mxu0 0
    %2925 = vmatpush.bf16.msra.mxu0 0
    %2926 = vmatpush.bf16.msra.mxu0 0
    %2927 = vmatpush.bf16.msra.mxu0 %v2366
    %2928 = vmatpush.bf16.msra.mxu0 %v2365
    %2929 = vmatmul.bf16.gmra.mxu0 %v2919
    %v2930 = vpop.f32.mrf.mxu0
    %v2931 = vadd.f32 0.0, %v2930
    %v2932 = vpop.f32.mrf.mxu0
    %2933 = vdwg.mxu0
    %v2934 = vpack.c.bf16 %v2931, %v2931
    %s2935 = scalar_lea.vmem %s7, 256
    %v2936 = vld [vmem:[%s2935] sm:$0xf]
    %v2937 = vld [vmem:[%s2935 + $0x4] sm:$0xf]
    %v2938 = vld [vmem:[%s2935 + $0x8] sm:$0xf]
    %v2939 = vld [vmem:[%s2935 + $0xc] sm:$0xf]
    %v2940 = vld [vmem:[%s2935 + $0x10] sm:$0xf]
    %v2941 = vld [vmem:[%s2935 + $0x14] sm:$0xf]
    %v2942 = vld [vmem:[%s2935 + $0x18] sm:$0xf]
    %v2943 = vld [vmem:[%s2935 + $0x1c] sm:$0xf]
    %v2952 = vunpack.c.l.b16 %v2936
    %v2953 = vunpack.c.l.b16 %v2937
    %v2954 = vunpack.c.l.b16 %v2938
    %v2955 = vunpack.c.l.b16 %v2939
    %v2956 = vunpack.c.l.b16 %v2940
    %v2957 = vunpack.c.l.b16 %v2941
    %v2958 = vunpack.c.l.b16 %v2942
    %v2959 = vunpack.c.l.b16 %v2943
    %v2960 = vpack.c.b16 %v2953, %v2952
    %v2961 = vpack.c.b16 %v2955, %v2954
    %v2962 = vpack.c.b16 %v2957, %v2956
    %v2963 = vpack.c.b16 %v2959, %v2958
    %v2969 = vsel %vm2445, %v2934, 0
    %2971 = vmatpush.bf16.msra.mxu0 0
    %2972 = vmatpush.bf16.msra.mxu0 0
    %2973 = vmatpush.bf16.msra.mxu0 0
    %2974 = vmatpush.bf16.msra.mxu0 0
    %2975 = vmatpush.bf16.msra.mxu0 %v2963
    %2976 = vmatpush.bf16.msra.mxu0 %v2962
    %2977 = vmatpush.bf16.msra.mxu0 %v2961
    %2978 = vmatpush.bf16.msra.mxu0 %v2960
    %2979 = vmatmul.bf16.gmra.mxu0 %v2969
    %v2980 = vpop.f32.mrf.mxu0
    %v2981 = vadd.f32 0.0, %v2980
    %v2982 = vpop.f32.mrf.mxu0
    %2983 = vdwg.mxu0
    %v2984 = vadd.f32 %v2915, %v2981
    %v2985 = vld [vmem:[%s8] sm:$0x1]
    %v2987 = vperm.slane %v2985, 0
    %v2989 = vadd.f32 %v2984, %v2987
    %v2990 = vmax.f32 %v2989, 0.0
    %v2991 = vpack.c.bf16 %v2990, %v2990
    %v2992 = vld [vmem:[%s9] sm:$0x1]
    %vm2993 = vcmask 64512
    %v2995 = vsel %vm2993, %v2992, 0
    %v2998 = vsel %vm546, %v2991, 0
    %3000 = vmatpush.bf16.msra.mxu0 0
    %3001 = vmatpush.bf16.msra.mxu0 0
    %3002 = vmatpush.bf16.msra.mxu0 0
    %3003 = vmatpush.bf16.msra.mxu0 0
    %3004 = vmatpush.bf16.msra.mxu0 0
    %3005 = vmatpush.bf16.msra.mxu0 0
    %3006 = vmatpush.bf16.msra.mxu0 0
    %3007 = vmatpush.bf16.msra.mxu0 %v2998
    %3008 = vmatmul.bf16.gmra.mxu0 %v2995
    %v3009 = vpop.f32.mrf.mxu0
    %v3010 = vadd.f32 0.0, %v3009
    %v3011 = vpop.f32.mrf.mxu0
    %3012 = vdwg.mxu0
    %v3013 = vpack.c.bf16 %v3010, %v3010
    %v3014 = vld [vmem:[%s10] sm:$0xff]
    %v3015 = vld [vmem:[%s10 + $0x8] sm:$0xff]
    %v3016 = vld [vmem:[%s10 + $0x10] sm:$0xff]
    %v3017 = vld [vmem:[%s10 + $0x18] sm:$0xff]
    %v3018 = vld [vmem:[%s10 + $0x20] sm:$0xff]
    %v3019 = vld [vmem:[%s10 + $0x28] sm:$0xff]
    %v3020 = vld [vmem:[%s10 + $0x30] sm:$0xff]
    %v3021 = vld [vmem:[%s10 + $0x38] sm:$0xff]
    %v3022 = vld [vmem:[%s10 + $0x40] sm:$0xff]
    %v3023 = vld [vmem:[%s10 + $0x48] sm:$0xff]
    %v3024 = vld [vmem:[%s10 + $0x50] sm:$0xff]
    %v3025 = vld [vmem:[%s10 + $0x58] sm:$0xff]
    %v3026 = vld [vmem:[%s10 + $0x60] sm:$0xff]
    %v3027 = vld [vmem:[%s10 + $0x68] sm:$0xff]
    %v3028 = vld [vmem:[%s10 + $0x70] sm:$0xff]
    %v3029 = vld [vmem:[%s10 + $0x78] sm:$0xff]
    %s3030 = scalar_lea.vmem %s9, 1
    %v3031 = vld [vmem:[%s3030] sm:$0x1]
    %v3033 = vsel %vm2993, %v3031, 0
    %3035 = vmatpush.bf16.msra.mxu0 0
    %3036 = vmatpush.bf16.msra.mxu0 0
    %3037 = vmatpush.bf16.msra.mxu0 0
    %3038 = vmatpush.bf16.msra.mxu0 0
    %3039 = vmatpush.bf16.msra.mxu0 0
    %3040 = vmatpush.bf16.msra.mxu0 0
    %3041 = vmatpush.bf16.msra.mxu0 0
    %3042 = vmatpush.bf16.msra.mxu0 %v2998
    %3043 = vmatmul.bf16.gmra.mxu0 %v3033
    %v3044 = vpop.f32.mrf.mxu0
    %v3045 = vadd.f32 0.0, %v3044
    %v3046 = vpop.f32.mrf.mxu0
    %3047 = vdwg.mxu0
    %v3048 = vpack.c.bf16 %v3045, %v3045
    %s3049 = scalar_lea.vmem %s10, 128
    %v3050 = vld [vmem:[%s3049] sm:$0xff]
    %v3051 = vld [vmem:[%s3049 + $0x8] sm:$0xff]
    %v3052 = vld [vmem:[%s3049 + $0x10] sm:$0xff]
    %v3053 = vld [vmem:[%s3049 + $0x18] sm:$0xff]
    %v3054 = vld [vmem:[%s3049 + $0x20] sm:$0xff]
    %v3055 = vld [vmem:[%s3049 + $0x28] sm:$0xff]
    %v3056 = vld [vmem:[%s3049 + $0x30] sm:$0xff]
    %v3057 = vld [vmem:[%s3049 + $0x38] sm:$0xff]
    %v3058 = vld [vmem:[%s3049 + $0x40] sm:$0xff]
    %v3059 = vld [vmem:[%s3049 + $0x48] sm:$0xff]
    %v3060 = vld [vmem:[%s3049 + $0x50] sm:$0xff]
    %v3061 = vld [vmem:[%s3049 + $0x58] sm:$0xff]
    %v3062 = vld [vmem:[%s3049 + $0x60] sm:$0xff]
    %v3063 = vld [vmem:[%s3049 + $0x68] sm:$0xff]
    %v3064 = vld [vmem:[%s3049 + $0x70] sm:$0xff]
    %v3065 = vld [vmem:[%s3049 + $0x78] sm:$0xff]
    %v3082 = vunpack.c.l.b16 %v3050
    %v3083 = vunpack.c.h.b16 %v3050
    %v3084 = vunpack.c.l.b16 %v3051
    %v3085 = vunpack.c.h.b16 %v3051
    %v3086 = vunpack.c.l.b16 %v3052
    %v3087 = vunpack.c.h.b16 %v3052
    %v3088 = vunpack.c.l.b16 %v3053
    %v3089 = vunpack.c.h.b16 %v3053
    %v3090 = vunpack.c.l.b16 %v3054
    %v3091 = vunpack.c.h.b16 %v3054
    %v3092 = vunpack.c.l.b16 %v3055
    %v3093 = vunpack.c.h.b16 %v3055
    %v3094 = vunpack.c.l.b16 %v3056
    %v3095 = vunpack.c.h.b16 %v3056
    %v3096 = vunpack.c.l.b16 %v3057
    %v3097 = vunpack.c.h.b16 %v3057
    %v3098 = vunpack.c.l.b16 %v3058
    %v3099 = vunpack.c.h.b16 %v3058
    %v3100 = vunpack.c.l.b16 %v3059
    %v3101 = vunpack.c.h.b16 %v3059
    %v3102 = vunpack.c.l.b16 %v3060
    %v3103 = vunpack.c.h.b16 %v3060
    %v3104 = vunpack.c.l.b16 %v3061
    %v3105 = vunpack.c.h.b16 %v3061
    %v3106 = vunpack.c.l.b16 %v3062
    %v3107 = vunpack.c.h.b16 %v3062
    %v3108 = vunpack.c.l.b16 %v3063
    %v3109 = vunpack.c.h.b16 %v3063
    %v3110 = vunpack.c.l.b16 %v3064
    %v3111 = vunpack.c.h.b16 %v3064
    %v3112 = vunpack.c.l.b16 %v3065
    %v3113 = vunpack.c.h.b16 %v3065
    %v3114 = vpack.c.b16 %v3086, %v3082
    %v3115 = vpack.c.b16 %v3087, %v3083
    %v3116 = vpack.c.b16 %v3088, %v3084
    %v3117 = vpack.c.b16 %v3089, %v3085
    %v3118 = vpack.c.b16 %v3094, %v3090
    %v3119 = vpack.c.b16 %v3095, %v3091
    %v3120 = vpack.c.b16 %v3096, %v3092
    %v3121 = vpack.c.b16 %v3097, %v3093
    %v3122 = vpack.c.b16 %v3102, %v3098
    %v3123 = vpack.c.b16 %v3103, %v3099
    %v3124 = vpack.c.b16 %v3104, %v3100
    %v3125 = vpack.c.b16 %v3105, %v3101
    %v3126 = vpack.c.b16 %v3110, %v3106
    %v3127 = vpack.c.b16 %v3111, %v3107
    %v3128 = vpack.c.b16 %v3112, %v3108
    %v3129 = vpack.c.b16 %v3113, %v3109
    %v3147 = vsel %vm2445, %v3048, 0
    %3149 = vmatpush.bf16.msra.mxu0 0
    %3150 = vmatpush.bf16.msra.mxu0 0
    %3151 = vmatpush.bf16.msra.mxu0 0
    %3152 = vmatpush.bf16.msra.mxu0 0
    %3153 = vmatpush.bf16.msra.mxu0 %v3126
    %3154 = vmatpush.bf16.msra.mxu0 %v3122
    %3155 = vmatpush.bf16.msra.mxu0 %v3118
    %3156 = vmatpush.bf16.msra.mxu0 %v3114
    %3157 = vmatmul.bf16.gmra.mxu0 %v3147
    %v3158 = vpop.f32.mrf.mxu0
    %v3159 = vadd.f32 0.0, %v3158
    %v3160 = vpop.f32.mrf.mxu0
    %3161 = vdwg.mxu0
    %3162 = vmatpush.bf16.msra.mxu0 0
    %3163 = vmatpush.bf16.msra.mxu0 0
    %3164 = vmatpush.bf16.msra.mxu0 0
    %3165 = vmatpush.bf16.msra.mxu0 0
    %3166 = vmatpush.bf16.msra.mxu0 %v3127
    %3167 = vmatpush.bf16.msra.mxu0 %v3123
    %3168 = vmatpush.bf16.msra.mxu0 %v3119
    %3169 = vmatpush.bf16.msra.mxu0 %v3115
    %3170 = vmatmul.bf16.gmra.mxu0 %v3147
    %v3171 = vpop.f32.mrf.mxu0
    %v3172 = vadd.f32 0.0, %v3171
    %v3173 = vpop.f32.mrf.mxu0
    %3174 = vdwg.mxu0
    %3175 = vmatpush.bf16.msra.mxu0 0
    %3176 = vmatpush.bf16.msra.mxu0 0
    %3177 = vmatpush.bf16.msra.mxu0 0
    %3178 = vmatpush.bf16.msra.mxu0 0
    %3179 = vmatpush.bf16.msra.mxu0 %v3128
    %3180 = vmatpush.bf16.msra.mxu0 %v3124
    %3181 = vmatpush.bf16.msra.mxu0 %v3120
    %3182 = vmatpush.bf16.msra.mxu0 %v3116
    %3183 = vmatmul.bf16.gmra.mxu0 %v3147
    %v3184 = vpop.f32.mrf.mxu0
    %v3185 = vadd.f32 0.0, %v3184
    %v3186 = vpop.f32.mrf.mxu0
    %3187 = vdwg.mxu0
    %3188 = vmatpush.bf16.msra.mxu0 0
    %3189 = vmatpush.bf16.msra.mxu0 0
    %3190 = vmatpush.bf16.msra.mxu0 0
    %3191 = vmatpush.bf16.msra.mxu0 0
    %3192 = vmatpush.bf16.msra.mxu0 %v3129
    %3193 = vmatpush.bf16.msra.mxu0 %v3125
    %3194 = vmatpush.bf16.msra.mxu0 %v3121
    %3195 = vmatpush.bf16.msra.mxu0 %v3117
    %3196 = vmatmul.bf16.gmra.mxu0 %v3147
    %v3197 = vpop.f32.mrf.mxu0
    %v3198 = vadd.f32 0.0, %v3197
    %v3199 = vpop.f32.mrf.mxu0
    %3200 = vdwg.mxu0
    %v3217 = vunpack.c.l.b16 %v3014
    %v3218 = vunpack.c.h.b16 %v3014
    %v3219 = vunpack.c.l.b16 %v3015
    %v3220 = vunpack.c.h.b16 %v3015
    %v3221 = vunpack.c.l.b16 %v3016
    %v3222 = vunpack.c.h.b16 %v3016
    %v3223 = vunpack.c.l.b16 %v3017
    %v3224 = vunpack.c.h.b16 %v3017
    %v3225 = vunpack.c.l.b16 %v3018
    %v3226 = vunpack.c.h.b16 %v3018
    %v3227 = vunpack.c.l.b16 %v3019
    %v3228 = vunpack.c.h.b16 %v3019
    %v3229 = vunpack.c.l.b16 %v3020
    %v3230 = vunpack.c.h.b16 %v3020
    %v3231 = vunpack.c.l.b16 %v3021
    %v3232 = vunpack.c.h.b16 %v3021
    %v3233 = vunpack.c.l.b16 %v3022
    %v3234 = vunpack.c.h.b16 %v3022
    %v3235 = vunpack.c.l.b16 %v3023
    %v3236 = vunpack.c.h.b16 %v3023
    %v3237 = vunpack.c.l.b16 %v3024
    %v3238 = vunpack.c.h.b16 %v3024
    %v3239 = vunpack.c.l.b16 %v3025
    %v3240 = vunpack.c.h.b16 %v3025
    %v3241 = vunpack.c.l.b16 %v3026
    %v3242 = vunpack.c.h.b16 %v3026
    %v3243 = vunpack.c.l.b16 %v3027
    %v3244 = vunpack.c.h.b16 %v3027
    %v3245 = vunpack.c.l.b16 %v3028
    %v3246 = vunpack.c.h.b16 %v3028
    %v3247 = vunpack.c.l.b16 %v3029
    %v3248 = vunpack.c.h.b16 %v3029
    %v3249 = vpack.c.b16 %v3221, %v3217
    %v3250 = vpack.c.b16 %v3222, %v3218
    %v3251 = vpack.c.b16 %v3223, %v3219
    %v3252 = vpack.c.b16 %v3224, %v3220
    %v3253 = vpack.c.b16 %v3229, %v3225
    %v3254 = vpack.c.b16 %v3230, %v3226
    %v3255 = vpack.c.b16 %v3231, %v3227
    %v3256 = vpack.c.b16 %v3232, %v3228
    %v3257 = vpack.c.b16 %v3237, %v3233
    %v3258 = vpack.c.b16 %v3238, %v3234
    %v3259 = vpack.c.b16 %v3239, %v3235
    %v3260 = vpack.c.b16 %v3240, %v3236
    %v3261 = vpack.c.b16 %v3245, %v3241
    %v3262 = vpack.c.b16 %v3246, %v3242
    %v3263 = vpack.c.b16 %v3247, %v3243
    %v3264 = vpack.c.b16 %v3248, %v3244
    %v3282 = vsel %vm2445, %v3013, 0
    %3284 = vmatpush.bf16.msra.mxu0 0
    %3285 = vmatpush.bf16.msra.mxu0 0
    %3286 = vmatpush.bf16.msra.mxu0 0
    %3287 = vmatpush.bf16.msra.mxu0 0
    %3288 = vmatpush.bf16.msra.mxu0 %v3261
    %3289 = vmatpush.bf16.msra.mxu0 %v3257
    %3290 = vmatpush.bf16.msra.mxu0 %v3253
    %3291 = vmatpush.bf16.msra.mxu0 %v3249
    %3292 = vmatmul.bf16.gmra.mxu0 %v3282
    %v3293 = vpop.f32.mrf.mxu0
    %v3294 = vadd.f32 %v3159, %v3293
    %v3295 = vpop.f32.mrf.mxu0
    %3296 = vdwg.mxu0
    %3297 = vmatpush.bf16.msra.mxu0 0
    %3298 = vmatpush.bf16.msra.mxu0 0
    %3299 = vmatpush.bf16.msra.mxu0 0
    %3300 = vmatpush.bf16.msra.mxu0 0
    %3301 = vmatpush.bf16.msra.mxu0 %v3262
    %3302 = vmatpush.bf16.msra.mxu0 %v3258
    %3303 = vmatpush.bf16.msra.mxu0 %v3254
    %3304 = vmatpush.bf16.msra.mxu0 %v3250
    %3305 = vmatmul.bf16.gmra.mxu0 %v3282
    %v3306 = vpop.f32.mrf.mxu0
    %v3307 = vadd.f32 %v3172, %v3306
    %v3308 = vpop.f32.mrf.mxu0
    %3309 = vdwg.mxu0
    %3310 = vmatpush.bf16.msra.mxu0 0
    %3311 = vmatpush.bf16.msra.mxu0 0
    %3312 = vmatpush.bf16.msra.mxu0 0
    %3313 = vmatpush.bf16.msra.mxu0 0
    %3314 = vmatpush.bf16.msra.mxu0 %v3263
    %3315 = vmatpush.bf16.msra.mxu0 %v3259
    %3316 = vmatpush.bf16.msra.mxu0 %v3255
    %3317 = vmatpush.bf16.msra.mxu0 %v3251
    %3318 = vmatmul.bf16.gmra.mxu0 %v3282
    %v3319 = vpop.f32.mrf.mxu0
    %v3320 = vadd.f32 %v3185, %v3319
    %v3321 = vpop.f32.mrf.mxu0
    %3322 = vdwg.mxu0
    %3323 = vmatpush.bf16.msra.mxu0 0
    %3324 = vmatpush.bf16.msra.mxu0 0
    %3325 = vmatpush.bf16.msra.mxu0 0
    %3326 = vmatpush.bf16.msra.mxu0 0
    %3327 = vmatpush.bf16.msra.mxu0 %v3264
    %3328 = vmatpush.bf16.msra.mxu0 %v3260
    %3329 = vmatpush.bf16.msra.mxu0 %v3256
    %3330 = vmatpush.bf16.msra.mxu0 %v3252
    %3331 = vmatmul.bf16.gmra.mxu0 %v3282
    %v3332 = vpop.f32.mrf.mxu0
    %v3333 = vadd.f32 %v3198, %v3332
    %v3334 = vpop.f32.mrf.mxu0
    %3335 = vdwg.mxu0
    %s3336 = scalar_lea.vmem %s9, 2
    %v3337 = vld [vmem:[%s3336] sm:$0x1]
    %v3339 = vsel %vm2993, %v3337, 0
    %3341 = vmatpush.bf16.msra.mxu0 0
    %3342 = vmatpush.bf16.msra.mxu0 0
    %3343 = vmatpush.bf16.msra.mxu0 0
    %3344 = vmatpush.bf16.msra.mxu0 0
    %3345 = vmatpush.bf16.msra.mxu0 0
    %3346 = vmatpush.bf16.msra.mxu0 0
    %3347 = vmatpush.bf16.msra.mxu0 0
    %3348 = vmatpush.bf16.msra.mxu0 %v2998
    %3349 = vmatmul.bf16.gmra.mxu0 %v3339
    %v3350 = vpop.f32.mrf.mxu0
    %v3351 = vadd.f32 0.0, %v3350
    %v3352 = vpop.f32.mrf.mxu0
    %3353 = vdwg.mxu0
    %v3354 = vpack.c.bf16 %v3351, %v3351
    %s3355 = scalar_lea.vmem %s10, 256
    %v3356 = vld [vmem:[%s3355] sm:$0xff]
    %v3357 = vld [vmem:[%s3355 + $0x8] sm:$0xff]
    %v3358 = vld [vmem:[%s3355 + $0x10] sm:$0xff]
    %v3359 = vld [vmem:[%s3355 + $0x18] sm:$0xff]
    %v3360 = vld [vmem:[%s3355 + $0x20] sm:$0xff]
    %v3361 = vld [vmem:[%s3355 + $0x28] sm:$0xff]
    %v3362 = vld [vmem:[%s3355 + $0x30] sm:$0xff]
    %v3363 = vld [vmem:[%s3355 + $0x38] sm:$0xff]
    %v3364 = vld [vmem:[%s3355 + $0x40] sm:$0xff]
    %v3365 = vld [vmem:[%s3355 + $0x48] sm:$0xff]
    %v3366 = vld [vmem:[%s3355 + $0x50] sm:$0xff]
    %v3367 = vld [vmem:[%s3355 + $0x58] sm:$0xff]
    %v3368 = vld [vmem:[%s3355 + $0x60] sm:$0xff]
    %v3369 = vld [vmem:[%s3355 + $0x68] sm:$0xff]
    %v3370 = vld [vmem:[%s3355 + $0x70] sm:$0xff]
    %v3371 = vld [vmem:[%s3355 + $0x78] sm:$0xff]
    %v3388 = vunpack.c.l.b16 %v3356
    %v3389 = vunpack.c.h.b16 %v3356
    %v3390 = vunpack.c.l.b16 %v3357
    %v3391 = vunpack.c.h.b16 %v3357
    %v3392 = vunpack.c.l.b16 %v3358
    %v3393 = vunpack.c.h.b16 %v3358
    %v3394 = vunpack.c.l.b16 %v3359
    %v3395 = vunpack.c.h.b16 %v3359
    %v3396 = vunpack.c.l.b16 %v3360
    %v3397 = vunpack.c.h.b16 %v3360
    %v3398 = vunpack.c.l.b16 %v3361
    %v3399 = vunpack.c.h.b16 %v3361
    %v3400 = vunpack.c.l.b16 %v3362
    %v3401 = vunpack.c.h.b16 %v3362
    %v3402 = vunpack.c.l.b16 %v3363
    %v3403 = vunpack.c.h.b16 %v3363
    %v3404 = vunpack.c.l.b16 %v3364
    %v3405 = vunpack.c.h.b16 %v3364
    %v3406 = vunpack.c.l.b16 %v3365
    %v3407 = vunpack.c.h.b16 %v3365
    %v3408 = vunpack.c.l.b16 %v3366
    %v3409 = vunpack.c.h.b16 %v3366
    %v3410 = vunpack.c.l.b16 %v3367
    %v3411 = vunpack.c.h.b16 %v3367
    %v3412 = vunpack.c.l.b16 %v3368
    %v3413 = vunpack.c.h.b16 %v3368
    %v3414 = vunpack.c.l.b16 %v3369
    %v3415 = vunpack.c.h.b16 %v3369
    %v3416 = vunpack.c.l.b16 %v3370
    %v3417 = vunpack.c.h.b16 %v3370
    %v3418 = vunpack.c.l.b16 %v3371
    %v3419 = vunpack.c.h.b16 %v3371
    %v3420 = vpack.c.b16 %v3392, %v3388
    %v3421 = vpack.c.b16 %v3393, %v3389
    %v3422 = vpack.c.b16 %v3394, %v3390
    %v3423 = vpack.c.b16 %v3395, %v3391
    %v3424 = vpack.c.b16 %v3400, %v3396
    %v3425 = vpack.c.b16 %v3401, %v3397
    %v3426 = vpack.c.b16 %v3402, %v3398
    %v3427 = vpack.c.b16 %v3403, %v3399
    %v3428 = vpack.c.b16 %v3408, %v3404
    %v3429 = vpack.c.b16 %v3409, %v3405
    %v3430 = vpack.c.b16 %v3410, %v3406
    %v3431 = vpack.c.b16 %v3411, %v3407
    %v3432 = vpack.c.b16 %v3416, %v3412
    %v3433 = vpack.c.b16 %v3417, %v3413
    %v3434 = vpack.c.b16 %v3418, %v3414
    %v3435 = vpack.c.b16 %v3419, %v3415
    %v3453 = vsel %vm2445, %v3354, 0
    %3455 = vmatpush.bf16.msra.mxu0 0
    %3456 = vmatpush.bf16.msra.mxu0 0
    %3457 = vmatpush.bf16.msra.mxu0 0
    %3458 = vmatpush.bf16.msra.mxu0 0
    %3459 = vmatpush.bf16.msra.mxu0 %v3432
    %3460 = vmatpush.bf16.msra.mxu0 %v3428
    %3461 = vmatpush.bf16.msra.mxu0 %v3424
    %3462 = vmatpush.bf16.msra.mxu0 %v3420
    %3463 = vmatmul.bf16.gmra.mxu0 %v3453
    %v3464 = vpop.f32.mrf.mxu0
    %v3465 = vadd.f32 0.0, %v3464
    %v3466 = vpop.f32.mrf.mxu0
    %3467 = vdwg.mxu0
    %3468 = vmatpush.bf16.msra.mxu0 0
    %3469 = vmatpush.bf16.msra.mxu0 0
    %3470 = vmatpush.bf16.msra.mxu0 0
    %3471 = vmatpush.bf16.msra.mxu0 0
    %3472 = vmatpush.bf16.msra.mxu0 %v3433
    %3473 = vmatpush.bf16.msra.mxu0 %v3429
    %3474 = vmatpush.bf16.msra.mxu0 %v3425
    %3475 = vmatpush.bf16.msra.mxu0 %v3421
    %3476 = vmatmul.bf16.gmra.mxu0 %v3453
    %v3477 = vpop.f32.mrf.mxu0
    %v3478 = vadd.f32 0.0, %v3477
    %v3479 = vpop.f32.mrf.mxu0
    %3480 = vdwg.mxu0
    %3481 = vmatpush.bf16.msra.mxu0 0
    %3482 = vmatpush.bf16.msra.mxu0 0
    %3483 = vmatpush.bf16.msra.mxu0 0
    %3484 = vmatpush.bf16.msra.mxu0 0
    %3485 = vmatpush.bf16.msra.mxu0 %v3434
    %3486 = vmatpush.bf16.msra.mxu0 %v3430
    %3487 = vmatpush.bf16.msra.mxu0 %v3426
    %3488 = vmatpush.bf16.msra.mxu0 %v3422
    %3489 = vmatmul.bf16.gmra.mxu0 %v3453
    %v3490 = vpop.f32.mrf.mxu0
    %v3491 = vadd.f32 0.0, %v3490
    %v3492 = vpop.f32.mrf.mxu0
    %3493 = vdwg.mxu0
    %3494 = vmatpush.bf16.msra.mxu0 0
    %3495 = vmatpush.bf16.msra.mxu0 0
    %3496 = vmatpush.bf16.msra.mxu0 0
    %3497 = vmatpush.bf16.msra.mxu0 0
    %3498 = vmatpush.bf16.msra.mxu0 %v3435
    %3499 = vmatpush.bf16.msra.mxu0 %v3431
    %3500 = vmatpush.bf16.msra.mxu0 %v3427
    %3501 = vmatpush.bf16.msra.mxu0 %v3423
    %3502 = vmatmul.bf16.gmra.mxu0 %v3453
    %v3503 = vpop.f32.mrf.mxu0
    %v3504 = vadd.f32 0.0, %v3503
    %v3505 = vpop.f32.mrf.mxu0
    %3506 = vdwg.mxu0
    %v3507 = vadd.f32 %v3294, %v3465
    %v3508 = vadd.f32 %v3307, %v3478
    %v3509 = vadd.f32 %v3320, %v3491
    %v3510 = vadd.f32 %v3333, %v3504
    %s3511 = scalar_lea.vmem %s9, 3
    %v3512 = vld [vmem:[%s3511] sm:$0x1]
    %v3514 = vsel %vm2993, %v3512, 0
    %3516 = vmatpush.bf16.msra.mxu0 0
    %3517 = vmatpush.bf16.msra.mxu0 0
    %3518 = vmatpush.bf16.msra.mxu0 0
    %3519 = vmatpush.bf16.msra.mxu0 0
    %3520 = vmatpush.bf16.msra.mxu0 0
    %3521 = vmatpush.bf16.msra.mxu0 0
    %3522 = vmatpush.bf16.msra.mxu0 0
    %3523 = vmatpush.bf16.msra.mxu0 %v2998
    %3524 = vmatmul.bf16.gmra.mxu0 %v3514
    %v3525 = vpop.f32.mrf.mxu0
    %v3526 = vadd.f32 0.0, %v3525
    %v3527 = vpop.f32.mrf.mxu0
    %3528 = vdwg.mxu0
    %v3529 = vpack.c.bf16 %v3526, %v3526
    %s3530 = scalar_lea.vmem %s10, 384
    %v3531 = vld [vmem:[%s3530] sm:$0xff]
    %v3532 = vld [vmem:[%s3530 + $0x8] sm:$0xff]
    %v3533 = vld [vmem:[%s3530 + $0x10] sm:$0xff]
    %v3534 = vld [vmem:[%s3530 + $0x18] sm:$0xff]
    %v3535 = vld [vmem:[%s3530 + $0x20] sm:$0xff]
    %v3536 = vld [vmem:[%s3530 + $0x28] sm:$0xff]
    %v3537 = vld [vmem:[%s3530 + $0x30] sm:$0xff]
    %v3538 = vld [vmem:[%s3530 + $0x38] sm:$0xff]
    %v3539 = vld [vmem:[%s3530 + $0x40] sm:$0xff]
    %v3540 = vld [vmem:[%s3530 + $0x48] sm:$0xff]
    %v3541 = vld [vmem:[%s3530 + $0x50] sm:$0xff]
    %v3542 = vld [vmem:[%s3530 + $0x58] sm:$0xff]
    %v3543 = vld [vmem:[%s3530 + $0x60] sm:$0xff]
    %v3544 = vld [vmem:[%s3530 + $0x68] sm:$0xff]
    %v3545 = vld [vmem:[%s3530 + $0x70] sm:$0xff]
    %v3546 = vld [vmem:[%s3530 + $0x78] sm:$0xff]
    %v3563 = vunpack.c.l.b16 %v3531
    %v3564 = vunpack.c.h.b16 %v3531
    %v3565 = vunpack.c.l.b16 %v3532
    %v3566 = vunpack.c.h.b16 %v3532
    %v3567 = vunpack.c.l.b16 %v3533
    %v3568 = vunpack.c.h.b16 %v3533
    %v3569 = vunpack.c.l.b16 %v3534
    %v3570 = vunpack.c.h.b16 %v3534
    %v3571 = vunpack.c.l.b16 %v3535
    %v3572 = vunpack.c.h.b16 %v3535
    %v3573 = vunpack.c.l.b16 %v3536
    %v3574 = vunpack.c.h.b16 %v3536
    %v3575 = vunpack.c.l.b16 %v3537
    %v3576 = vunpack.c.h.b16 %v3537
    %v3577 = vunpack.c.l.b16 %v3538
    %v3578 = vunpack.c.h.b16 %v3538
    %v3579 = vunpack.c.l.b16 %v3539
    %v3580 = vunpack.c.h.b16 %v3539
    %v3581 = vunpack.c.l.b16 %v3540
    %v3582 = vunpack.c.h.b16 %v3540
    %v3583 = vunpack.c.l.b16 %v3541
    %v3584 = vunpack.c.h.b16 %v3541
    %v3585 = vunpack.c.l.b16 %v3542
    %v3586 = vunpack.c.h.b16 %v3542
    %v3587 = vunpack.c.l.b16 %v3543
    %v3588 = vunpack.c.h.b16 %v3543
    %v3589 = vunpack.c.l.b16 %v3544
    %v3590 = vunpack.c.h.b16 %v3544
    %v3591 = vunpack.c.l.b16 %v3545
    %v3592 = vunpack.c.h.b16 %v3545
    %v3593 = vunpack.c.l.b16 %v3546
    %v3594 = vunpack.c.h.b16 %v3546
    %v3595 = vpack.c.b16 %v3567, %v3563
    %v3596 = vpack.c.b16 %v3568, %v3564
    %v3597 = vpack.c.b16 %v3569, %v3565
    %v3598 = vpack.c.b16 %v3570, %v3566
    %v3599 = vpack.c.b16 %v3575, %v3571
    %v3600 = vpack.c.b16 %v3576, %v3572
    %v3601 = vpack.c.b16 %v3577, %v3573
    %v3602 = vpack.c.b16 %v3578, %v3574
    %v3603 = vpack.c.b16 %v3583, %v3579
    %v3604 = vpack.c.b16 %v3584, %v3580
    %v3605 = vpack.c.b16 %v3585, %v3581
    %v3606 = vpack.c.b16 %v3586, %v3582
    %v3607 = vpack.c.b16 %v3591, %v3587
    %v3608 = vpack.c.b16 %v3592, %v3588
    %v3609 = vpack.c.b16 %v3593, %v3589
    %v3610 = vpack.c.b16 %v3594, %v3590
    %v3628 = vsel %vm2445, %v3529, 0
    %3630 = vmatpush.bf16.msra.mxu0 0
    %3631 = vmatpush.bf16.msra.mxu0 0
    %3632 = vmatpush.bf16.msra.mxu0 0
    %3633 = vmatpush.bf16.msra.mxu0 0
    %3634 = vmatpush.bf16.msra.mxu0 %v3607
    %3635 = vmatpush.bf16.msra.mxu0 %v3603
    %3636 = vmatpush.bf16.msra.mxu0 %v3599
    %3637 = vmatpush.bf16.msra.mxu0 %v3595
    %3638 = vmatmul.bf16.gmra.mxu0 %v3628
    %v3639 = vpop.f32.mrf.mxu0
    %v3640 = vadd.f32 0.0, %v3639
    %v3641 = vpop.f32.mrf.mxu0
    %3642 = vdwg.mxu0
    %3643 = vmatpush.bf16.msra.mxu0 0
    %3644 = vmatpush.bf16.msra.mxu0 0
    %3645 = vmatpush.bf16.msra.mxu0 0
    %3646 = vmatpush.bf16.msra.mxu0 0
    %3647 = vmatpush.bf16.msra.mxu0 %v3608
    %3648 = vmatpush.bf16.msra.mxu0 %v3604
    %3649 = vmatpush.bf16.msra.mxu0 %v3600
    %3650 = vmatpush.bf16.msra.mxu0 %v3596
    %3651 = vmatmul.bf16.gmra.mxu0 %v3628
    %v3652 = vpop.f32.mrf.mxu0
    %v3653 = vadd.f32 0.0, %v3652
    %v3654 = vpop.f32.mrf.mxu0
    %3655 = vdwg.mxu0
    %3656 = vmatpush.bf16.msra.mxu0 0
    %3657 = vmatpush.bf16.msra.mxu0 0
    %3658 = vmatpush.bf16.msra.mxu0 0
    %3659 = vmatpush.bf16.msra.mxu0 0
    %3660 = vmatpush.bf16.msra.mxu0 %v3609
    %3661 = vmatpush.bf16.msra.mxu0 %v3605
    %3662 = vmatpush.bf16.msra.mxu0 %v3601
    %3663 = vmatpush.bf16.msra.mxu0 %v3597
    %3664 = vmatmul.bf16.gmra.mxu0 %v3628
    %v3665 = vpop.f32.mrf.mxu0
    %v3666 = vadd.f32 0.0, %v3665
    %v3667 = vpop.f32.mrf.mxu0
    %3668 = vdwg.mxu0
    %3669 = vmatpush.bf16.msra.mxu0 0
    %3670 = vmatpush.bf16.msra.mxu0 0
    %3671 = vmatpush.bf16.msra.mxu0 0
    %3672 = vmatpush.bf16.msra.mxu0 0
    %3673 = vmatpush.bf16.msra.mxu0 %v3610
    %3674 = vmatpush.bf16.msra.mxu0 %v3606
    %3675 = vmatpush.bf16.msra.mxu0 %v3602
    %3676 = vmatpush.bf16.msra.mxu0 %v3598
    %3677 = vmatmul.bf16.gmra.mxu0 %v3628
    %v3678 = vpop.f32.mrf.mxu0
    %v3679 = vadd.f32 0.0, %v3678
    %v3680 = vpop.f32.mrf.mxu0
    %3681 = vdwg.mxu0
    %v3682 = vadd.f32 %v3507, %v3640
    %v3683 = vadd.f32 %v3508, %v3653
    %v3684 = vadd.f32 %v3509, %v3666
    %v3685 = vadd.f32 %v3510, %v3679
    %v3686 = vld [vmem:[%s11] sm:$0xf]
    %v3688 = vperm.slane %v3686, 0
    %v3689 = vperm.slane %v3686, 1
    %v3690 = vperm.slane %v3686, 2
    %v3691 = vperm.slane %v3686, 3
    %v3696 = vadd.f32 %v3682, %v3688
    %v3697 = vadd.f32 %v3683, %v3689
    %v3698 = vadd.f32 %v3684, %v3690
    %v3699 = vadd.f32 %v3685, %v3691
    %v3700 = vmax.f32 %v3696, 0.0
    %v3701 = vmax.f32 %v3697, 0.0
    %v3702 = vmax.f32 %v3698, 0.0
    %v3703 = vmax.f32 %v3699, 0.0
    %v3704 = vpack.c.bf16 %v3700, %v3700
    %v3705 = vpack.c.bf16 %v3701, %v3701
    %v3706 = vpack.c.bf16 %v3702, %v3702
    %v3707 = vpack.c.bf16 %v3703, %v3703
    %v3708 = vld [vmem:[%s12] sm:$0xf]
    %v3709 = vld [vmem:[%s12 + $0x4] sm:$0xf]
    %v3710 = vld [vmem:[%s12 + $0x8] sm:$0xf]
    %v3711 = vld [vmem:[%s12 + $0xc] sm:$0xf]
    %v3712 = vld [vmem:[%s12 + $0x10] sm:$0xf]
    %v3713 = vld [vmem:[%s12 + $0x14] sm:$0xf]
    %v3714 = vld [vmem:[%s12 + $0x18] sm:$0xf]
    %v3715 = vld [vmem:[%s12 + $0x1c] sm:$0xf]
    %v3716 = vld [vmem:[%s12 + $0x20] sm:$0xf]
    %v3717 = vld [vmem:[%s12 + $0x24] sm:$0xf]
    %v3718 = vld [vmem:[%s12 + $0x28] sm:$0xf]
    %v3719 = vld [vmem:[%s12 + $0x2c] sm:$0xf]
    %v3720 = vld [vmem:[%s12 + $0x30] sm:$0xf]
    %v3721 = vld [vmem:[%s12 + $0x34] sm:$0xf]
    %v3722 = vld [vmem:[%s12 + $0x38] sm:$0xf]
    %v3723 = vld [vmem:[%s12 + $0x3c] sm:$0xf]
    %v3724 = vld [vmem:[%s12 + $0x40] sm:$0xf]
    %v3725 = vld [vmem:[%s12 + $0x44] sm:$0xf]
    %v3726 = vld [vmem:[%s12 + $0x48] sm:$0xf]
    %v3727 = vld [vmem:[%s12 + $0x4c] sm:$0xf]
    %v3728 = vld [vmem:[%s12 + $0x50] sm:$0xf]
    %v3729 = vld [vmem:[%s12 + $0x54] sm:$0xf]
    %v3730 = vld [vmem:[%s12 + $0x58] sm:$0xf]
    %v3731 = vld [vmem:[%s12 + $0x5c] sm:$0xf]
    %v3732 = vld [vmem:[%s12 + $0x60] sm:$0xf]
    %v3733 = vld [vmem:[%s12 + $0x64] sm:$0xf]
    %v3734 = vld [vmem:[%s12 + $0x68] sm:$0xf]
    %v3735 = vld [vmem:[%s12 + $0x6c] sm:$0xf]
    %v3736 = vld [vmem:[%s12 + $0x70] sm:$0xf]
    %v3737 = vld [vmem:[%s12 + $0x74] sm:$0xf]
    %v3738 = vld [vmem:[%s12 + $0x78] sm:$0xf]
    %v3739 = vld [vmem:[%s12 + $0x7c] sm:$0xf]
    %v3740 = vld [vmem:[%s12 + $0x80] sm:$0xf]
    %v3741 = vld [vmem:[%s12 + $0x84] sm:$0xf]
    %v3742 = vld [vmem:[%s12 + $0x88] sm:$0xf]
    %v3743 = vld [vmem:[%s12 + $0x8c] sm:$0xf]
    %v3744 = vld [vmem:[%s12 + $0x90] sm:$0xf]
    %v3745 = vld [vmem:[%s12 + $0x94] sm:$0xf]
    %v3746 = vld [vmem:[%s12 + $0x98] sm:$0xf]
    %v3747 = vld [vmem:[%s12 + $0x9c] sm:$0xf]
    %v3748 = vld [vmem:[%s12 + $0xa0] sm:$0xf]
    %v3749 = vld [vmem:[%s12 + $0xa4] sm:$0xf]
    %v3750 = vld [vmem:[%s12 + $0xa8] sm:$0xf]
    %v3751 = vld [vmem:[%s12 + $0xac] sm:$0xf]
    %v3752 = vld [vmem:[%s12 + $0xb0] sm:$0xf]
    %v3753 = vld [vmem:[%s12 + $0xb4] sm:$0xf]
    %v3754 = vld [vmem:[%s12 + $0xb8] sm:$0xf]
    %v3755 = vld [vmem:[%s12 + $0xbc] sm:$0xf]
    %v3756 = vld [vmem:[%s12 + $0xc0] sm:$0xf]
    %v3757 = vld [vmem:[%s12 + $0xc4] sm:$0xf]
    %v3758 = vld [vmem:[%s12 + $0xc8] sm:$0xf]
    %v3759 = vld [vmem:[%s12 + $0xcc] sm:$0xf]
    %v3760 = vld [vmem:[%s12 + $0xd0] sm:$0xf]
    %v3761 = vld [vmem:[%s12 + $0xd4] sm:$0xf]
    %v3762 = vld [vmem:[%s12 + $0xd8] sm:$0xf]
    %v3763 = vld [vmem:[%s12 + $0xdc] sm:$0xf]
    %v3764 = vld [vmem:[%s12 + $0xe0] sm:$0xf]
    %v3765 = vld [vmem:[%s12 + $0xe4] sm:$0xf]
    %v3766 = vld [vmem:[%s12 + $0xe8] sm:$0xf]
    %v3767 = vld [vmem:[%s12 + $0xec] sm:$0xf]
    %v3768 = vld [vmem:[%s12 + $0xf0] sm:$0xf]
    %v3769 = vld [vmem:[%s12 + $0xf4] sm:$0xf]
    %v3770 = vld [vmem:[%s12 + $0xf8] sm:$0xf]
    %v3771 = vld [vmem:[%s12 + $0xfc] sm:$0xf]
    %v3772 = vld [vmem:[%s13] sm:$0x1]
    %v3774 = vperm.slane %v3772, 0
    %v3840 = vunpack.c.l.b16 %v3708
    %v3841 = vunpack.c.l.b16 %v3709
    %v3842 = vunpack.c.l.b16 %v3710
    %v3843 = vunpack.c.l.b16 %v3711
    %v3844 = vunpack.c.l.b16 %v3712
    %v3845 = vunpack.c.l.b16 %v3713
    %v3846 = vunpack.c.l.b16 %v3714
    %v3847 = vunpack.c.l.b16 %v3715
    %v3848 = vunpack.c.l.b16 %v3716
    %v3849 = vunpack.c.l.b16 %v3717
    %v3850 = vunpack.c.l.b16 %v3718
    %v3851 = vunpack.c.l.b16 %v3719
    %v3852 = vunpack.c.l.b16 %v3720
    %v3853 = vunpack.c.l.b16 %v3721
    %v3854 = vunpack.c.l.b16 %v3722
    %v3855 = vunpack.c.l.b16 %v3723
    %v3856 = vunpack.c.l.b16 %v3724
    %v3857 = vunpack.c.l.b16 %v3725
    %v3858 = vunpack.c.l.b16 %v3726
    %v3859 = vunpack.c.l.b16 %v3727
    %v3860 = vunpack.c.l.b16 %v3728
    %v3861 = vunpack.c.l.b16 %v3729
    %v3862 = vunpack.c.l.b16 %v3730
    %v3863 = vunpack.c.l.b16 %v3731
    %v3864 = vunpack.c.l.b16 %v3732
    %v3865 = vunpack.c.l.b16 %v3733
    %v3866 = vunpack.c.l.b16 %v3734
    %v3867 = vunpack.c.l.b16 %v3735
    %v3868 = vunpack.c.l.b16 %v3736
    %v3869 = vunpack.c.l.b16 %v3737
    %v3870 = vunpack.c.l.b16 %v3738
    %v3871 = vunpack.c.l.b16 %v3739
    %v3872 = vunpack.c.l.b16 %v3740
    %v3873 = vunpack.c.l.b16 %v3741
    %v3874 = vunpack.c.l.b16 %v3742
    %v3875 = vunpack.c.l.b16 %v3743
    %v3876 = vunpack.c.l.b16 %v3744
    %v3877 = vunpack.c.l.b16 %v3745
    %v3878 = vunpack.c.l.b16 %v3746
    %v3879 = vunpack.c.l.b16 %v3747
    %v3880 = vunpack.c.l.b16 %v3748
    %v3881 = vunpack.c.l.b16 %v3749
    %v3882 = vunpack.c.l.b16 %v3750
    %v3883 = vunpack.c.l.b16 %v3751
    %v3884 = vunpack.c.l.b16 %v3752
    %v3885 = vunpack.c.l.b16 %v3753
    %v3886 = vunpack.c.l.b16 %v3754
    %v3887 = vunpack.c.l.b16 %v3755
    %v3888 = vunpack.c.l.b16 %v3756
    %v3889 = vunpack.c.l.b16 %v3757
    %v3890 = vunpack.c.l.b16 %v3758
    %v3891 = vunpack.c.l.b16 %v3759
    %v3892 = vunpack.c.l.b16 %v3760
    %v3893 = vunpack.c.l.b16 %v3761
    %v3894 = vunpack.c.l.b16 %v3762
    %v3895 = vunpack.c.l.b16 %v3763
    %v3896 = vunpack.c.l.b16 %v3764
    %v3897 = vunpack.c.l.b16 %v3765
    %v3898 = vunpack.c.l.b16 %v3766
    %v3899 = vunpack.c.l.b16 %v3767
    %v3900 = vunpack.c.l.b16 %v3768
    %v3901 = vunpack.c.l.b16 %v3769
    %v3902 = vunpack.c.l.b16 %v3770
    %v3903 = vunpack.c.l.b16 %v3771
    %v3904 = vpack.c.b16 %v3841, %v3840
    %v3905 = vpack.c.b16 %v3843, %v3842
    %v3906 = vpack.c.b16 %v3845, %v3844
    %v3907 = vpack.c.b16 %v3847, %v3846
    %v3908 = vpack.c.b16 %v3849, %v3848
    %v3909 = vpack.c.b16 %v3851, %v3850
    %v3910 = vpack.c.b16 %v3853, %v3852
    %v3911 = vpack.c.b16 %v3855, %v3854
    %v3912 = vpack.c.b16 %v3857, %v3856
    %v3913 = vpack.c.b16 %v3859, %v3858
    %v3914 = vpack.c.b16 %v3861, %v3860
    %v3915 = vpack.c.b16 %v3863, %v3862
    %v3916 = vpack.c.b16 %v3865, %v3864
    %v3917 = vpack.c.b16 %v3867, %v3866
    %v3918 = vpack.c.b16 %v3869, %v3868
    %v3919 = vpack.c.b16 %v3871, %v3870
    %v3920 = vpack.c.b16 %v3873, %v3872
    %v3921 = vpack.c.b16 %v3875, %v3874
    %v3922 = vpack.c.b16 %v3877, %v3876
    %v3923 = vpack.c.b16 %v3879, %v3878
    %v3924 = vpack.c.b16 %v3881, %v3880
    %v3925 = vpack.c.b16 %v3883, %v3882
    %v3926 = vpack.c.b16 %v3885, %v3884
    %v3927 = vpack.c.b16 %v3887, %v3886
    %v3928 = vpack.c.b16 %v3889, %v3888
    %v3929 = vpack.c.b16 %v3891, %v3890
    %v3930 = vpack.c.b16 %v3893, %v3892
    %v3931 = vpack.c.b16 %v3895, %v3894
    %v3932 = vpack.c.b16 %v3897, %v3896
    %v3933 = vpack.c.b16 %v3899, %v3898
    %v3934 = vpack.c.b16 %v3901, %v3900
    %v3935 = vpack.c.b16 %v3903, %v3902
    %3968 = vmatpush.bf16.msra.mxu0 %v3911
    %3969 = vmatpush.bf16.msra.mxu0 %v3910
    %3970 = vmatpush.bf16.msra.mxu0 %v3909
    %3971 = vmatpush.bf16.msra.mxu0 %v3908
    %3972 = vmatpush.bf16.msra.mxu0 %v3907
    %3973 = vmatpush.bf16.msra.mxu0 %v3906
    %3974 = vmatpush.bf16.msra.mxu0 %v3905
    %3975 = vmatpush.bf16.msra.mxu0 %v3904
    %3976 = vmatmul.bf16.gmra.mxu0 %v3704
    %v3977 = vpop.f32.mrf.mxu0
    %v3978 = vadd.f32 %v3774, %v3977
    %v3979 = vpop.f32.mrf.mxu0
    %3980 = vdwg.mxu0
    %3981 = vmatpush.bf16.msra.mxu0 %v3919
    %3982 = vmatpush.bf16.msra.mxu0 %v3918
    %3983 = vmatpush.bf16.msra.mxu0 %v3917
    %3984 = vmatpush.bf16.msra.mxu0 %v3916
    %3985 = vmatpush.bf16.msra.mxu0 %v3915
    %3986 = vmatpush.bf16.msra.mxu0 %v3914
    %3987 = vmatpush.bf16.msra.mxu0 %v3913
    %3988 = vmatpush.bf16.msra.mxu0 %v3912
    %3989 = vmatmul.bf16.gmra.mxu0 %v3705
    %v3990 = vpop.f32.mrf.mxu0
    %v3991 = vadd.f32 %v3978, %v3990
    %v3992 = vpop.f32.mrf.mxu0
    %3993 = vdwg.mxu0
    %3994 = vmatpush.bf16.msra.mxu0 %v3927
    %3995 = vmatpush.bf16.msra.mxu0 %v3926
    %3996 = vmatpush.bf16.msra.mxu0 %v3925
    %3997 = vmatpush.bf16.msra.mxu0 %v3924
    %3998 = vmatpush.bf16.msra.mxu0 %v3923
    %3999 = vmatpush.bf16.msra.mxu0 %v3922
    %4000 = vmatpush.bf16.msra.mxu0 %v3921
    %4001 = vmatpush.bf16.msra.mxu0 %v3920
    %4002 = vmatmul.bf16.gmra.mxu0 %v3706
    %v4003 = vpop.f32.mrf.mxu0
    %v4004 = vadd.f32 %v3991, %v4003
    %v4005 = vpop.f32.mrf.mxu0
    %4006 = vdwg.mxu0
    %4007 = vmatpush.bf16.msra.mxu0 %v3935
    %4008 = vmatpush.bf16.msra.mxu0 %v3934
    %4009 = vmatpush.bf16.msra.mxu0 %v3933
    %4010 = vmatpush.bf16.msra.mxu0 %v3932
    %4011 = vmatpush.bf16.msra.mxu0 %v3931
    %4012 = vmatpush.bf16.msra.mxu0 %v3930
    %4013 = vmatpush.bf16.msra.mxu0 %v3929
    %4014 = vmatpush.bf16.msra.mxu0 %v3928
    %4015 = vmatmul.bf16.gmra.mxu0 %v3707
    %v4016 = vpop.f32.mrf.mxu0
    %v4017 = vadd.f32 %v4004, %v4016
    %v4018 = vpop.f32.mrf.mxu0
    %4019 = vdwg.mxu0
    %4020 = vst [vmem:[#allocation2] sm:$0x3] %v4017
    // Predicated region
    $region58: #{fwd.1} parent=1 // pred_check
      _
    $region59: #{fwd.1} parent=1 // pred_check_branch
      %4022 = sbr.rel (0) target = $region61
    $region60: #{fwd.1} parent=1 // pred_region
      %4024 = vsyncadd [#allocation3], 0
      %s4026 = sshll.u32 [#allocation2], 4
      %s4027 = int_to_ptr.vmem [resolvable:$true] %s4026
      %s4028 = sshll.u32 %s14, 4
      %s4029 = int_to_ptr.hbm [resolvable:$true] %s4028
      %4031 = dma.vmem_to_hbm [thread:$0]  %s4027, 32, %s4029, [#allocation3]
    $region61: #{fwd.1} parent=1 // pred_fallthru
      _
    // Predicated region
    $region62: #{fwd.1} parent=1 // pred_check
      _
    $region63: #{fwd.1} parent=1 // pred_check_branch
      %4033 = sbr.rel (0) target = $region65
    $region64: #{fwd.1} parent=1 // pred_region
      %4035 = dma.done [#allocation3], 32
    $region65: #{fwd.1} parent=1 // pred_fallthru
      _
    %4036 = vsyncpa [#allocation3], 1

</llo_original>
